<compile_context>
chip_gen: v7x
topology: tpu7x:2x2x1
jax: 0.10.0
libtpu: 0.0.40
codegen_flags: <defaults>
</compile_context>

<pallas_src>
import functools

import jax
import jax.numpy as jnp
from jax.experimental import pallas as pl
from jax.experimental.pallas import tpu as pltpu

H = 64              # LSTM hidden size
IN = 2              # LSTM input size
FEAT = 11           # raw feature dim
FENC = 32           # feature-network output dim
COMB = H + FENC     # 96
HEAD_PAD = 192      # fused head first-layer width [kpi(32)|growth(64)|pad(32)|risk(64)]
OUT_PAD = 128       # lane-dense output slab width (3 + 4 + 36 = 43 used)


def _business_kernel(
    tmp_ref, feat_ref,
    wih0_ref, whh0_ref, b0_ref,
    wih1_ref, whh1_ref, b1_ref,
    wf1_ref, bf1_ref, wf2_ref, bf2_ref,
    wh1h_ref, wh1f_ref, bh1_ref,
    wr2_ref, br2_ref,
    wfinkg_ref, wfinr_ref, bfin_ref,
    out_ref, *, T,
):
    TB = tmp_ref.shape[0]
    B = TB // T

    # ---- loop-invariant hoists (recurrent weights pre-cast to bf16) --------
    whh0 = whh0_ref[...]                                   # (H, 4H)  bf16
    wih1 = wih1_ref[...]                                   # (H, 4H)  bf16
    whh1 = whh1_ref[...]                                   # (H, 4H)  bf16
    b1_b = jnp.broadcast_to(b1_ref[...], (B, 4 * H))       # hoisted bias broadcast

    # ---- layer-0 input projection for ALL timesteps -------------------------
    # K=2 is far too narrow for the MXU: do it as two VPU rank-1 updates.
    tmp = tmp_ref[...]                                     # (TB, 2) f32
    wih0 = wih0_ref[...]                                   # (2, 4H) f32
    xproj = (tmp[:, 0:1] * wih0[0:1, :]
             + tmp[:, 1:2] * wih0[1:2, :]
             + jnp.broadcast_to(b0_ref[...], (TB, 4 * H)))
    xproj = xproj.reshape(T, B, 4 * H)                     # time-major; B is 8-aligned

    def gate_math(gates, c):
        # packed gate order [i | f | o | g]: sigmoids are lane-contiguous
        sig = jax.nn.sigmoid(gates[:, : 3 * H])
        i = sig[:, 0:H]
        f = sig[:, H:2 * H]
        o = sig[:, 2 * H:3 * H]
        g = jnp.tanh(gates[:, 3 * H:])
        c_new = f * c + i * g
        h_new = o * jnp.tanh(c_new)
        return h_new, c_new

    h0 = jnp.zeros((B, H), jnp.float32)
    c0 = jnp.zeros((B, H), jnp.float32)
    h1 = jnp.zeros((B, H), jnp.float32)
    c1 = jnp.zeros((B, H), jnp.float32)

    # Fully unrolled recurrence (T static). bf16 MXU operands, f32 accumulate,
    # f32 gate math. h1[t-1]@Whh1 is issued before the h0[t] update so it can
    # overlap with the layer-0 work of the same step.
    for t in range(T):
        g1_hh = jnp.dot(h1.astype(jnp.bfloat16), whh1,
                        preferred_element_type=jnp.float32)
        gates0 = xproj[t] + jnp.dot(h0.astype(jnp.bfloat16), whh0,
                                    preferred_element_type=jnp.float32)
        h0, c0 = gate_math(gates0, c0)
        gates1 = (jnp.dot(h0.astype(jnp.bfloat16), wih1,
                          preferred_element_type=jnp.float32)
                  + g1_hh + b1_b)
        h1, c1 = gate_math(gates1, c1)

    # ---- feature_network: Linear(11,32) -> ReLU -> [Dropout=id] -> Linear(32,32)
    feats = feat_ref[...]
    f1 = jnp.maximum(
        jnp.dot(feats, wf1_ref[...], preferred_element_type=jnp.float32)
        + bf1_ref[...], 0.0)
    fenc = (jnp.dot(f1, wf2_ref[...], preferred_element_type=jnp.float32)
            + bf2_ref[...])

    # ---- fused head first layer: combined = [h1 | fenc] as a split matmul
    # (no concat). Column order [kpi(32)|growth(64)|pad(32)|risk(64)] keeps
    # both downstream slices vreg-aligned.
    hall = jnp.maximum(
        jnp.dot(h1, wh1h_ref[...], preferred_element_type=jnp.float32)
        + jnp.dot(fenc, wh1f_ref[...], preferred_element_type=jnp.float32)
        + bh1_ref[...], 0.0)                               # (B, 192)

    kg = hall[:, :COMB]                                    # (B, 96)  lanes 0:96
    risk1 = hall[:, 128:HEAD_PAD]                          # (B, 64)  lanes 128:192

    # risk middle layer: 64 -> 32, ReLU
    r2 = jnp.maximum(
        jnp.dot(risk1, wr2_ref[...], preferred_element_type=jnp.float32)
        + br2_ref[...], 0.0)                               # (B, 32)

    # fused final layers as two block matmuls -> single lane-dense slab
    out_ref[...] = (
        jnp.dot(kg, wfinkg_ref[...], preferred_element_type=jnp.float32)
        + jnp.dot(r2, wfinr_ref[...], preferred_element_type=jnp.float32)
        + bfin_ref[...])                                   # (B, 128) [risk|kpi|growth|pad]


def init_params(key):
    """Deterministic synthetic parameters matching the PyTorch module shapes.

    Linear/LSTM weights are stored pre-transposed (in_dim, out_dim); LSTM gate
    order is PyTorch [i|f|g|o]; LSTM biases combine b_ih + b_hh into (1, 4H).
    """
    def u(k, shape, scale=0.1):
        return (jax.random.uniform(k, shape, jnp.float32) * 2.0 - 1.0) * scale

    keys = jax.random.split(key, 26)
    p = {}
    p["wih0"] = u(keys[0], (IN, 4 * H))
    p["whh0"] = u(keys[1], (H, 4 * H))
    p["b0"] = u(keys[2], (1, 4 * H))
    p["wih1"] = u(keys[3], (H, 4 * H))
    p["whh1"] = u(keys[4], (H, 4 * H))
    p["b1"] = u(keys[5], (1, 4 * H))
    p["wf1"] = u(keys[6], (FEAT, 32)); p["bf1"] = u(keys[7], (1, 32))
    p["wf2"] = u(keys[8], (32, 32));   p["bf2"] = u(keys[9], (1, 32))
    p["wr1"] = u(keys[10], (COMB, 64)); p["br1"] = u(keys[11], (1, 64))
    p["wr2"] = u(keys[12], (64, 32));   p["br2"] = u(keys[13], (1, 32))
    p["wr3"] = u(keys[14], (32, 3));    p["br3"] = u(keys[15], (1, 3))
    p["wk1"] = u(keys[16], (COMB, 32)); p["bk1"] = u(keys[17], (1, 32))
    p["wk2"] = u(keys[18], (32, 4));    p["bk2"] = u(keys[19], (1, 4))
    p["wg1"] = u(keys[20], (COMB, 64)); p["bg1"] = u(keys[21], (1, 64))
    p["wg2"] = u(keys[22], (64, 36));   p["bg2"] = u(keys[23], (1, 36))
    return p


def _reorder_gates(w):
    """Permute last-axis gate blocks from PyTorch [i|f|g|o] to [i|f|o|g]."""
    i, f, g, o = jnp.split(w, 4, axis=-1)
    return jnp.concatenate([i, f, o, g], axis=-1)


_PACKED_ORDER = [
    "wih0", "whh0", "b0", "wih1", "whh1", "b1",
    "wf1", "bf1", "wf2", "bf2",
    "wh1_h", "wh1_f", "bh1", "wr2", "br2",
    "wfin_kg", "wfin_r", "bfin",
]


def pack_params(p):
    """Build the fused/reordered parameter set consumed by the kernel.

    Call ONCE at init (outside the per-call jit) and reuse the result.
    """
    packed = {}
    # LSTM layer 0 (gate-reordered); recurrent weight in bf16 for the MXU.
    packed["wih0"] = _reorder_gates(p["wih0"])                         # f32 (VPU)
    packed["whh0"] = _reorder_gates(p["whh0"]).astype(jnp.bfloat16)
    packed["b0"] = _reorder_gates(p["b0"])
    # LSTM layer 1 kept split (no per-step concat), bf16 recurrent weights.
    packed["wih1"] = _reorder_gates(p["wih1"]).astype(jnp.bfloat16)
    packed["whh1"] = _reorder_gates(p["whh1"]).astype(jnp.bfloat16)
    packed["b1"] = _reorder_gates(p["b1"])
    # feature network unchanged (f32)
    packed["wf1"], packed["bf1"] = p["wf1"], p["bf1"]
    packed["wf2"], packed["bf2"] = p["wf2"], p["bf2"]
    # fused head first layers, columns [kpi 0:32 | growth 32:96 | pad | risk 128:192]
    wh1 = jnp.zeros((COMB, HEAD_PAD), jnp.float32)
    wh1 = wh1.at[:, 0:32].set(p["wk1"])
    wh1 = wh1.at[:, 32:96].set(p["wg1"])
    wh1 = wh1.at[:, 128:192].set(p["wr1"])
    packed["wh1_h"] = wh1[:H, :]     # rows multiplied by h1   (64, 192)
    packed["wh1_f"] = wh1[H:, :]     # rows multiplied by fenc (32, 192)
    bh1 = jnp.zeros((1, HEAD_PAD), jnp.float32)
    bh1 = bh1.at[:, 0:32].set(p["bk1"])
    bh1 = bh1.at[:, 32:96].set(p["bg1"])
    bh1 = bh1.at[:, 128:192].set(p["br1"])
    packed["bh1"] = bh1
    # risk middle layer unchanged
    packed["wr2"], packed["br2"] = p["wr2"], p["br2"]
    # fused final layers -> lane-dense (B,128) slab [risk 0:3 | kpi 3:7 | growth 7:43]
    wfin_kg = jnp.zeros((COMB, OUT_PAD), jnp.float32)      # acts on kg = [kpi_h|growth_h]
    wfin_kg = wfin_kg.at[0:32, 3:7].set(p["wk2"])
    wfin_kg = wfin_kg.at[32:96, 7:43].set(p["wg2"])
    wfin_r = jnp.zeros((32, OUT_PAD), jnp.float32)         # acts on r2
    wfin_r = wfin_r.at[0:32, 0:3].set(p["wr3"])
    bfin = jnp.zeros((1, OUT_PAD), jnp.float32)
    bfin = bfin.at[:, 0:3].set(p["br3"])
    bfin = bfin.at[:, 3:7].set(p["bk2"])
    bfin = bfin.at[:, 7:43].set(p["bg2"])
    packed["wfin_kg"], packed["wfin_r"], packed["bfin"] = wfin_kg, wfin_r, bfin
    return packed


@jax.jit
def business_model_forward(temporal_data, features, packed):
    """temporal_data: (B, T, 2) batch-first; features: (B, 11); packed: pack_params(...)."""
    B, T, _ = temporal_data.shape
    B_pad = max(8, ((B + 7) // 8) * 8)        # sublane-aligned batch (must stay mult of 8)

    tmp_tm = jnp.transpose(temporal_data, (1, 0, 2))       # (T, B, 2) time-major
    feats = features
    if B_pad != B:
        tmp_tm = jnp.pad(tmp_tm, ((0, 0), (0, B_pad - B), (0, 0)))
        feats = jnp.pad(features, ((0, B_pad - B), (0, 0)))
    tmp_flat = tmp_tm.reshape(T * B_pad, IN)               # rows are time-major

    args = [tmp_flat, feats] + [packed[k] for k in _PACKED_ORDER]
    vmem_spec = pl.BlockSpec(memory_space=pltpu.MemorySpace.VMEM)

    # TODO(synk): for production batch sizes add a parallel batch grid
    # (dimension_semantics=("parallel",)) so v7x's 2 TensorCores are used and
    # xproj is computed per batch tile; at B<=8 the grid overhead only hurts.
    slab = pl.pallas_call(
        functools.partial(_business_kernel, T=T),
        out_shape=jax.ShapeDtypeStruct((B_pad, OUT_PAD), jnp.float32),
        in_specs=[vmem_spec] * len(args),
        out_specs=vmem_spec,
    )(*args)

    risk = slab[:B, 0:3]
    kpi = slab[:B, 3:7]
    growth = slab[:B, 7:43]
    return {
        "risk_analysis": risk,
        "kpi_metrics": kpi,
        "growth_predictions": {
            "absolute": growth[:, :12],
            "relative": growth[:, 12:24],
            "log": growth[:, 24:],
        },
    }


def _reference_forward(temporal_data, features, params):
    """Pure-JAX f32 reference (PyTorch gate order, lax.scan LSTM)."""
    def cell(x, h, c, wih, whh, b):
        gates = x @ wih + h @ whh + b
        i = jax.nn.sigmoid(gates[:, 0:H])
        f = jax.nn.sigmoid(gates[:, H:2 * H])
        g = jnp.tanh(gates[:, 2 * H:3 * H])
        o = jax.nn.sigmoid(gates[:, 3 * H:4 * H])
        c = f * c + i * g
        return o * jnp.tanh(c), c

    B = temporal_data.shape[0]
    xs = jnp.transpose(temporal_data, (1, 0, 2))
    z = jnp.zeros((B, H), jnp.float32)

    def step(carry, x_t):
        h0, c0, h1, c1 = carry
        h0, c0 = cell(x_t, h0, c0, params["wih0"], params["whh0"], params["b0"])
        h1, c1 = cell(h0, h1, c1, params["wih1"], params["whh1"], params["b1"])
        return (h0, c0, h1, c1), None

    (h0, c0, h1, c1), _ = jax.lax.scan(step, (z, z, z, z), xs)

    fenc = jnp.maximum(features @ params["wf1"] + params["bf1"], 0.0)
    fenc = fenc @ params["wf2"] + params["bf2"]
    combined = jnp.concatenate([h1, fenc], axis=1)

    r = jnp.maximum(combined @ params["wr1"] + params["br1"], 0.0)
    r = jnp.maximum(r @ params["wr2"] + params["br2"], 0.0)
    risk = r @ params["wr3"] + params["br3"]

    k = jnp.maximum(combined @ params["wk1"] + params["bk1"], 0.0)
    kpi = k @ params["wk2"] + params["bk2"]

    g = jnp.maximum(combined @ params["wg1"] + params["bg1"], 0.0)
    growth = g @ params["wg2"] + params["bg2"]
    return risk, kpi, growth


if __name__ == "__main__":
    key = jax.random.PRNGKey(0)
    kp, kt, kf = jax.random.split(key, 3)

    B, T = 2, 8
    temporal_data = jax.random.normal(kt, (B, T, IN), jnp.float32)
    features = jax.random.normal(kf, (B, FEAT), jnp.float32)
    params = init_params(kp)

    # Pack ONCE at init (outside the jitted forward) and reuse every call.
    packed = pack_params(params)
    packed = jax.block_until_ready(packed)

    out = business_model_forward(temporal_data, features, packed)
    jax.block_until_ready(out)

    # sanity check against plain-JAX f32 reference; bf16 recurrent matmul
    # operands in the kernel -> consciously relaxed tolerance.
    risk_ref, kpi_ref, growth_ref = _reference_forward(temporal_data, features, params)
    import numpy as np
    np.testing.assert_allclose(out["risk_analysis"], risk_ref, rtol=3e-2, atol=2e-2)
    np.testing.assert_allclose(out["kpi_metrics"], kpi_ref, rtol=3e-2, atol=2e-2)
    growth_full = jnp.concatenate(
        [out["growth_predictions"]["absolute"],
         out["growth_predictions"]["relative"],
         out["growth_predictions"]["log"]], axis=1)
    np.testing.assert_allclose(growth_full, growth_ref, rtol=3e-2, atol=2e-2)

    print("KERNEL_OK")
</pallas_src>

<mosaic_0001>
module attributes {stable_mosaic.version = 11 : i64} {
  func.func @_business_kernel(%arg0: memref<64x2xf32, #tpu.memory_space<vmem>>, %arg1: memref<8x11xf32, #tpu.memory_space<vmem>>, %arg2: memref<2x256xf32, #tpu.memory_space<vmem>>, %arg3: memref<64x256xbf16, #tpu.memory_space<vmem>>, %arg4: memref<1x256xf32, #tpu.memory_space<vmem>>, %arg5: memref<64x256xbf16, #tpu.memory_space<vmem>>, %arg6: memref<64x256xbf16, #tpu.memory_space<vmem>>, %arg7: memref<1x256xf32, #tpu.memory_space<vmem>>, %arg8: memref<11x32xf32, #tpu.memory_space<vmem>>, %arg9: memref<1x32xf32, #tpu.memory_space<vmem>>, %arg10: memref<32x32xf32, #tpu.memory_space<vmem>>, %arg11: memref<1x32xf32, #tpu.memory_space<vmem>>, %arg12: memref<64x192xf32, #tpu.memory_space<vmem>>, %arg13: memref<32x192xf32, #tpu.memory_space<vmem>>, %arg14: memref<1x192xf32, #tpu.memory_space<vmem>>, %arg15: memref<64x32xf32, #tpu.memory_space<vmem>>, %arg16: memref<1x32xf32, #tpu.memory_space<vmem>>, %arg17: memref<96x128xf32, #tpu.memory_space<vmem>>, %arg18: memref<32x128xf32, #tpu.memory_space<vmem>>, %arg19: memref<1x128xf32, #tpu.memory_space<vmem>>, %arg20: memref<8x128xf32, #tpu.memory_space<vmem>>) attributes {dimension_semantics = [], scalar_prefetch = 0 : i64, scratch_operands = 0 : i64, tpu.core_type = #tpu.core_type<tc>} {
    %c0 = arith.constant 0 : index
    %c0_0 = arith.constant 0 : index
    %0 = vector.load %arg3[%c0, %c0_0] : memref<64x256xbf16, #tpu.memory_space<vmem>>, vector<64x256xbf16>
    %c0_1 = arith.constant 0 : index
    %c0_2 = arith.constant 0 : index
    %1 = vector.load %arg5[%c0_1, %c0_2] : memref<64x256xbf16, #tpu.memory_space<vmem>>, vector<64x256xbf16>
    %c0_3 = arith.constant 0 : index
    %c0_4 = arith.constant 0 : index
    %2 = vector.load %arg6[%c0_3, %c0_4] : memref<64x256xbf16, #tpu.memory_space<vmem>>, vector<64x256xbf16>
    %c0_5 = arith.constant 0 : index
    %c0_6 = arith.constant 0 : index
    %3 = vector.load %arg7[%c0_5, %c0_6] : memref<1x256xf32, #tpu.memory_space<vmem>>, vector<1x256xf32>
    %4 = vector.shape_cast %3 : vector<1x256xf32> to vector<1x256xf32>
    %5 = vector.broadcast %4 : vector<1x256xf32> to vector<8x256xf32>
    %c0_7 = arith.constant 0 : index
    %c0_8 = arith.constant 0 : index
    %6 = vector.load %arg0[%c0_7, %c0_8] : memref<64x2xf32, #tpu.memory_space<vmem>>, vector<64x2xf32>
    %c0_9 = arith.constant 0 : index
    %c0_10 = arith.constant 0 : index
    %7 = vector.load %arg2[%c0_9, %c0_10] : memref<2x256xf32, #tpu.memory_space<vmem>>, vector<2x256xf32>
    %8 = vector.extract_strided_slice %6 {offsets = [0, 0], sizes = [64, 1], strides = [1, 1]} : vector<64x2xf32> to vector<64x1xf32>
    %9 = vector.extract_strided_slice %7 {offsets = [0, 0], sizes = [1, 256], strides = [1, 1]} : vector<2x256xf32> to vector<1x256xf32>
    %10 = vector.broadcast %8 : vector<64x1xf32> to vector<64x256xf32>
    %11 = vector.broadcast %9 : vector<1x256xf32> to vector<64x256xf32>
    %12 = arith.mulf %10, %11 : vector<64x256xf32>
    %13 = vector.extract_strided_slice %6 {offsets = [0, 1], sizes = [64, 1], strides = [1, 1]} : vector<64x2xf32> to vector<64x1xf32>
    %14 = vector.extract_strided_slice %7 {offsets = [1, 0], sizes = [1, 256], strides = [1, 1]} : vector<2x256xf32> to vector<1x256xf32>
    %15 = vector.broadcast %13 : vector<64x1xf32> to vector<64x256xf32>
    %16 = vector.broadcast %14 : vector<1x256xf32> to vector<64x256xf32>
    %17 = arith.mulf %15, %16 : vector<64x256xf32>
    %18 = arith.addf %12, %17 : vector<64x256xf32>
    %c0_11 = arith.constant 0 : index
    %c0_12 = arith.constant 0 : index
    %19 = vector.load %arg4[%c0_11, %c0_12] : memref<1x256xf32, #tpu.memory_space<vmem>>, vector<1x256xf32>
    %20 = vector.shape_cast %19 : vector<1x256xf32> to vector<1x256xf32>
    %21 = vector.broadcast %20 : vector<1x256xf32> to vector<64x256xf32>
    %22 = arith.addf %18, %21 : vector<64x256xf32>
    %23 = vector.shape_cast %22 : vector<64x256xf32> to vector<8x8x256xf32>
    %cst = arith.constant 0.000000e+00 : f32
    %24 = vector.broadcast %cst : f32 to vector<8x64xf32>
    %cst_13 = arith.constant 0.000000e+00 : f32
    %25 = vector.broadcast %cst_13 : f32 to vector<8x64xf32>
    %cst_14 = arith.constant 0.000000e+00 : f32
    %26 = vector.broadcast %cst_14 : f32 to vector<8x64xf32>
    %cst_15 = arith.constant 0.000000e+00 : f32
    %27 = vector.broadcast %cst_15 : f32 to vector<8x64xf32>
    %28 = arith.truncf %26 : vector<8x64xf32> to vector<8x64xbf16>
    %cst_16 = arith.constant dense<0.000000e+00> : vector<8x256xf32>
    %29 = tpu.matmul %28, %2, %cst_16 {dimension_numbers = #tpu.dot_dimension_numbers<[1], [0], [0], [1], [0, 0, 1, 1], [], []>} : vector<8x64xbf16>, vector<64x256xbf16>, vector<8x256xf32> -> vector<8x256xf32>
    %30 = vector.extract_strided_slice %23 {offsets = [0, 0, 0], sizes = [1, 8, 256], strides = [1, 1, 1]} : vector<8x8x256xf32> to vector<1x8x256xf32>
    %31 = vector.shape_cast %30 : vector<1x8x256xf32> to vector<8x256xf32>
    %32 = arith.truncf %24 : vector<8x64xf32> to vector<8x64xbf16>
    %cst_17 = arith.constant dense<0.000000e+00> : vector<8x256xf32>
    %33 = tpu.matmul %32, %0, %cst_17 {dimension_numbers = #tpu.dot_dimension_numbers<[1], [0], [0], [1], [0, 0, 1, 1], [], []>} : vector<8x64xbf16>, vector<64x256xbf16>, vector<8x256xf32> -> vector<8x256xf32>
    %34 = arith.addf %31, %33 : vector<8x256xf32>
    %35 = vector.extract_strided_slice %34 {offsets = [0, 0], sizes = [8, 192], strides = [1, 1]} : vector<8x256xf32> to vector<8x192xf32>
    %36 = arith.negf %35 : vector<8x192xf32>
    %37 = math.exp %36 : vector<8x192xf32>
    %cst_18 = arith.constant 1.000000e+00 : f32
    %38 = vector.broadcast %cst_18 : f32 to vector<8x192xf32>
    %39 = arith.addf %38, %37 : vector<8x192xf32>
    %40 = arith.divf %38, %39 : vector<8x192xf32>
    %41 = vector.extract_strided_slice %40 {offsets = [0, 0], sizes = [8, 64], strides = [1, 1]} : vector<8x192xf32> to vector<8x64xf32>
    %42 = vector.extract_strided_slice %40 {offsets = [0, 64], sizes = [8, 64], strides = [1, 1]} : vector<8x192xf32> to vector<8x64xf32>
    %43 = vector.extract_strided_slice %40 {offsets = [0, 128], sizes = [8, 64], strides = [1, 1]} : vector<8x192xf32> to vector<8x64xf32>
    %44 = vector.extract_strided_slice %34 {offsets = [0, 192], sizes = [8, 64], strides = [1, 1]} : vector<8x256xf32> to vector<8x64xf32>
    %45 = math.tanh %44 : vector<8x64xf32>
    %46 = arith.mulf %42, %25 : vector<8x64xf32>
    %47 = arith.mulf %41, %45 : vector<8x64xf32>
    %48 = arith.addf %46, %47 : vector<8x64xf32>
    %49 = math.tanh %48 : vector<8x64xf32>
    %50 = arith.mulf %43, %49 : vector<8x64xf32>
    %51 = arith.truncf %50 : vector<8x64xf32> to vector<8x64xbf16>
    %cst_19 = arith.constant dense<0.000000e+00> : vector<8x256xf32>
    %52 = tpu.matmul %51, %1, %cst_19 {dimension_numbers = #tpu.dot_dimension_numbers<[1], [0], [0], [1], [0, 0, 1, 1], [], []>} : vector<8x64xbf16>, vector<64x256xbf16>, vector<8x256xf32> -> vector<8x256xf32>
    %53 = arith.addf %52, %29 : vector<8x256xf32>
    %54 = arith.addf %53, %5 : vector<8x256xf32>
    %55 = vector.extract_strided_slice %54 {offsets = [0, 0], sizes = [8, 192], strides = [1, 1]} : vector<8x256xf32> to vector<8x192xf32>
    %56 = arith.negf %55 : vector<8x192xf32>
    %57 = math.exp %56 : vector<8x192xf32>
    %cst_20 = arith.constant 1.000000e+00 : f32
    %58 = vector.broadcast %cst_20 : f32 to vector<8x192xf32>
    %59 = arith.addf %58, %57 : vector<8x192xf32>
    %60 = arith.divf %58, %59 : vector<8x192xf32>
    %61 = vector.extract_strided_slice %60 {offsets = [0, 0], sizes = [8, 64], strides = [1, 1]} : vector<8x192xf32> to vector<8x64xf32>
    %62 = vector.extract_strided_slice %60 {offsets = [0, 64], sizes = [8, 64], strides = [1, 1]} : vector<8x192xf32> to vector<8x64xf32>
    %63 = vector.extract_strided_slice %60 {offsets = [0, 128], sizes = [8, 64], strides = [1, 1]} : vector<8x192xf32> to vector<8x64xf32>
    %64 = vector.extract_strided_slice %54 {offsets = [0, 192], sizes = [8, 64], strides = [1, 1]} : vector<8x256xf32> to vector<8x64xf32>
    %65 = math.tanh %64 : vector<8x64xf32>
    %66 = arith.mulf %62, %27 : vector<8x64xf32>
    %67 = arith.mulf %61, %65 : vector<8x64xf32>
    %68 = arith.addf %66, %67 : vector<8x64xf32>
    %69 = math.tanh %68 : vector<8x64xf32>
    %70 = arith.mulf %63, %69 : vector<8x64xf32>
    %71 = arith.truncf %70 : vector<8x64xf32> to vector<8x64xbf16>
    %cst_21 = arith.constant dense<0.000000e+00> : vector<8x256xf32>
    %72 = tpu.matmul %71, %2, %cst_21 {dimension_numbers = #tpu.dot_dimension_numbers<[1], [0], [0], [1], [0, 0, 1, 1], [], []>} : vector<8x64xbf16>, vector<64x256xbf16>, vector<8x256xf32> -> vector<8x256xf32>
    %73 = vector.extract_strided_slice %23 {offsets = [1, 0, 0], sizes = [1, 8, 256], strides = [1, 1, 1]} : vector<8x8x256xf32> to vector<1x8x256xf32>
    %74 = vector.shape_cast %73 : vector<1x8x256xf32> to vector<8x256xf32>
    %75 = arith.truncf %50 : vector<8x64xf32> to vector<8x64xbf16>
    %cst_22 = arith.constant dense<0.000000e+00> : vector<8x256xf32>
    %76 = tpu.matmul %75, %0, %cst_22 {dimension_numbers = #tpu.dot_dimension_numbers<[1], [0], [0], [1], [0, 0, 1, 1], [], []>} : vector<8x64xbf16>, vector<64x256xbf16>, vector<8x256xf32> -> vector<8x256xf32>
    %77 = arith.addf %74, %76 : vector<8x256xf32>
    %78 = vector.extract_strided_slice %77 {offsets = [0, 0], sizes = [8, 192], strides = [1, 1]} : vector<8x256xf32> to vector<8x192xf32>
    %79 = arith.negf %78 : vector<8x192xf32>
    %80 = math.exp %79 : vector<8x192xf32>
    %cst_23 = arith.constant 1.000000e+00 : f32
    %81 = vector.broadcast %cst_23 : f32 to vector<8x192xf32>
    %82 = arith.addf %81, %80 : vector<8x192xf32>
    %83 = arith.divf %81, %82 : vector<8x192xf32>
    %84 = vector.extract_strided_slice %83 {offsets = [0, 0], sizes = [8, 64], strides = [1, 1]} : vector<8x192xf32> to vector<8x64xf32>
    %85 = vector.extract_strided_slice %83 {offsets = [0, 64], sizes = [8, 64], strides = [1, 1]} : vector<8x192xf32> to vector<8x64xf32>
    %86 = vector.extract_strided_slice %83 {offsets = [0, 128], sizes = [8, 64], strides = [1, 1]} : vector<8x192xf32> to vector<8x64xf32>
    %87 = vector.extract_strided_slice %77 {offsets = [0, 192], sizes = [8, 64], strides = [1, 1]} : vector<8x256xf32> to vector<8x64xf32>
    %88 = math.tanh %87 : vector<8x64xf32>
    %89 = arith.mulf %85, %48 : vector<8x64xf32>
    %90 = arith.mulf %84, %88 : vector<8x64xf32>
    %91 = arith.addf %89, %90 : vector<8x64xf32>
    %92 = math.tanh %91 : vector<8x64xf32>
    %93 = arith.mulf %86, %92 : vector<8x64xf32>
    %94 = arith.truncf %93 : vector<8x64xf32> to vector<8x64xbf16>
    %cst_24 = arith.constant dense<0.000000e+00> : vector<8x256xf32>
    %95 = tpu.matmul %94, %1, %cst_24 {dimension_numbers = #tpu.dot_dimension_numbers<[1], [0], [0], [1], [0, 0, 1, 1], [], []>} : vector<8x64xbf16>, vector<64x256xbf16>, vector<8x256xf32> -> vector<8x256xf32>
    %96 = arith.addf %95, %72 : vector<8x256xf32>
    %97 = arith.addf %96, %5 : vector<8x256xf32>
    %98 = vector.extract_strided_slice %97 {offsets = [0, 0], sizes = [8, 192], strides = [1, 1]} : vector<8x256xf32> to vector<8x192xf32>
    %99 = arith.negf %98 : vector<8x192xf32>
    %100 = math.exp %99 : vector<8x192xf32>
    %cst_25 = arith.constant 1.000000e+00 : f32
    %101 = vector.broadcast %cst_25 : f32 to vector<8x192xf32>
    %102 = arith.addf %101, %100 : vector<8x192xf32>
    %103 = arith.divf %101, %102 : vector<8x192xf32>
    %104 = vector.extract_strided_slice %103 {offsets = [0, 0], sizes = [8, 64], strides = [1, 1]} : vector<8x192xf32> to vector<8x64xf32>
    %105 = vector.extract_strided_slice %103 {offsets = [0, 64], sizes = [8, 64], strides = [1, 1]} : vector<8x192xf32> to vector<8x64xf32>
    %106 = vector.extract_strided_slice %103 {offsets = [0, 128], sizes = [8, 64], strides = [1, 1]} : vector<8x192xf32> to vector<8x64xf32>
    %107 = vector.extract_strided_slice %97 {offsets = [0, 192], sizes = [8, 64], strides = [1, 1]} : vector<8x256xf32> to vector<8x64xf32>
    %108 = math.tanh %107 : vector<8x64xf32>
    %109 = arith.mulf %105, %68 : vector<8x64xf32>
    %110 = arith.mulf %104, %108 : vector<8x64xf32>
    %111 = arith.addf %109, %110 : vector<8x64xf32>
    %112 = math.tanh %111 : vector<8x64xf32>
    %113 = arith.mulf %106, %112 : vector<8x64xf32>
    %114 = arith.truncf %113 : vector<8x64xf32> to vector<8x64xbf16>
    %cst_26 = arith.constant dense<0.000000e+00> : vector<8x256xf32>
    %115 = tpu.matmul %114, %2, %cst_26 {dimension_numbers = #tpu.dot_dimension_numbers<[1], [0], [0], [1], [0, 0, 1, 1], [], []>} : vector<8x64xbf16>, vector<64x256xbf16>, vector<8x256xf32> -> vector<8x256xf32>
    %116 = vector.extract_strided_slice %23 {offsets = [2, 0, 0], sizes = [1, 8, 256], strides = [1, 1, 1]} : vector<8x8x256xf32> to vector<1x8x256xf32>
    %117 = vector.shape_cast %116 : vector<1x8x256xf32> to vector<8x256xf32>
    %118 = arith.truncf %93 : vector<8x64xf32> to vector<8x64xbf16>
    %cst_27 = arith.constant dense<0.000000e+00> : vector<8x256xf32>
    %119 = tpu.matmul %118, %0, %cst_27 {dimension_numbers = #tpu.dot_dimension_numbers<[1], [0], [0], [1], [0, 0, 1, 1], [], []>} : vector<8x64xbf16>, vector<64x256xbf16>, vector<8x256xf32> -> vector<8x256xf32>
    %120 = arith.addf %117, %119 : vector<8x256xf32>
    %121 = vector.extract_strided_slice %120 {offsets = [0, 0], sizes = [8, 192], strides = [1, 1]} : vector<8x256xf32> to vector<8x192xf32>
    %122 = arith.negf %121 : vector<8x192xf32>
    %123 = math.exp %122 : vector<8x192xf32>
    %cst_28 = arith.constant 1.000000e+00 : f32
    %124 = vector.broadcast %cst_28 : f32 to vector<8x192xf32>
    %125 = arith.addf %124, %123 : vector<8x192xf32>
    %126 = arith.divf %124, %125 : vector<8x192xf32>
    %127 = vector.extract_strided_slice %126 {offsets = [0, 0], sizes = [8, 64], strides = [1, 1]} : vector<8x192xf32> to vector<8x64xf32>
    %128 = vector.extract_strided_slice %126 {offsets = [0, 64], sizes = [8, 64], strides = [1, 1]} : vector<8x192xf32> to vector<8x64xf32>
    %129 = vector.extract_strided_slice %126 {offsets = [0, 128], sizes = [8, 64], strides = [1, 1]} : vector<8x192xf32> to vector<8x64xf32>
    %130 = vector.extract_strided_slice %120 {offsets = [0, 192], sizes = [8, 64], strides = [1, 1]} : vector<8x256xf32> to vector<8x64xf32>
    %131 = math.tanh %130 : vector<8x64xf32>
    %132 = arith.mulf %128, %91 : vector<8x64xf32>
    %133 = arith.mulf %127, %131 : vector<8x64xf32>
    %134 = arith.addf %132, %133 : vector<8x64xf32>
    %135 = math.tanh %134 : vector<8x64xf32>
    %136 = arith.mulf %129, %135 : vector<8x64xf32>
    %137 = arith.truncf %136 : vector<8x64xf32> to vector<8x64xbf16>
    %cst_29 = arith.constant dense<0.000000e+00> : vector<8x256xf32>
    %138 = tpu.matmul %137, %1, %cst_29 {dimension_numbers = #tpu.dot_dimension_numbers<[1], [0], [0], [1], [0, 0, 1, 1], [], []>} : vector<8x64xbf16>, vector<64x256xbf16>, vector<8x256xf32> -> vector<8x256xf32>
    %139 = arith.addf %138, %115 : vector<8x256xf32>
    %140 = arith.addf %139, %5 : vector<8x256xf32>
    %141 = vector.extract_strided_slice %140 {offsets = [0, 0], sizes = [8, 192], strides = [1, 1]} : vector<8x256xf32> to vector<8x192xf32>
    %142 = arith.negf %141 : vector<8x192xf32>
    %143 = math.exp %142 : vector<8x192xf32>
    %cst_30 = arith.constant 1.000000e+00 : f32
    %144 = vector.broadcast %cst_30 : f32 to vector<8x192xf32>
    %145 = arith.addf %144, %143 : vector<8x192xf32>
    %146 = arith.divf %144, %145 : vector<8x192xf32>
    %147 = vector.extract_strided_slice %146 {offsets = [0, 0], sizes = [8, 64], strides = [1, 1]} : vector<8x192xf32> to vector<8x64xf32>
    %148 = vector.extract_strided_slice %146 {offsets = [0, 64], sizes = [8, 64], strides = [1, 1]} : vector<8x192xf32> to vector<8x64xf32>
    %149 = vector.extract_strided_slice %146 {offsets = [0, 128], sizes = [8, 64], strides = [1, 1]} : vector<8x192xf32> to vector<8x64xf32>
    %150 = vector.extract_strided_slice %140 {offsets = [0, 192], sizes = [8, 64], strides = [1, 1]} : vector<8x256xf32> to vector<8x64xf32>
    %151 = math.tanh %150 : vector<8x64xf32>
    %152 = arith.mulf %148, %111 : vector<8x64xf32>
    %153 = arith.mulf %147, %151 : vector<8x64xf32>
    %154 = arith.addf %152, %153 : vector<8x64xf32>
    %155 = math.tanh %154 : vector<8x64xf32>
    %156 = arith.mulf %149, %155 : vector<8x64xf32>
    %157 = arith.truncf %156 : vector<8x64xf32> to vector<8x64xbf16>
    %cst_31 = arith.constant dense<0.000000e+00> : vector<8x256xf32>
    %158 = tpu.matmul %157, %2, %cst_31 {dimension_numbers = #tpu.dot_dimension_numbers<[1], [0], [0], [1], [0, 0, 1, 1], [], []>} : vector<8x64xbf16>, vector<64x256xbf16>, vector<8x256xf32> -> vector<8x256xf32>
    %159 = vector.extract_strided_slice %23 {offsets = [3, 0, 0], sizes = [1, 8, 256], strides = [1, 1, 1]} : vector<8x8x256xf32> to vector<1x8x256xf32>
    %160 = vector.shape_cast %159 : vector<1x8x256xf32> to vector<8x256xf32>
    %161 = arith.truncf %136 : vector<8x64xf32> to vector<8x64xbf16>
    %cst_32 = arith.constant dense<0.000000e+00> : vector<8x256xf32>
    %162 = tpu.matmul %161, %0, %cst_32 {dimension_numbers = #tpu.dot_dimension_numbers<[1], [0], [0], [1], [0, 0, 1, 1], [], []>} : vector<8x64xbf16>, vector<64x256xbf16>, vector<8x256xf32> -> vector<8x256xf32>
    %163 = arith.addf %160, %162 : vector<8x256xf32>
    %164 = vector.extract_strided_slice %163 {offsets = [0, 0], sizes = [8, 192], strides = [1, 1]} : vector<8x256xf32> to vector<8x192xf32>
    %165 = arith.negf %164 : vector<8x192xf32>
    %166 = math.exp %165 : vector<8x192xf32>
    %cst_33 = arith.constant 1.000000e+00 : f32
    %167 = vector.broadcast %cst_33 : f32 to vector<8x192xf32>
    %168 = arith.addf %167, %166 : vector<8x192xf32>
    %169 = arith.divf %167, %168 : vector<8x192xf32>
    %170 = vector.extract_strided_slice %169 {offsets = [0, 0], sizes = [8, 64], strides = [1, 1]} : vector<8x192xf32> to vector<8x64xf32>
    %171 = vector.extract_strided_slice %169 {offsets = [0, 64], sizes = [8, 64], strides = [1, 1]} : vector<8x192xf32> to vector<8x64xf32>
    %172 = vector.extract_strided_slice %169 {offsets = [0, 128], sizes = [8, 64], strides = [1, 1]} : vector<8x192xf32> to vector<8x64xf32>
    %173 = vector.extract_strided_slice %163 {offsets = [0, 192], sizes = [8, 64], strides = [1, 1]} : vector<8x256xf32> to vector<8x64xf32>
    %174 = math.tanh %173 : vector<8x64xf32>
    %175 = arith.mulf %171, %134 : vector<8x64xf32>
    %176 = arith.mulf %170, %174 : vector<8x64xf32>
    %177 = arith.addf %175, %176 : vector<8x64xf32>
    %178 = math.tanh %177 : vector<8x64xf32>
    %179 = arith.mulf %172, %178 : vector<8x64xf32>
    %180 = arith.truncf %179 : vector<8x64xf32> to vector<8x64xbf16>
    %cst_34 = arith.constant dense<0.000000e+00> : vector<8x256xf32>
    %181 = tpu.matmul %180, %1, %cst_34 {dimension_numbers = #tpu.dot_dimension_numbers<[1], [0], [0], [1], [0, 0, 1, 1], [], []>} : vector<8x64xbf16>, vector<64x256xbf16>, vector<8x256xf32> -> vector<8x256xf32>
    %182 = arith.addf %181, %158 : vector<8x256xf32>
    %183 = arith.addf %182, %5 : vector<8x256xf32>
    %184 = vector.extract_strided_slice %183 {offsets = [0, 0], sizes = [8, 192], strides = [1, 1]} : vector<8x256xf32> to vector<8x192xf32>
    %185 = arith.negf %184 : vector<8x192xf32>
    %186 = math.exp %185 : vector<8x192xf32>
    %cst_35 = arith.constant 1.000000e+00 : f32
    %187 = vector.broadcast %cst_35 : f32 to vector<8x192xf32>
    %188 = arith.addf %187, %186 : vector<8x192xf32>
    %189 = arith.divf %187, %188 : vector<8x192xf32>
    %190 = vector.extract_strided_slice %189 {offsets = [0, 0], sizes = [8, 64], strides = [1, 1]} : vector<8x192xf32> to vector<8x64xf32>
    %191 = vector.extract_strided_slice %189 {offsets = [0, 64], sizes = [8, 64], strides = [1, 1]} : vector<8x192xf32> to vector<8x64xf32>
    %192 = vector.extract_strided_slice %189 {offsets = [0, 128], sizes = [8, 64], strides = [1, 1]} : vector<8x192xf32> to vector<8x64xf32>
    %193 = vector.extract_strided_slice %183 {offsets = [0, 192], sizes = [8, 64], strides = [1, 1]} : vector<8x256xf32> to vector<8x64xf32>
    %194 = math.tanh %193 : vector<8x64xf32>
    %195 = arith.mulf %191, %154 : vector<8x64xf32>
    %196 = arith.mulf %190, %194 : vector<8x64xf32>
    %197 = arith.addf %195, %196 : vector<8x64xf32>
    %198 = math.tanh %197 : vector<8x64xf32>
    %199 = arith.mulf %192, %198 : vector<8x64xf32>
    %200 = arith.truncf %199 : vector<8x64xf32> to vector<8x64xbf16>
    %cst_36 = arith.constant dense<0.000000e+00> : vector<8x256xf32>
    %201 = tpu.matmul %200, %2, %cst_36 {dimension_numbers = #tpu.dot_dimension_numbers<[1], [0], [0], [1], [0, 0, 1, 1], [], []>} : vector<8x64xbf16>, vector<64x256xbf16>, vector<8x256xf32> -> vector<8x256xf32>
    %202 = vector.extract_strided_slice %23 {offsets = [4, 0, 0], sizes = [1, 8, 256], strides = [1, 1, 1]} : vector<8x8x256xf32> to vector<1x8x256xf32>
    %203 = vector.shape_cast %202 : vector<1x8x256xf32> to vector<8x256xf32>
    %204 = arith.truncf %179 : vector<8x64xf32> to vector<8x64xbf16>
    %cst_37 = arith.constant dense<0.000000e+00> : vector<8x256xf32>
    %205 = tpu.matmul %204, %0, %cst_37 {dimension_numbers = #tpu.dot_dimension_numbers<[1], [0], [0], [1], [0, 0, 1, 1], [], []>} : vector<8x64xbf16>, vector<64x256xbf16>, vector<8x256xf32> -> vector<8x256xf32>
    %206 = arith.addf %203, %205 : vector<8x256xf32>
    %207 = vector.extract_strided_slice %206 {offsets = [0, 0], sizes = [8, 192], strides = [1, 1]} : vector<8x256xf32> to vector<8x192xf32>
    %208 = arith.negf %207 : vector<8x192xf32>
    %209 = math.exp %208 : vector<8x192xf32>
    %cst_38 = arith.constant 1.000000e+00 : f32
    %210 = vector.broadcast %cst_38 : f32 to vector<8x192xf32>
    %211 = arith.addf %210, %209 : vector<8x192xf32>
    %212 = arith.divf %210, %211 : vector<8x192xf32>
    %213 = vector.extract_strided_slice %212 {offsets = [0, 0], sizes = [8, 64], strides = [1, 1]} : vector<8x192xf32> to vector<8x64xf32>
    %214 = vector.extract_strided_slice %212 {offsets = [0, 64], sizes = [8, 64], strides = [1, 1]} : vector<8x192xf32> to vector<8x64xf32>
    %215 = vector.extract_strided_slice %212 {offsets = [0, 128], sizes = [8, 64], strides = [1, 1]} : vector<8x192xf32> to vector<8x64xf32>
    %216 = vector.extract_strided_slice %206 {offsets = [0, 192], sizes = [8, 64], strides = [1, 1]} : vector<8x256xf32> to vector<8x64xf32>
    %217 = math.tanh %216 : vector<8x64xf32>
    %218 = arith.mulf %214, %177 : vector<8x64xf32>
    %219 = arith.mulf %213, %217 : vector<8x64xf32>
    %220 = arith.addf %218, %219 : vector<8x64xf32>
    %221 = math.tanh %220 : vector<8x64xf32>
    %222 = arith.mulf %215, %221 : vector<8x64xf32>
    %223 = arith.truncf %222 : vector<8x64xf32> to vector<8x64xbf16>
    %cst_39 = arith.constant dense<0.000000e+00> : vector<8x256xf32>
    %224 = tpu.matmul %223, %1, %cst_39 {dimension_numbers = #tpu.dot_dimension_numbers<[1], [0], [0], [1], [0, 0, 1, 1], [], []>} : vector<8x64xbf16>, vector<64x256xbf16>, vector<8x256xf32> -> vector<8x256xf32>
    %225 = arith.addf %224, %201 : vector<8x256xf32>
    %226 = arith.addf %225, %5 : vector<8x256xf32>
    %227 = vector.extract_strided_slice %226 {offsets = [0, 0], sizes = [8, 192], strides = [1, 1]} : vector<8x256xf32> to vector<8x192xf32>
    %228 = arith.negf %227 : vector<8x192xf32>
    %229 = math.exp %228 : vector<8x192xf32>
    %cst_40 = arith.constant 1.000000e+00 : f32
    %230 = vector.broadcast %cst_40 : f32 to vector<8x192xf32>
    %231 = arith.addf %230, %229 : vector<8x192xf32>
    %232 = arith.divf %230, %231 : vector<8x192xf32>
    %233 = vector.extract_strided_slice %232 {offsets = [0, 0], sizes = [8, 64], strides = [1, 1]} : vector<8x192xf32> to vector<8x64xf32>
    %234 = vector.extract_strided_slice %232 {offsets = [0, 64], sizes = [8, 64], strides = [1, 1]} : vector<8x192xf32> to vector<8x64xf32>
    %235 = vector.extract_strided_slice %232 {offsets = [0, 128], sizes = [8, 64], strides = [1, 1]} : vector<8x192xf32> to vector<8x64xf32>
    %236 = vector.extract_strided_slice %226 {offsets = [0, 192], sizes = [8, 64], strides = [1, 1]} : vector<8x256xf32> to vector<8x64xf32>
    %237 = math.tanh %236 : vector<8x64xf32>
    %238 = arith.mulf %234, %197 : vector<8x64xf32>
    %239 = arith.mulf %233, %237 : vector<8x64xf32>
    %240 = arith.addf %238, %239 : vector<8x64xf32>
    %241 = math.tanh %240 : vector<8x64xf32>
    %242 = arith.mulf %235, %241 : vector<8x64xf32>
    %243 = arith.truncf %242 : vector<8x64xf32> to vector<8x64xbf16>
    %cst_41 = arith.constant dense<0.000000e+00> : vector<8x256xf32>
    %244 = tpu.matmul %243, %2, %cst_41 {dimension_numbers = #tpu.dot_dimension_numbers<[1], [0], [0], [1], [0, 0, 1, 1], [], []>} : vector<8x64xbf16>, vector<64x256xbf16>, vector<8x256xf32> -> vector<8x256xf32>
    %245 = vector.extract_strided_slice %23 {offsets = [5, 0, 0], sizes = [1, 8, 256], strides = [1, 1, 1]} : vector<8x8x256xf32> to vector<1x8x256xf32>
    %246 = vector.shape_cast %245 : vector<1x8x256xf32> to vector<8x256xf32>
    %247 = arith.truncf %222 : vector<8x64xf32> to vector<8x64xbf16>
    %cst_42 = arith.constant dense<0.000000e+00> : vector<8x256xf32>
    %248 = tpu.matmul %247, %0, %cst_42 {dimension_numbers = #tpu.dot_dimension_numbers<[1], [0], [0], [1], [0, 0, 1, 1], [], []>} : vector<8x64xbf16>, vector<64x256xbf16>, vector<8x256xf32> -> vector<8x256xf32>
    %249 = arith.addf %246, %248 : vector<8x256xf32>
    %250 = vector.extract_strided_slice %249 {offsets = [0, 0], sizes = [8, 192], strides = [1, 1]} : vector<8x256xf32> to vector<8x192xf32>
    %251 = arith.negf %250 : vector<8x192xf32>
    %252 = math.exp %251 : vector<8x192xf32>
    %cst_43 = arith.constant 1.000000e+00 : f32
    %253 = vector.broadcast %cst_43 : f32 to vector<8x192xf32>
    %254 = arith.addf %253, %252 : vector<8x192xf32>
    %255 = arith.divf %253, %254 : vector<8x192xf32>
    %256 = vector.extract_strided_slice %255 {offsets = [0, 0], sizes = [8, 64], strides = [1, 1]} : vector<8x192xf32> to vector<8x64xf32>
    %257 = vector.extract_strided_slice %255 {offsets = [0, 64], sizes = [8, 64], strides = [1, 1]} : vector<8x192xf32> to vector<8x64xf32>
    %258 = vector.extract_strided_slice %255 {offsets = [0, 128], sizes = [8, 64], strides = [1, 1]} : vector<8x192xf32> to vector<8x64xf32>
    %259 = vector.extract_strided_slice %249 {offsets = [0, 192], sizes = [8, 64], strides = [1, 1]} : vector<8x256xf32> to vector<8x64xf32>
    %260 = math.tanh %259 : vector<8x64xf32>
    %261 = arith.mulf %257, %220 : vector<8x64xf32>
    %262 = arith.mulf %256, %260 : vector<8x64xf32>
    %263 = arith.addf %261, %262 : vector<8x64xf32>
    %264 = math.tanh %263 : vector<8x64xf32>
    %265 = arith.mulf %258, %264 : vector<8x64xf32>
    %266 = arith.truncf %265 : vector<8x64xf32> to vector<8x64xbf16>
    %cst_44 = arith.constant dense<0.000000e+00> : vector<8x256xf32>
    %267 = tpu.matmul %266, %1, %cst_44 {dimension_numbers = #tpu.dot_dimension_numbers<[1], [0], [0], [1], [0, 0, 1, 1], [], []>} : vector<8x64xbf16>, vector<64x256xbf16>, vector<8x256xf32> -> vector<8x256xf32>
    %268 = arith.addf %267, %244 : vector<8x256xf32>
    %269 = arith.addf %268, %5 : vector<8x256xf32>
    %270 = vector.extract_strided_slice %269 {offsets = [0, 0], sizes = [8, 192], strides = [1, 1]} : vector<8x256xf32> to vector<8x192xf32>
    %271 = arith.negf %270 : vector<8x192xf32>
    %272 = math.exp %271 : vector<8x192xf32>
    %cst_45 = arith.constant 1.000000e+00 : f32
    %273 = vector.broadcast %cst_45 : f32 to vector<8x192xf32>
    %274 = arith.addf %273, %272 : vector<8x192xf32>
    %275 = arith.divf %273, %274 : vector<8x192xf32>
    %276 = vector.extract_strided_slice %275 {offsets = [0, 0], sizes = [8, 64], strides = [1, 1]} : vector<8x192xf32> to vector<8x64xf32>
    %277 = vector.extract_strided_slice %275 {offsets = [0, 64], sizes = [8, 64], strides = [1, 1]} : vector<8x192xf32> to vector<8x64xf32>
    %278 = vector.extract_strided_slice %275 {offsets = [0, 128], sizes = [8, 64], strides = [1, 1]} : vector<8x192xf32> to vector<8x64xf32>
    %279 = vector.extract_strided_slice %269 {offsets = [0, 192], sizes = [8, 64], strides = [1, 1]} : vector<8x256xf32> to vector<8x64xf32>
    %280 = math.tanh %279 : vector<8x64xf32>
    %281 = arith.mulf %277, %240 : vector<8x64xf32>
    %282 = arith.mulf %276, %280 : vector<8x64xf32>
    %283 = arith.addf %281, %282 : vector<8x64xf32>
    %284 = math.tanh %283 : vector<8x64xf32>
    %285 = arith.mulf %278, %284 : vector<8x64xf32>
    %286 = arith.truncf %285 : vector<8x64xf32> to vector<8x64xbf16>
    %cst_46 = arith.constant dense<0.000000e+00> : vector<8x256xf32>
    %287 = tpu.matmul %286, %2, %cst_46 {dimension_numbers = #tpu.dot_dimension_numbers<[1], [0], [0], [1], [0, 0, 1, 1], [], []>} : vector<8x64xbf16>, vector<64x256xbf16>, vector<8x256xf32> -> vector<8x256xf32>
    %288 = vector.extract_strided_slice %23 {offsets = [6, 0, 0], sizes = [1, 8, 256], strides = [1, 1, 1]} : vector<8x8x256xf32> to vector<1x8x256xf32>
    %289 = vector.shape_cast %288 : vector<1x8x256xf32> to vector<8x256xf32>
    %290 = arith.truncf %265 : vector<8x64xf32> to vector<8x64xbf16>
    %cst_47 = arith.constant dense<0.000000e+00> : vector<8x256xf32>
    %291 = tpu.matmul %290, %0, %cst_47 {dimension_numbers = #tpu.dot_dimension_numbers<[1], [0], [0], [1], [0, 0, 1, 1], [], []>} : vector<8x64xbf16>, vector<64x256xbf16>, vector<8x256xf32> -> vector<8x256xf32>
    %292 = arith.addf %289, %291 : vector<8x256xf32>
    %293 = vector.extract_strided_slice %292 {offsets = [0, 0], sizes = [8, 192], strides = [1, 1]} : vector<8x256xf32> to vector<8x192xf32>
    %294 = arith.negf %293 : vector<8x192xf32>
    %295 = math.exp %294 : vector<8x192xf32>
    %cst_48 = arith.constant 1.000000e+00 : f32
    %296 = vector.broadcast %cst_48 : f32 to vector<8x192xf32>
    %297 = arith.addf %296, %295 : vector<8x192xf32>
    %298 = arith.divf %296, %297 : vector<8x192xf32>
    %299 = vector.extract_strided_slice %298 {offsets = [0, 0], sizes = [8, 64], strides = [1, 1]} : vector<8x192xf32> to vector<8x64xf32>
    %300 = vector.extract_strided_slice %298 {offsets = [0, 64], sizes = [8, 64], strides = [1, 1]} : vector<8x192xf32> to vector<8x64xf32>
    %301 = vector.extract_strided_slice %298 {offsets = [0, 128], sizes = [8, 64], strides = [1, 1]} : vector<8x192xf32> to vector<8x64xf32>
    %302 = vector.extract_strided_slice %292 {offsets = [0, 192], sizes = [8, 64], strides = [1, 1]} : vector<8x256xf32> to vector<8x64xf32>
    %303 = math.tanh %302 : vector<8x64xf32>
    %304 = arith.mulf %300, %263 : vector<8x64xf32>
    %305 = arith.mulf %299, %303 : vector<8x64xf32>
    %306 = arith.addf %304, %305 : vector<8x64xf32>
    %307 = math.tanh %306 : vector<8x64xf32>
    %308 = arith.mulf %301, %307 : vector<8x64xf32>
    %309 = arith.truncf %308 : vector<8x64xf32> to vector<8x64xbf16>
    %cst_49 = arith.constant dense<0.000000e+00> : vector<8x256xf32>
    %310 = tpu.matmul %309, %1, %cst_49 {dimension_numbers = #tpu.dot_dimension_numbers<[1], [0], [0], [1], [0, 0, 1, 1], [], []>} : vector<8x64xbf16>, vector<64x256xbf16>, vector<8x256xf32> -> vector<8x256xf32>
    %311 = arith.addf %310, %287 : vector<8x256xf32>
    %312 = arith.addf %311, %5 : vector<8x256xf32>
    %313 = vector.extract_strided_slice %312 {offsets = [0, 0], sizes = [8, 192], strides = [1, 1]} : vector<8x256xf32> to vector<8x192xf32>
    %314 = arith.negf %313 : vector<8x192xf32>
    %315 = math.exp %314 : vector<8x192xf32>
    %cst_50 = arith.constant 1.000000e+00 : f32
    %316 = vector.broadcast %cst_50 : f32 to vector<8x192xf32>
    %317 = arith.addf %316, %315 : vector<8x192xf32>
    %318 = arith.divf %316, %317 : vector<8x192xf32>
    %319 = vector.extract_strided_slice %318 {offsets = [0, 0], sizes = [8, 64], strides = [1, 1]} : vector<8x192xf32> to vector<8x64xf32>
    %320 = vector.extract_strided_slice %318 {offsets = [0, 64], sizes = [8, 64], strides = [1, 1]} : vector<8x192xf32> to vector<8x64xf32>
    %321 = vector.extract_strided_slice %318 {offsets = [0, 128], sizes = [8, 64], strides = [1, 1]} : vector<8x192xf32> to vector<8x64xf32>
    %322 = vector.extract_strided_slice %312 {offsets = [0, 192], sizes = [8, 64], strides = [1, 1]} : vector<8x256xf32> to vector<8x64xf32>
    %323 = math.tanh %322 : vector<8x64xf32>
    %324 = arith.mulf %320, %283 : vector<8x64xf32>
    %325 = arith.mulf %319, %323 : vector<8x64xf32>
    %326 = arith.addf %324, %325 : vector<8x64xf32>
    %327 = math.tanh %326 : vector<8x64xf32>
    %328 = arith.mulf %321, %327 : vector<8x64xf32>
    %329 = arith.truncf %328 : vector<8x64xf32> to vector<8x64xbf16>
    %cst_51 = arith.constant dense<0.000000e+00> : vector<8x256xf32>
    %330 = tpu.matmul %329, %2, %cst_51 {dimension_numbers = #tpu.dot_dimension_numbers<[1], [0], [0], [1], [0, 0, 1, 1], [], []>} : vector<8x64xbf16>, vector<64x256xbf16>, vector<8x256xf32> -> vector<8x256xf32>
    %331 = vector.extract_strided_slice %23 {offsets = [7, 0, 0], sizes = [1, 8, 256], strides = [1, 1, 1]} : vector<8x8x256xf32> to vector<1x8x256xf32>
    %332 = vector.shape_cast %331 : vector<1x8x256xf32> to vector<8x256xf32>
    %333 = arith.truncf %308 : vector<8x64xf32> to vector<8x64xbf16>
    %cst_52 = arith.constant dense<0.000000e+00> : vector<8x256xf32>
    %334 = tpu.matmul %333, %0, %cst_52 {dimension_numbers = #tpu.dot_dimension_numbers<[1], [0], [0], [1], [0, 0, 1, 1], [], []>} : vector<8x64xbf16>, vector<64x256xbf16>, vector<8x256xf32> -> vector<8x256xf32>
    %335 = arith.addf %332, %334 : vector<8x256xf32>
    %336 = vector.extract_strided_slice %335 {offsets = [0, 0], sizes = [8, 192], strides = [1, 1]} : vector<8x256xf32> to vector<8x192xf32>
    %337 = arith.negf %336 : vector<8x192xf32>
    %338 = math.exp %337 : vector<8x192xf32>
    %cst_53 = arith.constant 1.000000e+00 : f32
    %339 = vector.broadcast %cst_53 : f32 to vector<8x192xf32>
    %340 = arith.addf %339, %338 : vector<8x192xf32>
    %341 = arith.divf %339, %340 : vector<8x192xf32>
    %342 = vector.extract_strided_slice %341 {offsets = [0, 0], sizes = [8, 64], strides = [1, 1]} : vector<8x192xf32> to vector<8x64xf32>
    %343 = vector.extract_strided_slice %341 {offsets = [0, 64], sizes = [8, 64], strides = [1, 1]} : vector<8x192xf32> to vector<8x64xf32>
    %344 = vector.extract_strided_slice %341 {offsets = [0, 128], sizes = [8, 64], strides = [1, 1]} : vector<8x192xf32> to vector<8x64xf32>
    %345 = vector.extract_strided_slice %335 {offsets = [0, 192], sizes = [8, 64], strides = [1, 1]} : vector<8x256xf32> to vector<8x64xf32>
    %346 = math.tanh %345 : vector<8x64xf32>
    %347 = arith.mulf %343, %306 : vector<8x64xf32>
    %348 = arith.mulf %342, %346 : vector<8x64xf32>
    %349 = arith.addf %347, %348 : vector<8x64xf32>
    %350 = math.tanh %349 : vector<8x64xf32>
    %351 = arith.mulf %344, %350 : vector<8x64xf32>
    %352 = arith.truncf %351 : vector<8x64xf32> to vector<8x64xbf16>
    %cst_54 = arith.constant dense<0.000000e+00> : vector<8x256xf32>
    %353 = tpu.matmul %352, %1, %cst_54 {dimension_numbers = #tpu.dot_dimension_numbers<[1], [0], [0], [1], [0, 0, 1, 1], [], []>} : vector<8x64xbf16>, vector<64x256xbf16>, vector<8x256xf32> -> vector<8x256xf32>
    %354 = arith.addf %353, %330 : vector<8x256xf32>
    %355 = arith.addf %354, %5 : vector<8x256xf32>
    %356 = vector.extract_strided_slice %355 {offsets = [0, 0], sizes = [8, 192], strides = [1, 1]} : vector<8x256xf32> to vector<8x192xf32>
    %357 = arith.negf %356 : vector<8x192xf32>
    %358 = math.exp %357 : vector<8x192xf32>
    %cst_55 = arith.constant 1.000000e+00 : f32
    %359 = vector.broadcast %cst_55 : f32 to vector<8x192xf32>
    %360 = arith.addf %359, %358 : vector<8x192xf32>
    %361 = arith.divf %359, %360 : vector<8x192xf32>
    %362 = vector.extract_strided_slice %361 {offsets = [0, 0], sizes = [8, 64], strides = [1, 1]} : vector<8x192xf32> to vector<8x64xf32>
    %363 = vector.extract_strided_slice %361 {offsets = [0, 64], sizes = [8, 64], strides = [1, 1]} : vector<8x192xf32> to vector<8x64xf32>
    %364 = vector.extract_strided_slice %361 {offsets = [0, 128], sizes = [8, 64], strides = [1, 1]} : vector<8x192xf32> to vector<8x64xf32>
    %365 = vector.extract_strided_slice %355 {offsets = [0, 192], sizes = [8, 64], strides = [1, 1]} : vector<8x256xf32> to vector<8x64xf32>
    %366 = math.tanh %365 : vector<8x64xf32>
    %367 = arith.mulf %363, %326 : vector<8x64xf32>
    %368 = arith.mulf %362, %366 : vector<8x64xf32>
    %369 = arith.addf %367, %368 : vector<8x64xf32>
    %370 = math.tanh %369 : vector<8x64xf32>
    %371 = arith.mulf %364, %370 : vector<8x64xf32>
    %c0_56 = arith.constant 0 : index
    %c0_57 = arith.constant 0 : index
    %372 = vector.load %arg1[%c0_56, %c0_57] : memref<8x11xf32, #tpu.memory_space<vmem>>, vector<8x11xf32>
    %c0_58 = arith.constant 0 : index
    %c0_59 = arith.constant 0 : index
    %373 = vector.load %arg8[%c0_58, %c0_59] : memref<11x32xf32, #tpu.memory_space<vmem>>, vector<11x32xf32>
    %cst_60 = arith.constant dense<0.000000e+00> : vector<8x32xf32>
    %374 = tpu.matmul %372, %373, %cst_60 {dimension_numbers = #tpu.dot_dimension_numbers<[1], [0], [0], [1], [0, 0, 1, 1], [], []>} : vector<8x11xf32>, vector<11x32xf32>, vector<8x32xf32> -> vector<8x32xf32>
    %c0_61 = arith.constant 0 : index
    %c0_62 = arith.constant 0 : index
    %375 = vector.load %arg9[%c0_61, %c0_62] : memref<1x32xf32, #tpu.memory_space<vmem>>, vector<1x32xf32>
    %376 = vector.broadcast %375 : vector<1x32xf32> to vector<8x32xf32>
    %377 = arith.addf %374, %376 : vector<8x32xf32>
    %cst_63 = arith.constant 0.000000e+00 : f32
    %378 = vector.broadcast %cst_63 : f32 to vector<8x32xf32>
    %379 = arith.maximumf %377, %378 : vector<8x32xf32>
    %c0_64 = arith.constant 0 : index
    %c0_65 = arith.constant 0 : index
    %380 = vector.load %arg10[%c0_64, %c0_65] : memref<32x32xf32, #tpu.memory_space<vmem>>, vector<32x32xf32>
    %cst_66 = arith.constant dense<0.000000e+00> : vector<8x32xf32>
    %381 = tpu.matmul %379, %380, %cst_66 {dimension_numbers = #tpu.dot_dimension_numbers<[1], [0], [0], [1], [0, 0, 1, 1], [], []>} : vector<8x32xf32>, vector<32x32xf32>, vector<8x32xf32> -> vector<8x32xf32>
    %c0_67 = arith.constant 0 : index
    %c0_68 = arith.constant 0 : index
    %382 = vector.load %arg11[%c0_67, %c0_68] : memref<1x32xf32, #tpu.memory_space<vmem>>, vector<1x32xf32>
    %383 = vector.broadcast %382 : vector<1x32xf32> to vector<8x32xf32>
    %384 = arith.addf %381, %383 : vector<8x32xf32>
    %c0_69 = arith.constant 0 : index
    %c0_70 = arith.constant 0 : index
    %385 = vector.load %arg12[%c0_69, %c0_70] : memref<64x192xf32, #tpu.memory_space<vmem>>, vector<64x192xf32>
    %cst_71 = arith.constant dense<0.000000e+00> : vector<8x192xf32>
    %386 = tpu.matmul %371, %385, %cst_71 {dimension_numbers = #tpu.dot_dimension_numbers<[1], [0], [0], [1], [0, 0, 1, 1], [], []>} : vector<8x64xf32>, vector<64x192xf32>, vector<8x192xf32> -> vector<8x192xf32>
    %c0_72 = arith.constant 0 : index
    %c0_73 = arith.constant 0 : index
    %387 = vector.load %arg13[%c0_72, %c0_73] : memref<32x192xf32, #tpu.memory_space<vmem>>, vector<32x192xf32>
    %cst_74 = arith.constant dense<0.000000e+00> : vector<8x192xf32>
    %388 = tpu.matmul %384, %387, %cst_74 {dimension_numbers = #tpu.dot_dimension_numbers<[1], [0], [0], [1], [0, 0, 1, 1], [], []>} : vector<8x32xf32>, vector<32x192xf32>, vector<8x192xf32> -> vector<8x192xf32>
    %389 = arith.addf %386, %388 : vector<8x192xf32>
    %c0_75 = arith.constant 0 : index
    %c0_76 = arith.constant 0 : index
    %390 = vector.load %arg14[%c0_75, %c0_76] : memref<1x192xf32, #tpu.memory_space<vmem>>, vector<1x192xf32>
    %391 = vector.broadcast %390 : vector<1x192xf32> to vector<8x192xf32>
    %392 = arith.addf %389, %391 : vector<8x192xf32>
    %cst_77 = arith.constant 0.000000e+00 : f32
    %393 = vector.broadcast %cst_77 : f32 to vector<8x192xf32>
    %394 = arith.maximumf %392, %393 : vector<8x192xf32>
    %395 = vector.extract_strided_slice %394 {offsets = [0, 0], sizes = [8, 96], strides = [1, 1]} : vector<8x192xf32> to vector<8x96xf32>
    %396 = vector.extract_strided_slice %394 {offsets = [0, 128], sizes = [8, 64], strides = [1, 1]} : vector<8x192xf32> to vector<8x64xf32>
    %c0_78 = arith.constant 0 : index
    %c0_79 = arith.constant 0 : index
    %397 = vector.load %arg15[%c0_78, %c0_79] : memref<64x32xf32, #tpu.memory_space<vmem>>, vector<64x32xf32>
    %cst_80 = arith.constant dense<0.000000e+00> : vector<8x32xf32>
    %398 = tpu.matmul %396, %397, %cst_80 {dimension_numbers = #tpu.dot_dimension_numbers<[1], [0], [0], [1], [0, 0, 1, 1], [], []>} : vector<8x64xf32>, vector<64x32xf32>, vector<8x32xf32> -> vector<8x32xf32>
    %c0_81 = arith.constant 0 : index
    %c0_82 = arith.constant 0 : index
    %399 = vector.load %arg16[%c0_81, %c0_82] : memref<1x32xf32, #tpu.memory_space<vmem>>, vector<1x32xf32>
    %400 = vector.broadcast %399 : vector<1x32xf32> to vector<8x32xf32>
    %401 = arith.addf %398, %400 : vector<8x32xf32>
    %cst_83 = arith.constant 0.000000e+00 : f32
    %402 = vector.broadcast %cst_83 : f32 to vector<8x32xf32>
    %403 = arith.maximumf %401, %402 : vector<8x32xf32>
    %c0_84 = arith.constant 0 : index
    %c0_85 = arith.constant 0 : index
    %404 = vector.load %arg17[%c0_84, %c0_85] : memref<96x128xf32, #tpu.memory_space<vmem>>, vector<96x128xf32>
    %cst_86 = arith.constant dense<0.000000e+00> : vector<8x128xf32>
    %405 = tpu.matmul %395, %404, %cst_86 {dimension_numbers = #tpu.dot_dimension_numbers<[1], [0], [0], [1], [0, 0, 1, 1], [], []>} : vector<8x96xf32>, vector<96x128xf32>, vector<8x128xf32> -> vector<8x128xf32>
    %c0_87 = arith.constant 0 : index
    %c0_88 = arith.constant 0 : index
    %406 = vector.load %arg18[%c0_87, %c0_88] : memref<32x128xf32, #tpu.memory_space<vmem>>, vector<32x128xf32>
    %cst_89 = arith.constant dense<0.000000e+00> : vector<8x128xf32>
    %407 = tpu.matmul %403, %406, %cst_89 {dimension_numbers = #tpu.dot_dimension_numbers<[1], [0], [0], [1], [0, 0, 1, 1], [], []>} : vector<8x32xf32>, vector<32x128xf32>, vector<8x128xf32> -> vector<8x128xf32>
    %408 = arith.addf %405, %407 : vector<8x128xf32>
    %c0_90 = arith.constant 0 : index
    %c0_91 = arith.constant 0 : index
    %409 = vector.load %arg19[%c0_90, %c0_91] : memref<1x128xf32, #tpu.memory_space<vmem>>, vector<1x128xf32>
    %410 = vector.broadcast %409 : vector<1x128xf32> to vector<8x128xf32>
    %411 = arith.addf %408, %410 : vector<8x128xf32>
    %c0_92 = arith.constant 0 : index
    %c0_93 = arith.constant 0 : index
    %412 = vector.load %arg20[%c0_92, %c0_93] : memref<8x128xf32, #tpu.memory_space<vmem>>, vector<8x128xf32>
    tpu.vector_store %arg20[%c0_92, %c0_93], %411 {strides = array<i32>} : memref<8x128xf32, #tpu.memory_space<vmem>>, vector<8x128xf32>,
    return
  }
}

</mosaic_0001>

<llo_original>
// kernel: business_model_forward.1
$region0: #{business_model_forward.1}
  #allocation0 [shape = 'u32[]', space=smem, size = 0x4, offset = 0x4, fixed_abs, tag = 'smem constant byte address 0x4 - core index']
  #allocation1 [shape = 'u32[144,128]{1,0:T(1,128)}', space=vmem, size = 0x12000, scoped, tag = 'internal scratch']
  %s0 = inlined_call_operand.vmem [shape: f32[64,2], index: 0, kind: input, shape index: {}]
  %s1 = inlined_call_operand.vmem [shape: f32[8,11], index: 1, kind: input, shape index: {}]
  %s2 = inlined_call_operand.vmem [shape: f32[2,256], index: 2, kind: input, shape index: {}]
  %s3 = inlined_call_operand.hbm [shape: bf16[64,256], index: 3, kind: input, shape index: {}]
  %s4 = inlined_call_operand.hbm [shape: f32[1,256], index: 4, kind: input, shape index: {}]
  %s5 = inlined_call_operand.hbm [shape: bf16[64,256], index: 5, kind: input, shape index: {}]
  %s6 = inlined_call_operand.hbm [shape: bf16[64,256], index: 6, kind: input, shape index: {}]
  %s7 = inlined_call_operand.hbm [shape: f32[1,256], index: 7, kind: input, shape index: {}]
  %s8 = inlined_call_operand.hbm [shape: f32[11,32], index: 8, kind: input, shape index: {}]
  %s9 = inlined_call_operand.hbm [shape: f32[1,32], index: 9, kind: input, shape index: {}]
  %s10 = inlined_call_operand.hbm [shape: f32[32,32], index: 10, kind: input, shape index: {}]
  %s11 = inlined_call_operand.hbm [shape: f32[1,32], index: 11, kind: input, shape index: {}]
  %s12 = inlined_call_operand.vmem [shape: f32[64,192], index: 12, kind: input, shape index: {}]
  %s13 = inlined_call_operand.hbm [shape: f32[32,192], index: 13, kind: input, shape index: {}]
  %s14 = inlined_call_operand.hbm [shape: f32[1,192], index: 14, kind: input, shape index: {}]
  %s15 = inlined_call_operand.vmem [shape: f32[64,32], index: 15, kind: input, shape index: {}]
  %s16 = inlined_call_operand.hbm [shape: f32[1,32], index: 16, kind: input, shape index: {}]
  %s17 = inlined_call_operand.vmem [shape: f32[96,128], index: 17, kind: input, shape index: {}]
  %s18 = inlined_call_operand.hbm [shape: f32[32,128], index: 18, kind: input, shape index: {}]
  %s19 = inlined_call_operand.hbm [shape: f32[1,128], index: 19, kind: input, shape index: {}]
  %s20 = inlined_call_operand.vmem [shape: f32[8,128], index: 20, kind: output, shape index: {}]
  %s21 = sld [smem:[#allocation0]]
  $region146: #{business_model_forward.1} parent=0
    _
  %s23 = ssub.s32 1, %s21
  %s24 = scalar_select 0, %s23, %s21
  $region1: #{business_model_forward.1} parent=0
    #allocation2 [shape = 'u8[32768]{0}', space=vmem, size = 0x8000, scoped, tag = 'input window, operand 3, single buffered']
    #allocation3 [shape = 's32[1]{0}', space=sflag, size = 0x4, scoped, tag = 'scoped memory for business_model_forward.1']
    #allocation4 [shape = 'u8[1024]{0}', space=vmem, size = 0x400, scoped, tag = 'input window, operand 4, single buffered']
    #allocation5 [shape = 's32[1]{0}', space=sflag, size = 0x4, scoped, tag = 'scoped memory for business_model_forward.1']
    #allocation6 [shape = 'u8[32768]{0}', space=vmem, size = 0x8000, scoped, tag = 'input window, operand 5, single buffered']
    #allocation7 [shape = 'u8[32768]{0}', space=vmem, size = 0x8000, scoped, tag = 'input window, operand 6, single buffered']
    #allocation8 [shape = 's32[1]{0}', space=sflag, size = 0x4, scoped, tag = 'scoped memory for business_model_forward.1']
    #allocation9 [shape = 'u8[1024]{0}', space=vmem, size = 0x400, scoped, tag = 'input window, operand 7, single buffered']
    #allocation10 [shape = 'u8[8192]{0}', space=vmem, size = 0x2000, scoped, tag = 'input window, operand 8, single buffered']
    #allocation11 [shape = 's32[1]{0}', space=sflag, size = 0x4, scoped, tag = 'scoped memory for business_model_forward.1']
    #allocation12 [shape = 'u8[512]{0}', space=vmem, size = 0x400, scoped, tag = 'input window, operand 9, single buffered']
    #allocation13 [shape = 'u8[16384]{0}', space=vmem, size = 0x4000, scoped, tag = 'input window, operand 10, single buffered']
    #allocation14 [shape = 's32[1]{0}', space=sflag, size = 0x4, scoped, tag = 'scoped memory for business_model_forward.1']
    #allocation15 [shape = 'u8[512]{0}', space=vmem, size = 0x400, scoped, tag = 'input window, operand 11, single buffered']
    #allocation16 [shape = 'u8[32768]{0}', space=vmem, size = 0x8000, scoped, tag = 'input window, operand 13, single buffered']
    #allocation17 [shape = 's32[1]{0}', space=sflag, size = 0x4, scoped, tag = 'scoped memory for business_model_forward.1']
    #allocation18 [shape = 'u8[1024]{0}', space=vmem, size = 0x400, scoped, tag = 'input window, operand 14, single buffered']
    #allocation19 [shape = 'u8[512]{0}', space=vmem, size = 0x400, scoped, tag = 'input window, operand 16, single buffered']
    #allocation20 [shape = 's32[1]{0}', space=sflag, size = 0x4, scoped, tag = 'scoped memory for business_model_forward.1']
    #allocation21 [shape = 'u8[16384]{0}', space=vmem, size = 0x4000, scoped, tag = 'input window, operand 18, single buffered']
    #allocation22 [shape = 'u8[512]{0}', space=vmem, size = 0x400, scoped, tag = 'input window, operand 19, single buffered']
    #allocation23 [shape = 's32[1]{0}', space=sflag, size = 0x4, scoped, tag = 'scoped memory for business_model_forward.1']
    %25 = vsyncpa [#allocation3], 0
    %26 = vsyncpa [#allocation5], 0
    %27 = vsyncpa [#allocation8], 0
    %28 = vsyncpa [#allocation11], 0
    %29 = vsyncpa [#allocation14], 0
    %30 = vsyncpa [#allocation17], 0
    %31 = vsyncpa [#allocation20], 0
    %32 = vsyncpa [#allocation23], 0
    // Predicated region
    $region2: #{business_model_forward.1} parent=1 // pred_check
      _
    $region3: #{business_model_forward.1} parent=1 // pred_check_branch
      %34 = sbr.rel (0) target = $region5
    $region4: #{business_model_forward.1} parent=1 // pred_region
      _
    $region5: #{business_model_forward.1} parent=1 // pred_fallthru
      _
    // Predicated region
    $region6: #{business_model_forward.1} parent=1 // pred_check
      _
    $region7: #{business_model_forward.1} parent=1 // pred_check_branch
      %36 = sbr.rel (0) target = $region9
    $region8: #{business_model_forward.1} parent=1 // pred_region
      _
    $region9: #{business_model_forward.1} parent=1 // pred_fallthru
      _
    // Predicated region
    $region10: #{business_model_forward.1} parent=1 // pred_check
      _
    $region11: #{business_model_forward.1} parent=1 // pred_check_branch
      %38 = sbr.rel (0) target = $region13
    $region12: #{business_model_forward.1} parent=1 // pred_region
      _
    $region13: #{business_model_forward.1} parent=1 // pred_fallthru
      _
    // Predicated region
    $region14: #{business_model_forward.1} parent=1 // pred_check
      _
    $region15: #{business_model_forward.1} parent=1 // pred_check_branch
      %40 = sbr.rel (0) target = $region17
    $region16: #{business_model_forward.1} parent=1 // pred_region
      %s42 = ssub.s32 1024, 1024
      %43 = vsyncadd [#allocation3], %s42
      %s44 = sshll.u32 [#allocation2], 4
      %s45 = int_to_ptr.vmem [resolvable:$true] %s44
      %50 = dma.hbm_to_vmem [thread:$0]  %s3, 1024, %s45, [#allocation3], 128, 128, 8
    $region17: #{business_model_forward.1} parent=1 // pred_fallthru
      _
    // Predicated region
    $region18: #{business_model_forward.1} parent=1 // pred_check
      _
    $region19: #{business_model_forward.1} parent=1 // pred_check_branch
      %52 = sbr.rel (0) target = $region21
    $region20: #{business_model_forward.1} parent=1 // pred_region
      %s54 = ssub.s32 32, 32
      %55 = vsyncadd [#allocation5], %s54
      %s57 = sshll.u32 [#allocation4], 4
      %s58 = int_to_ptr.vmem [resolvable:$true] %s57
      %60 = dma.hbm_to_vmem [thread:$0]  %s4, 32, %s58, [#allocation5]
    $region21: #{business_model_forward.1} parent=1 // pred_fallthru
      _
    // Predicated region
    $region22: #{business_model_forward.1} parent=1 // pred_check
      _
    $region23: #{business_model_forward.1} parent=1 // pred_check_branch
      %62 = sbr.rel (0) target = $region25
    $region24: #{business_model_forward.1} parent=1 // pred_region
      %s64 = ssub.s32 1024, 1024
      %65 = vsyncadd [#allocation5], %s64
      %s66 = sshll.u32 [#allocation6], 4
      %s67 = int_to_ptr.vmem [resolvable:$true] %s66
      %72 = dma.hbm_to_vmem [thread:$0]  %s5, 1024, %s67, [#allocation5], 128, 128, 8
    $region25: #{business_model_forward.1} parent=1 // pred_fallthru
      _
    // Predicated region
    $region26: #{business_model_forward.1} parent=1 // pred_check
      _
    $region27: #{business_model_forward.1} parent=1 // pred_check_branch
      %74 = sbr.rel (0) target = $region29
    $region28: #{business_model_forward.1} parent=1 // pred_region
      %s76 = ssub.s32 1024, 1024
      %77 = vsyncadd [#allocation8], %s76
      %s78 = sshll.u32 [#allocation7], 4
      %s79 = int_to_ptr.vmem [resolvable:$true] %s78
      %84 = dma.hbm_to_vmem [thread:$0]  %s6, 1024, %s79, [#allocation8], 128, 128, 8
    $region29: #{business_model_forward.1} parent=1 // pred_fallthru
      _
    // Predicated region
    $region30: #{business_model_forward.1} parent=1 // pred_check
      _
    $region31: #{business_model_forward.1} parent=1 // pred_check_branch
      %86 = sbr.rel (0) target = $region33
    $region32: #{business_model_forward.1} parent=1 // pred_region
      %s88 = ssub.s32 32, 32
      %89 = vsyncadd [#allocation8], %s88
      %s91 = sshll.u32 [#allocation9], 4
      %s92 = int_to_ptr.vmem [resolvable:$true] %s91
      %94 = dma.hbm_to_vmem [thread:$0]  %s7, 32, %s92, [#allocation8]
    $region33: #{business_model_forward.1} parent=1 // pred_fallthru
      _
    // Predicated region
    $region34: #{business_model_forward.1} parent=1 // pred_check
      _
    $region35: #{business_model_forward.1} parent=1 // pred_check_branch
      %96 = sbr.rel (0) target = $region37
    $region36: #{business_model_forward.1} parent=1 // pred_region
      %s98 = ssub.s32 256, 256
      %99 = vsyncadd [#allocation11], %s98
      %s100 = sshll.u32 [#allocation10], 4
      %s101 = int_to_ptr.vmem [resolvable:$true] %s100
      %106 = dma.hbm_to_vmem [thread:$0]  %s8, 256, %s101, [#allocation11], 128, 128, 8
    $region37: #{business_model_forward.1} parent=1 // pred_fallthru
      _
    // Predicated region
    $region38: #{business_model_forward.1} parent=1 // pred_check
      _
    $region39: #{business_model_forward.1} parent=1 // pred_check_branch
      %108 = sbr.rel (0) target = $region41
    $region40: #{business_model_forward.1} parent=1 // pred_region
      %s110 = ssub.s32 16, 16
      %111 = vsyncadd [#allocation11], %s110
      %s113 = sshll.u32 [#allocation12], 4
      %s114 = int_to_ptr.vmem [resolvable:$true] %s113
      %116 = dma.hbm_to_vmem [thread:$0]  %s9, 16, %s114, [#allocation11]
    $region41: #{business_model_forward.1} parent=1 // pred_fallthru
      _
    // Predicated region
    $region42: #{business_model_forward.1} parent=1 // pred_check
      _
    $region43: #{business_model_forward.1} parent=1 // pred_check_branch
      %118 = sbr.rel (0) target = $region45
    $region44: #{business_model_forward.1} parent=1 // pred_region
      %s120 = ssub.s32 512, 512
      %121 = vsyncadd [#allocation14], %s120
      %s122 = sshll.u32 [#allocation13], 4
      %s123 = int_to_ptr.vmem [resolvable:$true] %s122
      %128 = dma.hbm_to_vmem [thread:$0]  %s10, 512, %s123, [#allocation14], 128, 128, 8
    $region45: #{business_model_forward.1} parent=1 // pred_fallthru
      _
    // Predicated region
    $region46: #{business_model_forward.1} parent=1 // pred_check
      _
    $region47: #{business_model_forward.1} parent=1 // pred_check_branch
      %130 = sbr.rel (0) target = $region49
    $region48: #{business_model_forward.1} parent=1 // pred_region
      %s132 = ssub.s32 16, 16
      %133 = vsyncadd [#allocation14], %s132
      %s135 = sshll.u32 [#allocation15], 4
      %s136 = int_to_ptr.vmem [resolvable:$true] %s135
      %138 = dma.hbm_to_vmem [thread:$0]  %s11, 16, %s136, [#allocation14]
    $region49: #{business_model_forward.1} parent=1 // pred_fallthru
      _
    // Predicated region
    $region50: #{business_model_forward.1} parent=1 // pred_check
      _
    $region51: #{business_model_forward.1} parent=1 // pred_check_branch
      %140 = sbr.rel (0) target = $region53
    $region52: #{business_model_forward.1} parent=1 // pred_region
      _
    $region53: #{business_model_forward.1} parent=1 // pred_fallthru
      _
    // Predicated region
    $region54: #{business_model_forward.1} parent=1 // pred_check
      _
    $region55: #{business_model_forward.1} parent=1 // pred_check_branch
      %142 = sbr.rel (0) target = $region57
    $region56: #{business_model_forward.1} parent=1 // pred_region
      %s144 = ssub.s32 1024, 1024
      %145 = vsyncadd [#allocation17], %s144
      %s146 = sshll.u32 [#allocation16], 4
      %s147 = int_to_ptr.vmem [resolvable:$true] %s146
      %152 = dma.hbm_to_vmem [thread:$0]  %s13, 1024, %s147, [#allocation17], 256, 256, 16
    $region57: #{business_model_forward.1} parent=1 // pred_fallthru
      _
    // Predicated region
    $region58: #{business_model_forward.1} parent=1 // pred_check
      _
    $region59: #{business_model_forward.1} parent=1 // pred_check_branch
      %154 = sbr.rel (0) target = $region61
    $region60: #{business_model_forward.1} parent=1 // pred_region
      %s156 = ssub.s32 32, 32
      %157 = vsyncadd [#allocation17], %s156
      %s159 = sshll.u32 [#allocation18], 4
      %s160 = int_to_ptr.vmem [resolvable:$true] %s159
      %162 = dma.hbm_to_vmem [thread:$0]  %s14, 32, %s160, [#allocation17]
    $region61: #{business_model_forward.1} parent=1 // pred_fallthru
      _
    // Predicated region
    $region62: #{business_model_forward.1} parent=1 // pred_check
      _
    $region63: #{business_model_forward.1} parent=1 // pred_check_branch
      %164 = sbr.rel (0) target = $region65
    $region64: #{business_model_forward.1} parent=1 // pred_region
      _
    $region65: #{business_model_forward.1} parent=1 // pred_fallthru
      _
    // Predicated region
    $region66: #{business_model_forward.1} parent=1 // pred_check
      _
    $region67: #{business_model_forward.1} parent=1 // pred_check_branch
      %166 = sbr.rel (0) target = $region69
    $region68: #{business_model_forward.1} parent=1 // pred_region
      %s168 = ssub.s32 16, 16
      %169 = vsyncadd [#allocation20], %s168
      %s171 = sshll.u32 [#allocation19], 4
      %s172 = int_to_ptr.vmem [resolvable:$true] %s171
      %174 = dma.hbm_to_vmem [thread:$0]  %s16, 16, %s172, [#allocation20]
    $region69: #{business_model_forward.1} parent=1 // pred_fallthru
      _
    // Predicated region
    $region70: #{business_model_forward.1} parent=1 // pred_check
      _
    $region71: #{business_model_forward.1} parent=1 // pred_check_branch
      %176 = sbr.rel (0) target = $region73
    $region72: #{business_model_forward.1} parent=1 // pred_region
      _
    $region73: #{business_model_forward.1} parent=1 // pred_fallthru
      _
    // Predicated region
    $region74: #{business_model_forward.1} parent=1 // pred_check
      _
    $region75: #{business_model_forward.1} parent=1 // pred_check_branch
      %178 = sbr.rel (0) target = $region77
    $region76: #{business_model_forward.1} parent=1 // pred_region
      %s180 = ssub.s32 512, 512
      %181 = vsyncadd [#allocation20], %s180
      %s182 = sshll.u32 [#allocation21], 4
      %s183 = int_to_ptr.vmem [resolvable:$true] %s182
      %188 = dma.hbm_to_vmem [thread:$0]  %s18, 512, %s183, [#allocation20], 128, 128, 8
    $region77: #{business_model_forward.1} parent=1 // pred_fallthru
      _
    // Predicated region
    $region78: #{business_model_forward.1} parent=1 // pred_check
      _
    $region79: #{business_model_forward.1} parent=1 // pred_check_branch
      %190 = sbr.rel (0) target = $region81
    $region80: #{business_model_forward.1} parent=1 // pred_region
      %s192 = ssub.s32 16, 16
      %193 = vsyncadd [#allocation23], %s192
      %s195 = sshll.u32 [#allocation22], 4
      %s196 = int_to_ptr.vmem [resolvable:$true] %s195
      %198 = dma.hbm_to_vmem [thread:$0]  %s19, 16, %s196, [#allocation23]
    $region81: #{business_model_forward.1} parent=1 // pred_fallthru
      _
    // Predicated region
    $region82: #{business_model_forward.1} parent=1 // pred_check
      _
    $region83: #{business_model_forward.1} parent=1 // pred_check_branch
      %200 = sbr.rel (0) target = $region85
    $region84: #{business_model_forward.1} parent=1 // pred_region
      %201 = dma.done [#allocation3], 1024
    $region85: #{business_model_forward.1} parent=1 // pred_fallthru
      _
    // Predicated region
    $region86: #{business_model_forward.1} parent=1 // pred_check
      _
    $region87: #{business_model_forward.1} parent=1 // pred_check_branch
      %203 = sbr.rel (0) target = $region89
    $region88: #{business_model_forward.1} parent=1 // pred_region
      %204 = dma.done [#allocation5], 32
    $region89: #{business_model_forward.1} parent=1 // pred_fallthru
      _
    // Predicated region
    $region90: #{business_model_forward.1} parent=1 // pred_check
      _
    $region91: #{business_model_forward.1} parent=1 // pred_check_branch
      %206 = sbr.rel (0) target = $region93
    $region92: #{business_model_forward.1} parent=1 // pred_region
      %207 = dma.done [#allocation5], 1024
    $region93: #{business_model_forward.1} parent=1 // pred_fallthru
      _
    // Predicated region
    $region94: #{business_model_forward.1} parent=1 // pred_check
      _
    $region95: #{business_model_forward.1} parent=1 // pred_check_branch
      %209 = sbr.rel (0) target = $region97
    $region96: #{business_model_forward.1} parent=1 // pred_region
      %210 = dma.done [#allocation8], 1024
    $region97: #{business_model_forward.1} parent=1 // pred_fallthru
      _
    // Predicated region
    $region98: #{business_model_forward.1} parent=1 // pred_check
      _
    $region99: #{business_model_forward.1} parent=1 // pred_check_branch
      %212 = sbr.rel (0) target = $region101
    $region100: #{business_model_forward.1} parent=1 // pred_region
      %213 = dma.done [#allocation8], 32
    $region101: #{business_model_forward.1} parent=1 // pred_fallthru
      _
    // Predicated region
    $region102: #{business_model_forward.1} parent=1 // pred_check
      _
    $region103: #{business_model_forward.1} parent=1 // pred_check_branch
      %215 = sbr.rel (0) target = $region105
    $region104: #{business_model_forward.1} parent=1 // pred_region
      %216 = dma.done [#allocation11], 256
    $region105: #{business_model_forward.1} parent=1 // pred_fallthru
      _
    // Predicated region
    $region106: #{business_model_forward.1} parent=1 // pred_check
      _
    $region107: #{business_model_forward.1} parent=1 // pred_check_branch
      %218 = sbr.rel (0) target = $region109
    $region108: #{business_model_forward.1} parent=1 // pred_region
      %219 = dma.done [#allocation11], 16
    $region109: #{business_model_forward.1} parent=1 // pred_fallthru
      _
    // Predicated region
    $region110: #{business_model_forward.1} parent=1 // pred_check
      _
    $region111: #{business_model_forward.1} parent=1 // pred_check_branch
      %221 = sbr.rel (0) target = $region113
    $region112: #{business_model_forward.1} parent=1 // pred_region
      %222 = dma.done [#allocation14], 512
    $region113: #{business_model_forward.1} parent=1 // pred_fallthru
      _
    // Predicated region
    $region114: #{business_model_forward.1} parent=1 // pred_check
      _
    $region115: #{business_model_forward.1} parent=1 // pred_check_branch
      %224 = sbr.rel (0) target = $region117
    $region116: #{business_model_forward.1} parent=1 // pred_region
      %225 = dma.done [#allocation14], 16
    $region117: #{business_model_forward.1} parent=1 // pred_fallthru
      _
    // Predicated region
    $region118: #{business_model_forward.1} parent=1 // pred_check
      _
    $region119: #{business_model_forward.1} parent=1 // pred_check_branch
      %227 = sbr.rel (0) target = $region121
    $region120: #{business_model_forward.1} parent=1 // pred_region
      %228 = dma.done [#allocation17], 1024
    $region121: #{business_model_forward.1} parent=1 // pred_fallthru
      _
    // Predicated region
    $region122: #{business_model_forward.1} parent=1 // pred_check
      _
    $region123: #{business_model_forward.1} parent=1 // pred_check_branch
      %230 = sbr.rel (0) target = $region125
    $region124: #{business_model_forward.1} parent=1 // pred_region
      %231 = dma.done [#allocation17], 32
    $region125: #{business_model_forward.1} parent=1 // pred_fallthru
      _
    // Predicated region
    $region126: #{business_model_forward.1} parent=1 // pred_check
      _
    $region127: #{business_model_forward.1} parent=1 // pred_check_branch
      %233 = sbr.rel (0) target = $region129
    $region128: #{business_model_forward.1} parent=1 // pred_region
      %234 = dma.done [#allocation20], 16
    $region129: #{business_model_forward.1} parent=1 // pred_fallthru
      _
    // Predicated region
    $region130: #{business_model_forward.1} parent=1 // pred_check
      _
    $region131: #{business_model_forward.1} parent=1 // pred_check_branch
      %236 = sbr.rel (0) target = $region133
    $region132: #{business_model_forward.1} parent=1 // pred_region
      %237 = dma.done [#allocation20], 512
    $region133: #{business_model_forward.1} parent=1 // pred_fallthru
      _
    // Predicated region
    $region134: #{business_model_forward.1} parent=1 // pred_check
      _
    $region135: #{business_model_forward.1} parent=1 // pred_check_branch
      %239 = sbr.rel (0) target = $region137
    $region136: #{business_model_forward.1} parent=1 // pred_region
      %240 = dma.done [#allocation23], 16
    $region137: #{business_model_forward.1} parent=1 // pred_fallthru
      _
    %v242 = vld [vmem:[#allocation2] sm:$0xff]
    %v243 = vld [vmem:[#allocation2 + $0x8] sm:$0xff]
    %v244 = vld [vmem:[#allocation2 + $0x10] sm:$0xff]
    %v245 = vld [vmem:[#allocation2 + $0x18] sm:$0xff]
    %v246 = vld [vmem:[#allocation2 + $0x20] sm:$0xff]
    %v247 = vld [vmem:[#allocation2 + $0x28] sm:$0xff]
    %v248 = vld [vmem:[#allocation2 + $0x30] sm:$0xff]
    %v249 = vld [vmem:[#allocation2 + $0x38] sm:$0xff]
    %v250 = vld [vmem:[#allocation6] sm:$0xff]
    %v251 = vld [vmem:[#allocation6 + $0x8] sm:$0xff]
    %v252 = vld [vmem:[#allocation6 + $0x10] sm:$0xff]
    %v253 = vld [vmem:[#allocation6 + $0x18] sm:$0xff]
    %v254 = vld [vmem:[#allocation6 + $0x20] sm:$0xff]
    %v255 = vld [vmem:[#allocation6 + $0x28] sm:$0xff]
    %v256 = vld [vmem:[#allocation6 + $0x30] sm:$0xff]
    %v257 = vld [vmem:[#allocation6 + $0x38] sm:$0xff]
    %v258 = vld [vmem:[#allocation7] sm:$0xff]
    %v259 = vld [vmem:[#allocation7 + $0x8] sm:$0xff]
    %v260 = vld [vmem:[#allocation7 + $0x10] sm:$0xff]
    %v261 = vld [vmem:[#allocation7 + $0x18] sm:$0xff]
    %v262 = vld [vmem:[#allocation7 + $0x20] sm:$0xff]
    %v263 = vld [vmem:[#allocation7 + $0x28] sm:$0xff]
    %v264 = vld [vmem:[#allocation7 + $0x30] sm:$0xff]
    %v265 = vld [vmem:[#allocation7 + $0x38] sm:$0xff]
    %v266 = vld [vmem:[#allocation9] sm:$0x3]
    %v268 = vlaneseq
    %v269 = vshrl.u32 %v268, 7
    %v270 = vsub.s32 0, %v269
    %v271 = vrot.slane %v266, %v270
    %v272 = vlaneseq
    %v273 = vshrl.u32 %v272, 7
    %v274 = vsub.s32 1, %v273
    %v275 = vrot.slane %v266, %v274
    %v278 = vld [vmem:[%s0] sm:$0xff]
    %v279 = vld [vmem:[%s0 + $0x8] sm:$0xff]
    %v280 = vld [vmem:[%s0 + $0x10] sm:$0xff]
    %v281 = vld [vmem:[%s0 + $0x18] sm:$0xff]
    %v282 = vld [vmem:[%s0 + $0x20] sm:$0xff]
    %v283 = vld [vmem:[%s0 + $0x28] sm:$0xff]
    %v284 = vld [vmem:[%s0 + $0x30] sm:$0xff]
    %v285 = vld [vmem:[%s0 + $0x38] sm:$0xff]
    %v286 = vld [vmem:[%s2] sm:$0xf]
    %288 = vset.pattern.permute.xlu0 0
    %289 = vperm.xlu0 %288, %v278
    %v290 = vpop.permute.xlu0 %289
    %293 = vset.pattern.permute.xlu0 0
    %294 = vperm.xlu0 %293, %v279
    %v295 = vpop.permute.xlu0 %294
    %298 = vset.pattern.permute.xlu0 0
    %299 = vperm.xlu0 %298, %v280
    %v300 = vpop.permute.xlu0 %299
    %303 = vset.pattern.permute.xlu0 0
    %304 = vperm.xlu0 %303, %v281
    %v305 = vpop.permute.xlu0 %304
    %308 = vset.pattern.permute.xlu0 0
    %309 = vperm.xlu0 %308, %v282
    %v310 = vpop.permute.xlu0 %309
    %313 = vset.pattern.permute.xlu0 0
    %314 = vperm.xlu0 %313, %v283
    %v315 = vpop.permute.xlu0 %314
    %318 = vset.pattern.permute.xlu0 0
    %319 = vperm.xlu0 %318, %v284
    %v320 = vpop.permute.xlu0 %319
    %323 = vset.pattern.permute.xlu0 0
    %324 = vperm.xlu0 %323, %v285
    %v325 = vpop.permute.xlu0 %324
    %v328 = vlaneseq
    %v329 = vshrl.u32 %v328, 7
    %v330 = vsub.s32 0, %v329
    %v331 = vrot.slane %v286, %v330
    %v332 = vlaneseq
    %v333 = vshrl.u32 %v332, 7
    %v334 = vsub.s32 2, %v333
    %v335 = vrot.slane %v286, %v334
    %v338 = vlaneseq
    %v339 = vshrl.u32 %v338, 7
    %v340 = vsub.s32 0, %v339
    %v341 = vrot.slane %v331, %v340
    %v342 = vlaneseq
    %v343 = vshrl.u32 %v342, 7
    %v344 = vsub.s32 0, %v343
    %v345 = vrot.slane %v335, %v344
    %v346 = vmul.f32 %v290, %v341
    %v347 = vmul.f32 %v290, %v345
    %v348 = vmul.f32 %v295, %v341
    %v349 = vmul.f32 %v295, %v345
    %v350 = vmul.f32 %v300, %v341
    %v351 = vmul.f32 %v300, %v345
    %v352 = vmul.f32 %v305, %v341
    %v353 = vmul.f32 %v305, %v345
    %v354 = vmul.f32 %v310, %v341
    %v355 = vmul.f32 %v310, %v345
    %v356 = vmul.f32 %v315, %v341
    %v357 = vmul.f32 %v315, %v345
    %v358 = vmul.f32 %v320, %v341
    %v359 = vmul.f32 %v320, %v345
    %v360 = vmul.f32 %v325, %v341
    %v361 = vmul.f32 %v325, %v345
    %362 = vset.pattern.permute.xlu0 1
    %363 = vperm.xlu0 %362, %v278
    %v364 = vpop.permute.xlu0 %363
    %366 = vset.pattern.permute.xlu0 1
    %367 = vperm.xlu0 %366, %v279
    %v368 = vpop.permute.xlu0 %367
    %370 = vset.pattern.permute.xlu0 1
    %371 = vperm.xlu0 %370, %v280
    %v372 = vpop.permute.xlu0 %371
    %374 = vset.pattern.permute.xlu0 1
    %375 = vperm.xlu0 %374, %v281
    %v376 = vpop.permute.xlu0 %375
    %378 = vset.pattern.permute.xlu0 1
    %379 = vperm.xlu0 %378, %v282
    %v380 = vpop.permute.xlu0 %379
    %382 = vset.pattern.permute.xlu0 1
    %383 = vperm.xlu0 %382, %v283
    %v384 = vpop.permute.xlu0 %383
    %386 = vset.pattern.permute.xlu0 1
    %387 = vperm.xlu0 %386, %v284
    %v388 = vpop.permute.xlu0 %387
    %390 = vset.pattern.permute.xlu0 1
    %391 = vperm.xlu0 %390, %v285
    %v392 = vpop.permute.xlu0 %391
    %v394 = vlaneseq
    %v395 = vshrl.u32 %v394, 7
    %v396 = vsub.s32 1, %v395
    %v397 = vrot.slane %v286, %v396
    %v398 = vlaneseq
    %v399 = vshrl.u32 %v398, 7
    %v400 = vsub.s32 3, %v399
    %v401 = vrot.slane %v286, %v400
    %v404 = vlaneseq
    %v405 = vshrl.u32 %v404, 7
    %v406 = vsub.s32 1, %v405
    %v407 = vrot.slane %v397, %v406
    %v408 = vlaneseq
    %v409 = vshrl.u32 %v408, 7
    %v410 = vsub.s32 1, %v409
    %v411 = vrot.slane %v401, %v410
    %v412 = vmul.f32 %v364, %v407
    %v413 = vmul.f32 %v364, %v411
    %v414 = vmul.f32 %v368, %v407
    %v415 = vmul.f32 %v368, %v411
    %v416 = vmul.f32 %v372, %v407
    %v417 = vmul.f32 %v372, %v411
    %v418 = vmul.f32 %v376, %v407
    %v419 = vmul.f32 %v376, %v411
    %v420 = vmul.f32 %v380, %v407
    %v421 = vmul.f32 %v380, %v411
    %v422 = vmul.f32 %v384, %v407
    %v423 = vmul.f32 %v384, %v411
    %v424 = vmul.f32 %v388, %v407
    %v425 = vmul.f32 %v388, %v411
    %v426 = vmul.f32 %v392, %v407
    %v427 = vmul.f32 %v392, %v411
    %v428 = vadd.f32 %v346, %v412
    %v429 = vadd.f32 %v347, %v413
    %v430 = vadd.f32 %v348, %v414
    %v431 = vadd.f32 %v349, %v415
    %v432 = vadd.f32 %v350, %v416
    %v433 = vadd.f32 %v351, %v417
    %v434 = vadd.f32 %v352, %v418
    %v435 = vadd.f32 %v353, %v419
    %v436 = vadd.f32 %v354, %v420
    %v437 = vadd.f32 %v355, %v421
    %v438 = vadd.f32 %v356, %v422
    %v439 = vadd.f32 %v357, %v423
    %v440 = vadd.f32 %v358, %v424
    %v441 = vadd.f32 %v359, %v425
    %v442 = vadd.f32 %v360, %v426
    %v443 = vadd.f32 %v361, %v427
    %v444 = vld [vmem:[#allocation4] sm:$0x3]
    %v446 = vlaneseq
    %v447 = vshrl.u32 %v446, 7
    %v448 = vsub.s32 0, %v447
    %v449 = vrot.slane %v444, %v448
    %v450 = vlaneseq
    %v451 = vshrl.u32 %v450, 7
    %v452 = vsub.s32 1, %v451
    %v453 = vrot.slane %v444, %v452
    %v456 = vadd.f32 %v428, %v449
    %v457 = vadd.f32 %v429, %v453
    %v458 = vadd.f32 %v430, %v449
    %v459 = vadd.f32 %v431, %v453
    %v460 = vadd.f32 %v432, %v449
    %v461 = vadd.f32 %v433, %v453
    %v462 = vadd.f32 %v434, %v449
    %v463 = vadd.f32 %v435, %v453
    %v464 = vadd.f32 %v436, %v449
    %v465 = vadd.f32 %v437, %v453
    %v466 = vadd.f32 %v438, %v449
    %v467 = vadd.f32 %v439, %v453
    %v468 = vadd.f32 %v440, %v449
    %v469 = vadd.f32 %v441, %v453
    %v470 = vadd.f32 %v442, %v449
    %v471 = vadd.f32 %v443, %v453
    %v480 = vunpack.c.l.b16 %v258
    %v481 = vunpack.c.h.b16 %v258
    %v482 = vunpack.c.l.b16 %v259
    %v483 = vunpack.c.h.b16 %v259
    %v484 = vunpack.c.l.b16 %v260
    %v485 = vunpack.c.h.b16 %v260
    %v486 = vunpack.c.l.b16 %v261
    %v487 = vunpack.c.h.b16 %v261
    %v488 = vunpack.c.l.b16 %v262
    %v489 = vunpack.c.h.b16 %v262
    %v490 = vunpack.c.l.b16 %v263
    %v491 = vunpack.c.h.b16 %v263
    %v492 = vunpack.c.l.b16 %v264
    %v493 = vunpack.c.h.b16 %v264
    %v494 = vunpack.c.l.b16 %v265
    %v495 = vunpack.c.h.b16 %v265
    %v496 = vpack.c.b16 %v482, %v480
    %v497 = vpack.c.b16 %v483, %v481
    %v498 = vpack.c.b16 %v486, %v484
    %v499 = vpack.c.b16 %v487, %v485
    %v500 = vpack.c.b16 %v490, %v488
    %v501 = vpack.c.b16 %v491, %v489
    %v502 = vpack.c.b16 %v494, %v492
    %v503 = vpack.c.b16 %v495, %v493
    %vm512 = vcmask 523264
    %v514 = vsel %vm512, 0, 0
    %516 = vmatprep.subr.bf16.mxu0 %v497
    %517 = vmatpush1.bf16.msra.mxu0 %v496
    %518 = vmatprep.subr.bf16.mxu0 %v499
    %519 = vmatpush1.bf16.msra.mxu0 %v498
    %520 = vmatprep.subr.bf16.mxu0 %v501
    %521 = vmatpush1.bf16.msra.mxu0 %v500
    %522 = vmatprep.subr.bf16.mxu0 %v503
    %523 = vmatpush1.bf16.msra.mxu0 %v502
    %524 = vmatprep.subr.bf16.mxu0 0
    %525 = vmatpush1.bf16.msra.mxu0 0
    %526 = vmatprep.subr.bf16.mxu0 0
    %527 = vmatpush1.bf16.msra.mxu0 0
    %528 = vmatprep.subr.bf16.mxu0 0
    %529 = vmatpush1.bf16.msra.mxu0 0
    %530 = vmatprep.subr.bf16.mxu0 0
    %531 = vmatpush1.bf16.msra.mxu0 0
    %532 = vmatprep.subr.bf16.mxu0 0
    %533 = vmatpush1.bf16.msra.mxu0 0
    %534 = vmatprep.subr.bf16.mxu0 0
    %535 = vmatpush1.bf16.msra.mxu0 0
    %536 = vmatprep.subr.bf16.mxu0 0
    %537 = vmatpush1.bf16.msra.mxu0 0
    %538 = vmatprep.subr.bf16.mxu0 0
    %539 = vmatpush1.bf16.msra.mxu0 0
    %540 = vmatprep.subr.bf16.mxu0 0
    %541 = vmatpush1.bf16.msra.mxu0 0
    %542 = vmatprep.subr.bf16.mxu0 0
    %543 = vmatpush1.bf16.msra.mxu0 0
    %544 = vmatprep.subr.bf16.mxu0 0
    %545 = vmatpush1.bf16.msra.mxu0 0
    %546 = vmatprep.subr.bf16.mxu0 0
    %547 = vmatpush1.bf16.msra.mxu0 0
    %548 = vmatprep.mubr.bf16.mxu0 0
    %549 = vmatmul.mubr.bf16.gmra.mrb[0].mxu0 %v514
    %v550 = vpop.f32.mrb[0].mxu0
    %v551 = vadd.f32 0.0, %v550
    %v552 = vpop.f32.mrb[0].mxu0
    %v553 = vadd.f32 0.0, %v552
    %v554 = vpop.f32.mrb[0].mxu0
    %v555 = vpop.f32.mrb[0].mxu0
    %556 = vdwg.mxu0
    %v565 = vunpack.c.l.b16 %v242
    %v566 = vunpack.c.h.b16 %v242
    %v567 = vunpack.c.l.b16 %v243
    %v568 = vunpack.c.h.b16 %v243
    %v569 = vunpack.c.l.b16 %v244
    %v570 = vunpack.c.h.b16 %v244
    %v571 = vunpack.c.l.b16 %v245
    %v572 = vunpack.c.h.b16 %v245
    %v573 = vunpack.c.l.b16 %v246
    %v574 = vunpack.c.h.b16 %v246
    %v575 = vunpack.c.l.b16 %v247
    %v576 = vunpack.c.h.b16 %v247
    %v577 = vunpack.c.l.b16 %v248
    %v578 = vunpack.c.h.b16 %v248
    %v579 = vunpack.c.l.b16 %v249
    %v580 = vunpack.c.h.b16 %v249
    %v581 = vpack.c.b16 %v567, %v565
    %v582 = vpack.c.b16 %v568, %v566
    %v583 = vpack.c.b16 %v571, %v569
    %v584 = vpack.c.b16 %v572, %v570
    %v585 = vpack.c.b16 %v575, %v573
    %v586 = vpack.c.b16 %v576, %v574
    %v587 = vpack.c.b16 %v579, %v577
    %v588 = vpack.c.b16 %v580, %v578
    %597 = vmatprep.subr.bf16.mxu0 %v582
    %598 = vmatpush1.bf16.msra.mxu0 %v581
    %599 = vmatprep.subr.bf16.mxu0 %v584
    %600 = vmatpush1.bf16.msra.mxu0 %v583
    %601 = vmatprep.subr.bf16.mxu0 %v586
    %602 = vmatpush1.bf16.msra.mxu0 %v585
    %603 = vmatprep.subr.bf16.mxu0 %v588
    %604 = vmatpush1.bf16.msra.mxu0 %v587
    %605 = vmatprep.subr.bf16.mxu0 0
    %606 = vmatpush1.bf16.msra.mxu0 0
    %607 = vmatprep.subr.bf16.mxu0 0
    %608 = vmatpush1.bf16.msra.mxu0 0
    %609 = vmatprep.subr.bf16.mxu0 0
    %610 = vmatpush1.bf16.msra.mxu0 0
    %611 = vmatprep.subr.bf16.mxu0 0
    %612 = vmatpush1.bf16.msra.mxu0 0
    %613 = vmatprep.subr.bf16.mxu0 0
    %614 = vmatpush1.bf16.msra.mxu0 0
    %615 = vmatprep.subr.bf16.mxu0 0
    %616 = vmatpush1.bf16.msra.mxu0 0
    %617 = vmatprep.subr.bf16.mxu0 0
    %618 = vmatpush1.bf16.msra.mxu0 0
    %619 = vmatprep.subr.bf16.mxu0 0
    %620 = vmatpush1.bf16.msra.mxu0 0
    %621 = vmatprep.subr.bf16.mxu0 0
    %622 = vmatpush1.bf16.msra.mxu0 0
    %623 = vmatprep.subr.bf16.mxu0 0
    %624 = vmatpush1.bf16.msra.mxu0 0
    %625 = vmatprep.subr.bf16.mxu0 0
    %626 = vmatpush1.bf16.msra.mxu0 0
    %627 = vmatprep.subr.bf16.mxu0 0
    %628 = vmatpush1.bf16.msra.mxu0 0
    %629 = vmatprep.mubr.bf16.mxu0 0
    %630 = vmatmul.mubr.bf16.gmra.mrb[0].mxu0 %v514
    %v631 = vpop.f32.mrb[0].mxu0
    %v632 = vadd.f32 0.0, %v631
    %v633 = vpop.f32.mrb[0].mxu0
    %v634 = vadd.f32 0.0, %v633
    %v635 = vpop.f32.mrb[0].mxu0
    %v636 = vpop.f32.mrb[0].mxu0
    %637 = vdwg.mxu0
    %v638 = vadd.f32 %v456, %v632
    %v639 = vadd.f32 %v457, %v634
    %v640 = vxor.u32 %v638, 2147483648
    %v641 = vxor.u32 %v639, 2147483648
    %v642 = vmul.f32 %v640, 1.442695
    %v643 = vpow.pop %v642
    %v644 = vmul.f32 %v641, 1.442695
    %v645 = vpow.pop %v644
    %v646 = vadd.f32 %v643, 1.0
    %v647 = vadd.f32 %v645, 1.0
    %v648 = vrcp.pop %v646
    %v649 = vmul.f32 1.0, %v648
    %v650 = vrcp.pop %v647
    %v651 = vmul.f32 1.0, %v650
    %v652 = vtanh.pop %v639
    %v653 = vmul.f32 %v649, 0.0
    %655 = vrot.lane.b32.xlu0 %v652, 64
    %v656 = vpop.permute.xlu0 %655
    %v658 = vmul.f32 %v649, %v656
    %660 = vrot.lane.b32.xlu0 %v658, 64
    %v661 = vpop.permute.xlu0 %660
    %v663 = vadd.f32 %v653, %v661
    %v664 = vtanh.pop %v663
    %666 = vrot.lane.b32.xlu0 %v664, 64
    %v667 = vpop.permute.xlu0 %666
    %v669 = vmul.f32 %v651, %v667
    %v670 = vpack.c.bf16 %v669, %v669
    %v679 = vunpack.c.l.b16 %v250
    %v680 = vunpack.c.h.b16 %v250
    %v681 = vunpack.c.l.b16 %v251
    %v682 = vunpack.c.h.b16 %v251
    %v683 = vunpack.c.l.b16 %v252
    %v684 = vunpack.c.h.b16 %v252
    %v685 = vunpack.c.l.b16 %v253
    %v686 = vunpack.c.h.b16 %v253
    %v687 = vunpack.c.l.b16 %v254
    %v688 = vunpack.c.h.b16 %v254
    %v689 = vunpack.c.l.b16 %v255
    %v690 = vunpack.c.h.b16 %v255
    %v691 = vunpack.c.l.b16 %v256
    %v692 = vunpack.c.h.b16 %v256
    %v693 = vunpack.c.l.b16 %v257
    %v694 = vunpack.c.h.b16 %v257
    %v695 = vpack.c.b16 %v681, %v679
    %v696 = vpack.c.b16 %v682, %v680
    %v697 = vpack.c.b16 %v685, %v683
    %v698 = vpack.c.b16 %v686, %v684
    %v699 = vpack.c.b16 %v689, %v687
    %v700 = vpack.c.b16 %v690, %v688
    %v701 = vpack.c.b16 %v693, %v691
    %v702 = vpack.c.b16 %v694, %v692
    %v712 = vsel %vm512, %v670, 0
    %714 = vmatprep.subr.bf16.mxu0 %v696
    %715 = vmatpush1.bf16.msra.mxu0 %v695
    %716 = vmatprep.subr.bf16.mxu0 %v698
    %717 = vmatpush1.bf16.msra.mxu0 %v697
    %718 = vmatprep.subr.bf16.mxu0 %v700
    %719 = vmatpush1.bf16.msra.mxu0 %v699
    %720 = vmatprep.subr.bf16.mxu0 %v702
    %721 = vmatpush1.bf16.msra.mxu0 %v701
    %722 = vmatprep.subr.bf16.mxu0 0
    %723 = vmatpush1.bf16.msra.mxu0 0
    %724 = vmatprep.subr.bf16.mxu0 0
    %725 = vmatpush1.bf16.msra.mxu0 0
    %726 = vmatprep.subr.bf16.mxu0 0
    %727 = vmatpush1.bf16.msra.mxu0 0
    %728 = vmatprep.subr.bf16.mxu0 0
    %729 = vmatpush1.bf16.msra.mxu0 0
    %730 = vmatprep.subr.bf16.mxu0 0
    %731 = vmatpush1.bf16.msra.mxu0 0
    %732 = vmatprep.subr.bf16.mxu0 0
    %733 = vmatpush1.bf16.msra.mxu0 0
    %734 = vmatprep.subr.bf16.mxu0 0
    %735 = vmatpush1.bf16.msra.mxu0 0
    %736 = vmatprep.subr.bf16.mxu0 0
    %737 = vmatpush1.bf16.msra.mxu0 0
    %738 = vmatprep.subr.bf16.mxu0 0
    %739 = vmatpush1.bf16.msra.mxu0 0
    %740 = vmatprep.subr.bf16.mxu0 0
    %741 = vmatpush1.bf16.msra.mxu0 0
    %742 = vmatprep.subr.bf16.mxu0 0
    %743 = vmatpush1.bf16.msra.mxu0 0
    %744 = vmatprep.subr.bf16.mxu0 0
    %745 = vmatpush1.bf16.msra.mxu0 0
    %746 = vmatprep.mubr.bf16.mxu0 0
    %747 = vmatmul.mubr.bf16.gmra.mrb[0].mxu0 %v712
    %v748 = vpop.f32.mrb[0].mxu0
    %v749 = vadd.f32 %v551, %v748
    %v750 = vpop.f32.mrb[0].mxu0
    %v751 = vadd.f32 %v553, %v750
    %v752 = vpop.f32.mrb[0].mxu0
    %v753 = vpop.f32.mrb[0].mxu0
    %754 = vdwg.mxu0
    %v755 = vadd.f32 %v749, %v271
    %v756 = vadd.f32 %v751, %v275
    %v757 = vxor.u32 %v755, 2147483648
    %v758 = vxor.u32 %v756, 2147483648
    %v759 = vmul.f32 %v757, 1.442695
    %v760 = vpow.pop %v759
    %v761 = vmul.f32 %v758, 1.442695
    %v762 = vpow.pop %v761
    %v763 = vadd.f32 %v760, 1.0
    %v764 = vadd.f32 %v762, 1.0
    %v765 = vrcp.pop %v763
    %v766 = vmul.f32 1.0, %v765
    %v767 = vrcp.pop %v764
    %v768 = vmul.f32 1.0, %v767
    %v769 = vtanh.pop %v756
    %v770 = vmul.f32 %v766, 0.0
    %772 = vrot.lane.b32.xlu0 %v769, 64
    %v773 = vpop.permute.xlu0 %772
    %v775 = vmul.f32 %v766, %v773
    %777 = vrot.lane.b32.xlu0 %v775, 64
    %v778 = vpop.permute.xlu0 %777
    %v780 = vadd.f32 %v770, %v778
    %v781 = vtanh.pop %v780
    %783 = vrot.lane.b32.xlu0 %v781, 64
    %v784 = vpop.permute.xlu0 %783
    %v786 = vmul.f32 %v768, %v784
    %v787 = vpack.c.bf16 %v786, %v786
    %v789 = vsel %vm512, %v787, 0
    %791 = vmatprep.subr.bf16.mxu0 %v497
    %792 = vmatpush1.bf16.msra.mxu0 %v496
    %793 = vmatprep.subr.bf16.mxu0 %v499
    %794 = vmatpush1.bf16.msra.mxu0 %v498
    %795 = vmatprep.subr.bf16.mxu0 %v501
    %796 = vmatpush1.bf16.msra.mxu0 %v500
    %797 = vmatprep.subr.bf16.mxu0 %v503
    %798 = vmatpush1.bf16.msra.mxu0 %v502
    %799 = vmatprep.subr.bf16.mxu0 0
    %800 = vmatpush1.bf16.msra.mxu0 0
    %801 = vmatprep.subr.bf16.mxu0 0
    %802 = vmatpush1.bf16.msra.mxu0 0
    %803 = vmatprep.subr.bf16.mxu0 0
    %804 = vmatpush1.bf16.msra.mxu0 0
    %805 = vmatprep.subr.bf16.mxu0 0
    %806 = vmatpush1.bf16.msra.mxu0 0
    %807 = vmatprep.subr.bf16.mxu0 0
    %808 = vmatpush1.bf16.msra.mxu0 0
    %809 = vmatprep.subr.bf16.mxu0 0
    %810 = vmatpush1.bf16.msra.mxu0 0
    %811 = vmatprep.subr.bf16.mxu0 0
    %812 = vmatpush1.bf16.msra.mxu0 0
    %813 = vmatprep.subr.bf16.mxu0 0
    %814 = vmatpush1.bf16.msra.mxu0 0
    %815 = vmatprep.subr.bf16.mxu0 0
    %816 = vmatpush1.bf16.msra.mxu0 0
    %817 = vmatprep.subr.bf16.mxu0 0
    %818 = vmatpush1.bf16.msra.mxu0 0
    %819 = vmatprep.subr.bf16.mxu0 0
    %820 = vmatpush1.bf16.msra.mxu0 0
    %821 = vmatprep.subr.bf16.mxu0 0
    %822 = vmatpush1.bf16.msra.mxu0 0
    %823 = vmatprep.mubr.bf16.mxu0 0
    %824 = vmatmul.mubr.bf16.gmra.mrb[0].mxu0 %v789
    %v825 = vpop.f32.mrb[0].mxu0
    %v826 = vadd.f32 0.0, %v825
    %v827 = vpop.f32.mrb[0].mxu0
    %v828 = vadd.f32 0.0, %v827
    %v829 = vpop.f32.mrb[0].mxu0
    %v830 = vpop.f32.mrb[0].mxu0
    %831 = vdwg.mxu0
    %832 = vmatprep.subr.bf16.mxu0 %v582
    %833 = vmatpush1.bf16.msra.mxu0 %v581
    %834 = vmatprep.subr.bf16.mxu0 %v584
    %835 = vmatpush1.bf16.msra.mxu0 %v583
    %836 = vmatprep.subr.bf16.mxu0 %v586
    %837 = vmatpush1.bf16.msra.mxu0 %v585
    %838 = vmatprep.subr.bf16.mxu0 %v588
    %839 = vmatpush1.bf16.msra.mxu0 %v587
    %840 = vmatprep.subr.bf16.mxu0 0
    %841 = vmatpush1.bf16.msra.mxu0 0
    %842 = vmatprep.subr.bf16.mxu0 0
    %843 = vmatpush1.bf16.msra.mxu0 0
    %844 = vmatprep.subr.bf16.mxu0 0
    %845 = vmatpush1.bf16.msra.mxu0 0
    %846 = vmatprep.subr.bf16.mxu0 0
    %847 = vmatpush1.bf16.msra.mxu0 0
    %848 = vmatprep.subr.bf16.mxu0 0
    %849 = vmatpush1.bf16.msra.mxu0 0
    %850 = vmatprep.subr.bf16.mxu0 0
    %851 = vmatpush1.bf16.msra.mxu0 0
    %852 = vmatprep.subr.bf16.mxu0 0
    %853 = vmatpush1.bf16.msra.mxu0 0
    %854 = vmatprep.subr.bf16.mxu0 0
    %855 = vmatpush1.bf16.msra.mxu0 0
    %856 = vmatprep.subr.bf16.mxu0 0
    %857 = vmatpush1.bf16.msra.mxu0 0
    %858 = vmatprep.subr.bf16.mxu0 0
    %859 = vmatpush1.bf16.msra.mxu0 0
    %860 = vmatprep.subr.bf16.mxu0 0
    %861 = vmatpush1.bf16.msra.mxu0 0
    %862 = vmatprep.subr.bf16.mxu0 0
    %863 = vmatpush1.bf16.msra.mxu0 0
    %864 = vmatprep.mubr.bf16.mxu0 0
    %865 = vmatmul.mubr.bf16.gmra.mrb[0].mxu0 %v712
    %v866 = vpop.f32.mrb[0].mxu0
    %v867 = vadd.f32 0.0, %v866
    %v868 = vpop.f32.mrb[0].mxu0
    %v869 = vadd.f32 0.0, %v868
    %v870 = vpop.f32.mrb[0].mxu0
    %v871 = vpop.f32.mrb[0].mxu0
    %872 = vdwg.mxu0
    %v873 = vadd.f32 %v458, %v867
    %v874 = vadd.f32 %v459, %v869
    %v875 = vxor.u32 %v873, 2147483648
    %v876 = vxor.u32 %v874, 2147483648
    %v877 = vmul.f32 %v875, 1.442695
    %v878 = vpow.pop %v877
    %v879 = vmul.f32 %v876, 1.442695
    %v880 = vpow.pop %v879
    %v881 = vadd.f32 %v878, 1.0
    %v882 = vadd.f32 %v880, 1.0
    %v883 = vrcp.pop %v881
    %v884 = vmul.f32 1.0, %v883
    %v885 = vrcp.pop %v882
    %v886 = vmul.f32 1.0, %v885
    %v887 = vtanh.pop %v874
    %v888 = vmul.f32 %v884, %v663
    %890 = vrot.lane.b32.xlu0 %v887, 64
    %v891 = vpop.permute.xlu0 %890
    %v893 = vmul.f32 %v884, %v891
    %895 = vrot.lane.b32.xlu0 %v893, 64
    %v896 = vpop.permute.xlu0 %895
    %v898 = vadd.f32 %v888, %v896
    %v899 = vtanh.pop %v898
    %901 = vrot.lane.b32.xlu0 %v899, 64
    %v902 = vpop.permute.xlu0 %901
    %v904 = vmul.f32 %v886, %v902
    %v905 = vpack.c.bf16 %v904, %v904
    %v907 = vsel %vm512, %v905, 0
    %909 = vmatprep.subr.bf16.mxu0 %v696
    %910 = vmatpush1.bf16.msra.mxu0 %v695
    %911 = vmatprep.subr.bf16.mxu0 %v698
    %912 = vmatpush1.bf16.msra.mxu0 %v697
    %913 = vmatprep.subr.bf16.mxu0 %v700
    %914 = vmatpush1.bf16.msra.mxu0 %v699
    %915 = vmatprep.subr.bf16.mxu0 %v702
    %916 = vmatpush1.bf16.msra.mxu0 %v701
    %917 = vmatprep.subr.bf16.mxu0 0
    %918 = vmatpush1.bf16.msra.mxu0 0
    %919 = vmatprep.subr.bf16.mxu0 0
    %920 = vmatpush1.bf16.msra.mxu0 0
    %921 = vmatprep.subr.bf16.mxu0 0
    %922 = vmatpush1.bf16.msra.mxu0 0
    %923 = vmatprep.subr.bf16.mxu0 0
    %924 = vmatpush1.bf16.msra.mxu0 0
    %925 = vmatprep.subr.bf16.mxu0 0
    %926 = vmatpush1.bf16.msra.mxu0 0
    %927 = vmatprep.subr.bf16.mxu0 0
    %928 = vmatpush1.bf16.msra.mxu0 0
    %929 = vmatprep.subr.bf16.mxu0 0
    %930 = vmatpush1.bf16.msra.mxu0 0
    %931 = vmatprep.subr.bf16.mxu0 0
    %932 = vmatpush1.bf16.msra.mxu0 0
    %933 = vmatprep.subr.bf16.mxu0 0
    %934 = vmatpush1.bf16.msra.mxu0 0
    %935 = vmatprep.subr.bf16.mxu0 0
    %936 = vmatpush1.bf16.msra.mxu0 0
    %937 = vmatprep.subr.bf16.mxu0 0
    %938 = vmatpush1.bf16.msra.mxu0 0
    %939 = vmatprep.subr.bf16.mxu0 0
    %940 = vmatpush1.bf16.msra.mxu0 0
    %941 = vmatprep.mubr.bf16.mxu0 0
    %942 = vmatmul.mubr.bf16.gmra.mrb[0].mxu0 %v907
    %v943 = vpop.f32.mrb[0].mxu0
    %v944 = vadd.f32 %v826, %v943
    %v945 = vpop.f32.mrb[0].mxu0
    %v946 = vadd.f32 %v828, %v945
    %v947 = vpop.f32.mrb[0].mxu0
    %v948 = vpop.f32.mrb[0].mxu0
    %949 = vdwg.mxu0
    %v950 = vadd.f32 %v944, %v271
    %v951 = vadd.f32 %v946, %v275
    %v952 = vxor.u32 %v950, 2147483648
    %v953 = vxor.u32 %v951, 2147483648
    %v954 = vmul.f32 %v952, 1.442695
    %v955 = vpow.pop %v954
    %v956 = vmul.f32 %v953, 1.442695
    %v957 = vpow.pop %v956
    %v958 = vadd.f32 %v955, 1.0
    %v959 = vadd.f32 %v957, 1.0
    %v960 = vrcp.pop %v958
    %v961 = vmul.f32 1.0, %v960
    %v962 = vrcp.pop %v959
    %v963 = vmul.f32 1.0, %v962
    %v964 = vtanh.pop %v951
    %v965 = vmul.f32 %v961, %v780
    %967 = vrot.lane.b32.xlu0 %v964, 64
    %v968 = vpop.permute.xlu0 %967
    %v970 = vmul.f32 %v961, %v968
    %972 = vrot.lane.b32.xlu0 %v970, 64
    %v973 = vpop.permute.xlu0 %972
    %v975 = vadd.f32 %v965, %v973
    %v976 = vtanh.pop %v975
    %978 = vrot.lane.b32.xlu0 %v976, 64
    %v979 = vpop.permute.xlu0 %978
    %v981 = vmul.f32 %v963, %v979
    %v982 = vpack.c.bf16 %v981, %v981
    %v984 = vsel %vm512, %v982, 0
    %986 = vmatprep.subr.bf16.mxu0 %v497
    %987 = vmatpush1.bf16.msra.mxu0 %v496
    %988 = vmatprep.subr.bf16.mxu0 %v499
    %989 = vmatpush1.bf16.msra.mxu0 %v498
    %990 = vmatprep.subr.bf16.mxu0 %v501
    %991 = vmatpush1.bf16.msra.mxu0 %v500
    %992 = vmatprep.subr.bf16.mxu0 %v503
    %993 = vmatpush1.bf16.msra.mxu0 %v502
    %994 = vmatprep.subr.bf16.mxu0 0
    %995 = vmatpush1.bf16.msra.mxu0 0
    %996 = vmatprep.subr.bf16.mxu0 0
    %997 = vmatpush1.bf16.msra.mxu0 0
    %998 = vmatprep.subr.bf16.mxu0 0
    %999 = vmatpush1.bf16.msra.mxu0 0
    %1000 = vmatprep.subr.bf16.mxu0 0
    %1001 = vmatpush1.bf16.msra.mxu0 0
    %1002 = vmatprep.subr.bf16.mxu0 0
    %1003 = vmatpush1.bf16.msra.mxu0 0
    %1004 = vmatprep.subr.bf16.mxu0 0
    %1005 = vmatpush1.bf16.msra.mxu0 0
    %1006 = vmatprep.subr.bf16.mxu0 0
    %1007 = vmatpush1.bf16.msra.mxu0 0
    %1008 = vmatprep.subr.bf16.mxu0 0
    %1009 = vmatpush1.bf16.msra.mxu0 0
    %1010 = vmatprep.subr.bf16.mxu0 0
    %1011 = vmatpush1.bf16.msra.mxu0 0
    %1012 = vmatprep.subr.bf16.mxu0 0
    %1013 = vmatpush1.bf16.msra.mxu0 0
    %1014 = vmatprep.subr.bf16.mxu0 0
    %1015 = vmatpush1.bf16.msra.mxu0 0
    %1016 = vmatprep.subr.bf16.mxu0 0
    %1017 = vmatpush1.bf16.msra.mxu0 0
    %1018 = vmatprep.mubr.bf16.mxu0 0
    %1019 = vmatmul.mubr.bf16.gmra.mrb[0].mxu0 %v984
    %v1020 = vpop.f32.mrb[0].mxu0
    %v1021 = vadd.f32 0.0, %v1020
    %v1022 = vpop.f32.mrb[0].mxu0
    %v1023 = vadd.f32 0.0, %v1022
    %v1024 = vpop.f32.mrb[0].mxu0
    %v1025 = vpop.f32.mrb[0].mxu0
    %1026 = vdwg.mxu0
    %1027 = vmatprep.subr.bf16.mxu0 %v582
    %1028 = vmatpush1.bf16.msra.mxu0 %v581
    %1029 = vmatprep.subr.bf16.mxu0 %v584
    %1030 = vmatpush1.bf16.msra.mxu0 %v583
    %1031 = vmatprep.subr.bf16.mxu0 %v586
    %1032 = vmatpush1.bf16.msra.mxu0 %v585
    %1033 = vmatprep.subr.bf16.mxu0 %v588
    %1034 = vmatpush1.bf16.msra.mxu0 %v587
    %1035 = vmatprep.subr.bf16.mxu0 0
    %1036 = vmatpush1.bf16.msra.mxu0 0
    %1037 = vmatprep.subr.bf16.mxu0 0
    %1038 = vmatpush1.bf16.msra.mxu0 0
    %1039 = vmatprep.subr.bf16.mxu0 0
    %1040 = vmatpush1.bf16.msra.mxu0 0
    %1041 = vmatprep.subr.bf16.mxu0 0
    %1042 = vmatpush1.bf16.msra.mxu0 0
    %1043 = vmatprep.subr.bf16.mxu0 0
    %1044 = vmatpush1.bf16.msra.mxu0 0
    %1045 = vmatprep.subr.bf16.mxu0 0
    %1046 = vmatpush1.bf16.msra.mxu0 0
    %1047 = vmatprep.subr.bf16.mxu0 0
    %1048 = vmatpush1.bf16.msra.mxu0 0
    %1049 = vmatprep.subr.bf16.mxu0 0
    %1050 = vmatpush1.bf16.msra.mxu0 0
    %1051 = vmatprep.subr.bf16.mxu0 0
    %1052 = vmatpush1.bf16.msra.mxu0 0
    %1053 = vmatprep.subr.bf16.mxu0 0
    %1054 = vmatpush1.bf16.msra.mxu0 0
    %1055 = vmatprep.subr.bf16.mxu0 0
    %1056 = vmatpush1.bf16.msra.mxu0 0
    %1057 = vmatprep.subr.bf16.mxu0 0
    %1058 = vmatpush1.bf16.msra.mxu0 0
    %1059 = vmatprep.mubr.bf16.mxu0 0
    %1060 = vmatmul.mubr.bf16.gmra.mrb[0].mxu0 %v907
    %v1061 = vpop.f32.mrb[0].mxu0
    %v1062 = vadd.f32 0.0, %v1061
    %v1063 = vpop.f32.mrb[0].mxu0
    %v1064 = vadd.f32 0.0, %v1063
    %v1065 = vpop.f32.mrb[0].mxu0
    %v1066 = vpop.f32.mrb[0].mxu0
    %1067 = vdwg.mxu0
    %v1068 = vadd.f32 %v460, %v1062
    %v1069 = vadd.f32 %v461, %v1064
    %v1070 = vxor.u32 %v1068, 2147483648
    %v1071 = vxor.u32 %v1069, 2147483648
    %v1072 = vmul.f32 %v1070, 1.442695
    %v1073 = vpow.pop %v1072
    %v1074 = vmul.f32 %v1071, 1.442695
    %v1075 = vpow.pop %v1074
    %v1076 = vadd.f32 %v1073, 1.0
    %v1077 = vadd.f32 %v1075, 1.0
    %v1078 = vrcp.pop %v1076
    %v1079 = vmul.f32 1.0, %v1078
    %v1080 = vrcp.pop %v1077
    %v1081 = vmul.f32 1.0, %v1080
    %v1082 = vtanh.pop %v1069
    %v1083 = vmul.f32 %v1079, %v898
    %1085 = vrot.lane.b32.xlu0 %v1082, 64
    %v1086 = vpop.permute.xlu0 %1085
    %v1088 = vmul.f32 %v1079, %v1086
    %1090 = vrot.lane.b32.xlu0 %v1088, 64
    %v1091 = vpop.permute.xlu0 %1090
    %v1093 = vadd.f32 %v1083, %v1091
    %v1094 = vtanh.pop %v1093
    %1096 = vrot.lane.b32.xlu0 %v1094, 64
    %v1097 = vpop.permute.xlu0 %1096
    %v1099 = vmul.f32 %v1081, %v1097
    %v1100 = vpack.c.bf16 %v1099, %v1099
    %v1102 = vsel %vm512, %v1100, 0
    %1104 = vmatprep.subr.bf16.mxu0 %v696
    %1105 = vmatpush1.bf16.msra.mxu0 %v695
    %1106 = vmatprep.subr.bf16.mxu0 %v698
    %1107 = vmatpush1.bf16.msra.mxu0 %v697
    %1108 = vmatprep.subr.bf16.mxu0 %v700
    %1109 = vmatpush1.bf16.msra.mxu0 %v699
    %1110 = vmatprep.subr.bf16.mxu0 %v702
    %1111 = vmatpush1.bf16.msra.mxu0 %v701
    %1112 = vmatprep.subr.bf16.mxu0 0
    %1113 = vmatpush1.bf16.msra.mxu0 0
    %1114 = vmatprep.subr.bf16.mxu0 0
    %1115 = vmatpush1.bf16.msra.mxu0 0
    %1116 = vmatprep.subr.bf16.mxu0 0
    %1117 = vmatpush1.bf16.msra.mxu0 0
    %1118 = vmatprep.subr.bf16.mxu0 0
    %1119 = vmatpush1.bf16.msra.mxu0 0
    %1120 = vmatprep.subr.bf16.mxu0 0
    %1121 = vmatpush1.bf16.msra.mxu0 0
    %1122 = vmatprep.subr.bf16.mxu0 0
    %1123 = vmatpush1.bf16.msra.mxu0 0
    %1124 = vmatprep.subr.bf16.mxu0 0
    %1125 = vmatpush1.bf16.msra.mxu0 0
    %1126 = vmatprep.subr.bf16.mxu0 0
    %1127 = vmatpush1.bf16.msra.mxu0 0
    %1128 = vmatprep.subr.bf16.mxu0 0
    %1129 = vmatpush1.bf16.msra.mxu0 0
    %1130 = vmatprep.subr.bf16.mxu0 0
    %1131 = vmatpush1.bf16.msra.mxu0 0
    %1132 = vmatprep.subr.bf16.mxu0 0
    %1133 = vmatpush1.bf16.msra.mxu0 0
    %1134 = vmatprep.subr.bf16.mxu0 0
    %1135 = vmatpush1.bf16.msra.mxu0 0
    %1136 = vmatprep.mubr.bf16.mxu0 0
    %1137 = vmatmul.mubr.bf16.gmra.mrb[0].mxu0 %v1102
    %v1138 = vpop.f32.mrb[0].mxu0
    %v1139 = vadd.f32 %v1021, %v1138
    %v1140 = vpop.f32.mrb[0].mxu0
    %v1141 = vadd.f32 %v1023, %v1140
    %v1142 = vpop.f32.mrb[0].mxu0
    %v1143 = vpop.f32.mrb[0].mxu0
    %1144 = vdwg.mxu0
    %v1145 = vadd.f32 %v1139, %v271
    %v1146 = vadd.f32 %v1141, %v275
    %v1147 = vxor.u32 %v1145, 2147483648
    %v1148 = vxor.u32 %v1146, 2147483648
    %v1149 = vmul.f32 %v1147, 1.442695
    %v1150 = vpow.pop %v1149
    %v1151 = vmul.f32 %v1148, 1.442695
    %v1152 = vpow.pop %v1151
    %v1153 = vadd.f32 %v1150, 1.0
    %v1154 = vadd.f32 %v1152, 1.0
    %v1155 = vrcp.pop %v1153
    %v1156 = vmul.f32 1.0, %v1155
    %v1157 = vrcp.pop %v1154
    %v1158 = vmul.f32 1.0, %v1157
    %v1159 = vtanh.pop %v1146
    %v1160 = vmul.f32 %v1156, %v975
    %1162 = vrot.lane.b32.xlu0 %v1159, 64
    %v1163 = vpop.permute.xlu0 %1162
    %v1165 = vmul.f32 %v1156, %v1163
    %1167 = vrot.lane.b32.xlu0 %v1165, 64
    %v1168 = vpop.permute.xlu0 %1167
    %v1170 = vadd.f32 %v1160, %v1168
    %v1171 = vtanh.pop %v1170
    %1173 = vrot.lane.b32.xlu0 %v1171, 64
    %v1174 = vpop.permute.xlu0 %1173
    %v1176 = vmul.f32 %v1158, %v1174
    %v1177 = vpack.c.bf16 %v1176, %v1176
    %v1179 = vsel %vm512, %v1177, 0
    %1181 = vmatprep.subr.bf16.mxu0 %v497
    %1182 = vmatpush1.bf16.msra.mxu0 %v496
    %1183 = vmatprep.subr.bf16.mxu0 %v499
    %1184 = vmatpush1.bf16.msra.mxu0 %v498
    %1185 = vmatprep.subr.bf16.mxu0 %v501
    %1186 = vmatpush1.bf16.msra.mxu0 %v500
    %1187 = vmatprep.subr.bf16.mxu0 %v503
    %1188 = vmatpush1.bf16.msra.mxu0 %v502
    %1189 = vmatprep.subr.bf16.mxu0 0
    %1190 = vmatpush1.bf16.msra.mxu0 0
    %1191 = vmatprep.subr.bf16.mxu0 0
    %1192 = vmatpush1.bf16.msra.mxu0 0
    %1193 = vmatprep.subr.bf16.mxu0 0
    %1194 = vmatpush1.bf16.msra.mxu0 0
    %1195 = vmatprep.subr.bf16.mxu0 0
    %1196 = vmatpush1.bf16.msra.mxu0 0
    %1197 = vmatprep.subr.bf16.mxu0 0
    %1198 = vmatpush1.bf16.msra.mxu0 0
    %1199 = vmatprep.subr.bf16.mxu0 0
    %1200 = vmatpush1.bf16.msra.mxu0 0
    %1201 = vmatprep.subr.bf16.mxu0 0
    %1202 = vmatpush1.bf16.msra.mxu0 0
    %1203 = vmatprep.subr.bf16.mxu0 0
    %1204 = vmatpush1.bf16.msra.mxu0 0
    %1205 = vmatprep.subr.bf16.mxu0 0
    %1206 = vmatpush1.bf16.msra.mxu0 0
    %1207 = vmatprep.subr.bf16.mxu0 0
    %1208 = vmatpush1.bf16.msra.mxu0 0
    %1209 = vmatprep.subr.bf16.mxu0 0
    %1210 = vmatpush1.bf16.msra.mxu0 0
    %1211 = vmatprep.subr.bf16.mxu0 0
    %1212 = vmatpush1.bf16.msra.mxu0 0
    %1213 = vmatprep.mubr.bf16.mxu0 0
    %1214 = vmatmul.mubr.bf16.gmra.mrb[0].mxu0 %v1179
    %v1215 = vpop.f32.mrb[0].mxu0
    %v1216 = vadd.f32 0.0, %v1215
    %v1217 = vpop.f32.mrb[0].mxu0
    %v1218 = vadd.f32 0.0, %v1217
    %v1219 = vpop.f32.mrb[0].mxu0
    %v1220 = vpop.f32.mrb[0].mxu0
    %1221 = vdwg.mxu0
    %1222 = vmatprep.subr.bf16.mxu0 %v582
    %1223 = vmatpush1.bf16.msra.mxu0 %v581
    %1224 = vmatprep.subr.bf16.mxu0 %v584
    %1225 = vmatpush1.bf16.msra.mxu0 %v583
    %1226 = vmatprep.subr.bf16.mxu0 %v586
    %1227 = vmatpush1.bf16.msra.mxu0 %v585
    %1228 = vmatprep.subr.bf16.mxu0 %v588
    %1229 = vmatpush1.bf16.msra.mxu0 %v587
    %1230 = vmatprep.subr.bf16.mxu0 0
    %1231 = vmatpush1.bf16.msra.mxu0 0
    %1232 = vmatprep.subr.bf16.mxu0 0
    %1233 = vmatpush1.bf16.msra.mxu0 0
    %1234 = vmatprep.subr.bf16.mxu0 0
    %1235 = vmatpush1.bf16.msra.mxu0 0
    %1236 = vmatprep.subr.bf16.mxu0 0
    %1237 = vmatpush1.bf16.msra.mxu0 0
    %1238 = vmatprep.subr.bf16.mxu0 0
    %1239 = vmatpush1.bf16.msra.mxu0 0
    %1240 = vmatprep.subr.bf16.mxu0 0
    %1241 = vmatpush1.bf16.msra.mxu0 0
    %1242 = vmatprep.subr.bf16.mxu0 0
    %1243 = vmatpush1.bf16.msra.mxu0 0
    %1244 = vmatprep.subr.bf16.mxu0 0
    %1245 = vmatpush1.bf16.msra.mxu0 0
    %1246 = vmatprep.subr.bf16.mxu0 0
    %1247 = vmatpush1.bf16.msra.mxu0 0
    %1248 = vmatprep.subr.bf16.mxu0 0
    %1249 = vmatpush1.bf16.msra.mxu0 0
    %1250 = vmatprep.subr.bf16.mxu0 0
    %1251 = vmatpush1.bf16.msra.mxu0 0
    %1252 = vmatprep.subr.bf16.mxu0 0
    %1253 = vmatpush1.bf16.msra.mxu0 0
    %1254 = vmatprep.mubr.bf16.mxu0 0
    %1255 = vmatmul.mubr.bf16.gmra.mrb[0].mxu0 %v1102
    %v1256 = vpop.f32.mrb[0].mxu0
    %v1257 = vadd.f32 0.0, %v1256
    %v1258 = vpop.f32.mrb[0].mxu0
    %v1259 = vadd.f32 0.0, %v1258
    %v1260 = vpop.f32.mrb[0].mxu0
    %v1261 = vpop.f32.mrb[0].mxu0
    %1262 = vdwg.mxu0
    %v1263 = vadd.f32 %v462, %v1257
    %v1264 = vadd.f32 %v463, %v1259
    %v1265 = vxor.u32 %v1263, 2147483648
    %v1266 = vxor.u32 %v1264, 2147483648
    %v1267 = vmul.f32 %v1265, 1.442695
    %v1268 = vpow.pop %v1267
    %v1269 = vmul.f32 %v1266, 1.442695
    %v1270 = vpow.pop %v1269
    %v1271 = vadd.f32 %v1268, 1.0
    %v1272 = vadd.f32 %v1270, 1.0
    %v1273 = vrcp.pop %v1271
    %v1274 = vmul.f32 1.0, %v1273
    %v1275 = vrcp.pop %v1272
    %v1276 = vmul.f32 1.0, %v1275
    %v1277 = vtanh.pop %v1264
    %v1278 = vmul.f32 %v1274, %v1093
    %1280 = vrot.lane.b32.xlu0 %v1277, 64
    %v1281 = vpop.permute.xlu0 %1280
    %v1283 = vmul.f32 %v1274, %v1281
    %1285 = vrot.lane.b32.xlu0 %v1283, 64
    %v1286 = vpop.permute.xlu0 %1285
    %v1288 = vadd.f32 %v1278, %v1286
    %v1289 = vtanh.pop %v1288
    %1291 = vrot.lane.b32.xlu0 %v1289, 64
    %v1292 = vpop.permute.xlu0 %1291
    %v1294 = vmul.f32 %v1276, %v1292
    %v1295 = vpack.c.bf16 %v1294, %v1294
    %v1297 = vsel %vm512, %v1295, 0
    %1299 = vmatprep.subr.bf16.mxu0 %v696
    %1300 = vmatpush1.bf16.msra.mxu0 %v695
    %1301 = vmatprep.subr.bf16.mxu0 %v698
    %1302 = vmatpush1.bf16.msra.mxu0 %v697
    %1303 = vmatprep.subr.bf16.mxu0 %v700
    %1304 = vmatpush1.bf16.msra.mxu0 %v699
    %1305 = vmatprep.subr.bf16.mxu0 %v702
    %1306 = vmatpush1.bf16.msra.mxu0 %v701
    %1307 = vmatprep.subr.bf16.mxu0 0
    %1308 = vmatpush1.bf16.msra.mxu0 0
    %1309 = vmatprep.subr.bf16.mxu0 0
    %1310 = vmatpush1.bf16.msra.mxu0 0
    %1311 = vmatprep.subr.bf16.mxu0 0
    %1312 = vmatpush1.bf16.msra.mxu0 0
    %1313 = vmatprep.subr.bf16.mxu0 0
    %1314 = vmatpush1.bf16.msra.mxu0 0
    %1315 = vmatprep.subr.bf16.mxu0 0
    %1316 = vmatpush1.bf16.msra.mxu0 0
    %1317 = vmatprep.subr.bf16.mxu0 0
    %1318 = vmatpush1.bf16.msra.mxu0 0
    %1319 = vmatprep.subr.bf16.mxu0 0
    %1320 = vmatpush1.bf16.msra.mxu0 0
    %1321 = vmatprep.subr.bf16.mxu0 0
    %1322 = vmatpush1.bf16.msra.mxu0 0
    %1323 = vmatprep.subr.bf16.mxu0 0
    %1324 = vmatpush1.bf16.msra.mxu0 0
    %1325 = vmatprep.subr.bf16.mxu0 0
    %1326 = vmatpush1.bf16.msra.mxu0 0
    %1327 = vmatprep.subr.bf16.mxu0 0
    %1328 = vmatpush1.bf16.msra.mxu0 0
    %1329 = vmatprep.subr.bf16.mxu0 0
    %1330 = vmatpush1.bf16.msra.mxu0 0
    %1331 = vmatprep.mubr.bf16.mxu0 0
    %1332 = vmatmul.mubr.bf16.gmra.mrb[0].mxu0 %v1297
    %v1333 = vpop.f32.mrb[0].mxu0
    %v1334 = vadd.f32 %v1216, %v1333
    %v1335 = vpop.f32.mrb[0].mxu0
    %v1336 = vadd.f32 %v1218, %v1335
    %v1337 = vpop.f32.mrb[0].mxu0
    %v1338 = vpop.f32.mrb[0].mxu0
    %1339 = vdwg.mxu0
    %v1340 = vadd.f32 %v1334, %v271
    %v1341 = vadd.f32 %v1336, %v275
    %v1342 = vxor.u32 %v1340, 2147483648
    %v1343 = vxor.u32 %v1341, 2147483648
    %v1344 = vmul.f32 %v1342, 1.442695
    %v1345 = vpow.pop %v1344
    %v1346 = vmul.f32 %v1343, 1.442695
    %v1347 = vpow.pop %v1346
    %v1348 = vadd.f32 %v1345, 1.0
    %v1349 = vadd.f32 %v1347, 1.0
    %v1350 = vrcp.pop %v1348
    %v1351 = vmul.f32 1.0, %v1350
    %v1352 = vrcp.pop %v1349
    %v1353 = vmul.f32 1.0, %v1352
    %v1354 = vtanh.pop %v1341
    %v1355 = vmul.f32 %v1351, %v1170
    %1357 = vrot.lane.b32.xlu0 %v1354, 64
    %v1358 = vpop.permute.xlu0 %1357
    %v1360 = vmul.f32 %v1351, %v1358
    %1362 = vrot.lane.b32.xlu0 %v1360, 64
    %v1363 = vpop.permute.xlu0 %1362
    %v1365 = vadd.f32 %v1355, %v1363
    %v1366 = vtanh.pop %v1365
    %1368 = vrot.lane.b32.xlu0 %v1366, 64
    %v1369 = vpop.permute.xlu0 %1368
    %v1371 = vmul.f32 %v1353, %v1369
    %v1372 = vpack.c.bf16 %v1371, %v1371
    %v1374 = vsel %vm512, %v1372, 0
    %1376 = vmatprep.subr.bf16.mxu0 %v497
    %1377 = vmatpush1.bf16.msra.mxu0 %v496
    %1378 = vmatprep.subr.bf16.mxu0 %v499
    %1379 = vmatpush1.bf16.msra.mxu0 %v498
    %1380 = vmatprep.subr.bf16.mxu0 %v501
    %1381 = vmatpush1.bf16.msra.mxu0 %v500
    %1382 = vmatprep.subr.bf16.mxu0 %v503
    %1383 = vmatpush1.bf16.msra.mxu0 %v502
    %1384 = vmatprep.subr.bf16.mxu0 0
    %1385 = vmatpush1.bf16.msra.mxu0 0
    %1386 = vmatprep.subr.bf16.mxu0 0
    %1387 = vmatpush1.bf16.msra.mxu0 0
    %1388 = vmatprep.subr.bf16.mxu0 0
    %1389 = vmatpush1.bf16.msra.mxu0 0
    %1390 = vmatprep.subr.bf16.mxu0 0
    %1391 = vmatpush1.bf16.msra.mxu0 0
    %1392 = vmatprep.subr.bf16.mxu0 0
    %1393 = vmatpush1.bf16.msra.mxu0 0
    %1394 = vmatprep.subr.bf16.mxu0 0
    %1395 = vmatpush1.bf16.msra.mxu0 0
    %1396 = vmatprep.subr.bf16.mxu0 0
    %1397 = vmatpush1.bf16.msra.mxu0 0
    %1398 = vmatprep.subr.bf16.mxu0 0
    %1399 = vmatpush1.bf16.msra.mxu0 0
    %1400 = vmatprep.subr.bf16.mxu0 0
    %1401 = vmatpush1.bf16.msra.mxu0 0
    %1402 = vmatprep.subr.bf16.mxu0 0
    %1403 = vmatpush1.bf16.msra.mxu0 0
    %1404 = vmatprep.subr.bf16.mxu0 0
    %1405 = vmatpush1.bf16.msra.mxu0 0
    %1406 = vmatprep.subr.bf16.mxu0 0
    %1407 = vmatpush1.bf16.msra.mxu0 0
    %1408 = vmatprep.mubr.bf16.mxu0 0
    %1409 = vmatmul.mubr.bf16.gmra.mrb[0].mxu0 %v1374
    %v1410 = vpop.f32.mrb[0].mxu0
    %v1411 = vadd.f32 0.0, %v1410
    %v1412 = vpop.f32.mrb[0].mxu0
    %v1413 = vadd.f32 0.0, %v1412
    %v1414 = vpop.f32.mrb[0].mxu0
    %v1415 = vpop.f32.mrb[0].mxu0
    %1416 = vdwg.mxu0
    %1417 = vmatprep.subr.bf16.mxu0 %v582
    %1418 = vmatpush1.bf16.msra.mxu0 %v581
    %1419 = vmatprep.subr.bf16.mxu0 %v584
    %1420 = vmatpush1.bf16.msra.mxu0 %v583
    %1421 = vmatprep.subr.bf16.mxu0 %v586
    %1422 = vmatpush1.bf16.msra.mxu0 %v585
    %1423 = vmatprep.subr.bf16.mxu0 %v588
    %1424 = vmatpush1.bf16.msra.mxu0 %v587
    %1425 = vmatprep.subr.bf16.mxu0 0
    %1426 = vmatpush1.bf16.msra.mxu0 0
    %1427 = vmatprep.subr.bf16.mxu0 0
    %1428 = vmatpush1.bf16.msra.mxu0 0
    %1429 = vmatprep.subr.bf16.mxu0 0
    %1430 = vmatpush1.bf16.msra.mxu0 0
    %1431 = vmatprep.subr.bf16.mxu0 0
    %1432 = vmatpush1.bf16.msra.mxu0 0
    %1433 = vmatprep.subr.bf16.mxu0 0
    %1434 = vmatpush1.bf16.msra.mxu0 0
    %1435 = vmatprep.subr.bf16.mxu0 0
    %1436 = vmatpush1.bf16.msra.mxu0 0
    %1437 = vmatprep.subr.bf16.mxu0 0
    %1438 = vmatpush1.bf16.msra.mxu0 0
    %1439 = vmatprep.subr.bf16.mxu0 0
    %1440 = vmatpush1.bf16.msra.mxu0 0
    %1441 = vmatprep.subr.bf16.mxu0 0
    %1442 = vmatpush1.bf16.msra.mxu0 0
    %1443 = vmatprep.subr.bf16.mxu0 0
    %1444 = vmatpush1.bf16.msra.mxu0 0
    %1445 = vmatprep.subr.bf16.mxu0 0
    %1446 = vmatpush1.bf16.msra.mxu0 0
    %1447 = vmatprep.subr.bf16.mxu0 0
    %1448 = vmatpush1.bf16.msra.mxu0 0
    %1449 = vmatprep.mubr.bf16.mxu0 0
    %1450 = vmatmul.mubr.bf16.gmra.mrb[0].mxu0 %v1297
    %v1451 = vpop.f32.mrb[0].mxu0
    %v1452 = vadd.f32 0.0, %v1451
    %v1453 = vpop.f32.mrb[0].mxu0
    %v1454 = vadd.f32 0.0, %v1453
    %v1455 = vpop.f32.mrb[0].mxu0
    %v1456 = vpop.f32.mrb[0].mxu0
    %1457 = vdwg.mxu0
    %v1458 = vadd.f32 %v464, %v1452
    %v1459 = vadd.f32 %v465, %v1454
    %v1460 = vxor.u32 %v1458, 2147483648
    %v1461 = vxor.u32 %v1459, 2147483648
    %v1462 = vmul.f32 %v1460, 1.442695
    %v1463 = vpow.pop %v1462
    %v1464 = vmul.f32 %v1461, 1.442695
    %v1465 = vpow.pop %v1464
    %v1466 = vadd.f32 %v1463, 1.0
    %v1467 = vadd.f32 %v1465, 1.0
    %v1468 = vrcp.pop %v1466
    %v1469 = vmul.f32 1.0, %v1468
    %v1470 = vrcp.pop %v1467
    %v1471 = vmul.f32 1.0, %v1470
    %v1472 = vtanh.pop %v1459
    %v1473 = vmul.f32 %v1469, %v1288
    %1475 = vrot.lane.b32.xlu0 %v1472, 64
    %v1476 = vpop.permute.xlu0 %1475
    %v1478 = vmul.f32 %v1469, %v1476
    %1480 = vrot.lane.b32.xlu0 %v1478, 64
    %v1481 = vpop.permute.xlu0 %1480
    %v1483 = vadd.f32 %v1473, %v1481
    %v1484 = vtanh.pop %v1483
    %1486 = vrot.lane.b32.xlu0 %v1484, 64
    %v1487 = vpop.permute.xlu0 %1486
    %v1489 = vmul.f32 %v1471, %v1487
    %v1490 = vpack.c.bf16 %v1489, %v1489
    %v1492 = vsel %vm512, %v1490, 0
    %1494 = vmatprep.subr.bf16.mxu0 %v696
    %1495 = vmatpush1.bf16.msra.mxu0 %v695
    %1496 = vmatprep.subr.bf16.mxu0 %v698
    %1497 = vmatpush1.bf16.msra.mxu0 %v697
    %1498 = vmatprep.subr.bf16.mxu0 %v700
    %1499 = vmatpush1.bf16.msra.mxu0 %v699
    %1500 = vmatprep.subr.bf16.mxu0 %v702
    %1501 = vmatpush1.bf16.msra.mxu0 %v701
    %1502 = vmatprep.subr.bf16.mxu0 0
    %1503 = vmatpush1.bf16.msra.mxu0 0
    %1504 = vmatprep.subr.bf16.mxu0 0
    %1505 = vmatpush1.bf16.msra.mxu0 0
    %1506 = vmatprep.subr.bf16.mxu0 0
    %1507 = vmatpush1.bf16.msra.mxu0 0
    %1508 = vmatprep.subr.bf16.mxu0 0
    %1509 = vmatpush1.bf16.msra.mxu0 0
    %1510 = vmatprep.subr.bf16.mxu0 0
    %1511 = vmatpush1.bf16.msra.mxu0 0
    %1512 = vmatprep.subr.bf16.mxu0 0
    %1513 = vmatpush1.bf16.msra.mxu0 0
    %1514 = vmatprep.subr.bf16.mxu0 0
    %1515 = vmatpush1.bf16.msra.mxu0 0
    %1516 = vmatprep.subr.bf16.mxu0 0
    %1517 = vmatpush1.bf16.msra.mxu0 0
    %1518 = vmatprep.subr.bf16.mxu0 0
    %1519 = vmatpush1.bf16.msra.mxu0 0
    %1520 = vmatprep.subr.bf16.mxu0 0
    %1521 = vmatpush1.bf16.msra.mxu0 0
    %1522 = vmatprep.subr.bf16.mxu0 0
    %1523 = vmatpush1.bf16.msra.mxu0 0
    %1524 = vmatprep.subr.bf16.mxu0 0
    %1525 = vmatpush1.bf16.msra.mxu0 0
    %1526 = vmatprep.mubr.bf16.mxu0 0
    %1527 = vmatmul.mubr.bf16.gmra.mrb[0].mxu0 %v1492
    %v1528 = vpop.f32.mrb[0].mxu0
    %v1529 = vadd.f32 %v1411, %v1528
    %v1530 = vpop.f32.mrb[0].mxu0
    %v1531 = vadd.f32 %v1413, %v1530
    %v1532 = vpop.f32.mrb[0].mxu0
    %v1533 = vpop.f32.mrb[0].mxu0
    %1534 = vdwg.mxu0
    %v1535 = vadd.f32 %v1529, %v271
    %v1536 = vadd.f32 %v1531, %v275
    %v1537 = vxor.u32 %v1535, 2147483648
    %v1538 = vxor.u32 %v1536, 2147483648
    %v1539 = vmul.f32 %v1537, 1.442695
    %v1540 = vpow.pop %v1539
    %v1541 = vmul.f32 %v1538, 1.442695
    %v1542 = vpow.pop %v1541
    %v1543 = vadd.f32 %v1540, 1.0
    %v1544 = vadd.f32 %v1542, 1.0
    %v1545 = vrcp.pop %v1543
    %v1546 = vmul.f32 1.0, %v1545
    %v1547 = vrcp.pop %v1544
    %v1548 = vmul.f32 1.0, %v1547
    %v1549 = vtanh.pop %v1536
    %v1550 = vmul.f32 %v1546, %v1365
    %1552 = vrot.lane.b32.xlu0 %v1549, 64
    %v1553 = vpop.permute.xlu0 %1552
    %v1555 = vmul.f32 %v1546, %v1553
    %1557 = vrot.lane.b32.xlu0 %v1555, 64
    %v1558 = vpop.permute.xlu0 %1557
    %v1560 = vadd.f32 %v1550, %v1558
    %v1561 = vtanh.pop %v1560
    %1563 = vrot.lane.b32.xlu0 %v1561, 64
    %v1564 = vpop.permute.xlu0 %1563
    %v1566 = vmul.f32 %v1548, %v1564
    %v1567 = vpack.c.bf16 %v1566, %v1566
    %v1569 = vsel %vm512, %v1567, 0
    %1571 = vmatprep.subr.bf16.mxu0 %v497
    %1572 = vmatpush1.bf16.msra.mxu0 %v496
    %1573 = vmatprep.subr.bf16.mxu0 %v499
    %1574 = vmatpush1.bf16.msra.mxu0 %v498
    %1575 = vmatprep.subr.bf16.mxu0 %v501
    %1576 = vmatpush1.bf16.msra.mxu0 %v500
    %1577 = vmatprep.subr.bf16.mxu0 %v503
    %1578 = vmatpush1.bf16.msra.mxu0 %v502
    %1579 = vmatprep.subr.bf16.mxu0 0
    %1580 = vmatpush1.bf16.msra.mxu0 0
    %1581 = vmatprep.subr.bf16.mxu0 0
    %1582 = vmatpush1.bf16.msra.mxu0 0
    %1583 = vmatprep.subr.bf16.mxu0 0
    %1584 = vmatpush1.bf16.msra.mxu0 0
    %1585 = vmatprep.subr.bf16.mxu0 0
    %1586 = vmatpush1.bf16.msra.mxu0 0
    %1587 = vmatprep.subr.bf16.mxu0 0
    %1588 = vmatpush1.bf16.msra.mxu0 0
    %1589 = vmatprep.subr.bf16.mxu0 0
    %1590 = vmatpush1.bf16.msra.mxu0 0
    %1591 = vmatprep.subr.bf16.mxu0 0
    %1592 = vmatpush1.bf16.msra.mxu0 0
    %1593 = vmatprep.subr.bf16.mxu0 0
    %1594 = vmatpush1.bf16.msra.mxu0 0
    %1595 = vmatprep.subr.bf16.mxu0 0
    %1596 = vmatpush1.bf16.msra.mxu0 0
    %1597 = vmatprep.subr.bf16.mxu0 0
    %1598 = vmatpush1.bf16.msra.mxu0 0
    %1599 = vmatprep.subr.bf16.mxu0 0
    %1600 = vmatpush1.bf16.msra.mxu0 0
    %1601 = vmatprep.subr.bf16.mxu0 0
    %1602 = vmatpush1.bf16.msra.mxu0 0
    %1603 = vmatprep.mubr.bf16.mxu0 0
    %1604 = vmatmul.mubr.bf16.gmra.mrb[0].mxu0 %v1569
    %v1605 = vpop.f32.mrb[0].mxu0
    %v1606 = vadd.f32 0.0, %v1605
    %v1607 = vpop.f32.mrb[0].mxu0
    %v1608 = vadd.f32 0.0, %v1607
    %v1609 = vpop.f32.mrb[0].mxu0
    %v1610 = vpop.f32.mrb[0].mxu0
    %1611 = vdwg.mxu0
    %1612 = vmatprep.subr.bf16.mxu0 %v582
    %1613 = vmatpush1.bf16.msra.mxu0 %v581
    %1614 = vmatprep.subr.bf16.mxu0 %v584
    %1615 = vmatpush1.bf16.msra.mxu0 %v583
    %1616 = vmatprep.subr.bf16.mxu0 %v586
    %1617 = vmatpush1.bf16.msra.mxu0 %v585
    %1618 = vmatprep.subr.bf16.mxu0 %v588
    %1619 = vmatpush1.bf16.msra.mxu0 %v587
    %1620 = vmatprep.subr.bf16.mxu0 0
    %1621 = vmatpush1.bf16.msra.mxu0 0
    %1622 = vmatprep.subr.bf16.mxu0 0
    %1623 = vmatpush1.bf16.msra.mxu0 0
    %1624 = vmatprep.subr.bf16.mxu0 0
    %1625 = vmatpush1.bf16.msra.mxu0 0
    %1626 = vmatprep.subr.bf16.mxu0 0
    %1627 = vmatpush1.bf16.msra.mxu0 0
    %1628 = vmatprep.subr.bf16.mxu0 0
    %1629 = vmatpush1.bf16.msra.mxu0 0
    %1630 = vmatprep.subr.bf16.mxu0 0
    %1631 = vmatpush1.bf16.msra.mxu0 0
    %1632 = vmatprep.subr.bf16.mxu0 0
    %1633 = vmatpush1.bf16.msra.mxu0 0
    %1634 = vmatprep.subr.bf16.mxu0 0
    %1635 = vmatpush1.bf16.msra.mxu0 0
    %1636 = vmatprep.subr.bf16.mxu0 0
    %1637 = vmatpush1.bf16.msra.mxu0 0
    %1638 = vmatprep.subr.bf16.mxu0 0
    %1639 = vmatpush1.bf16.msra.mxu0 0
    %1640 = vmatprep.subr.bf16.mxu0 0
    %1641 = vmatpush1.bf16.msra.mxu0 0
    %1642 = vmatprep.subr.bf16.mxu0 0
    %1643 = vmatpush1.bf16.msra.mxu0 0
    %1644 = vmatprep.mubr.bf16.mxu0 0
    %1645 = vmatmul.mubr.bf16.gmra.mrb[0].mxu0 %v1492
    %v1646 = vpop.f32.mrb[0].mxu0
    %v1647 = vadd.f32 0.0, %v1646
    %v1648 = vpop.f32.mrb[0].mxu0
    %v1649 = vadd.f32 0.0, %v1648
    %v1650 = vpop.f32.mrb[0].mxu0
    %v1651 = vpop.f32.mrb[0].mxu0
    %1652 = vdwg.mxu0
    %v1653 = vadd.f32 %v466, %v1647
    %v1654 = vadd.f32 %v467, %v1649
    %v1655 = vxor.u32 %v1653, 2147483648
    %v1656 = vxor.u32 %v1654, 2147483648
    %v1657 = vmul.f32 %v1655, 1.442695
    %v1658 = vpow.pop %v1657
    %v1659 = vmul.f32 %v1656, 1.442695
    %v1660 = vpow.pop %v1659
    %v1661 = vadd.f32 %v1658, 1.0
    %v1662 = vadd.f32 %v1660, 1.0
    %v1663 = vrcp.pop %v1661
    %v1664 = vmul.f32 1.0, %v1663
    %v1665 = vrcp.pop %v1662
    %v1666 = vmul.f32 1.0, %v1665
    %v1667 = vtanh.pop %v1654
    %v1668 = vmul.f32 %v1664, %v1483
    %1670 = vrot.lane.b32.xlu0 %v1667, 64
    %v1671 = vpop.permute.xlu0 %1670
    %v1673 = vmul.f32 %v1664, %v1671
    %1675 = vrot.lane.b32.xlu0 %v1673, 64
    %v1676 = vpop.permute.xlu0 %1675
    %v1678 = vadd.f32 %v1668, %v1676
    %v1679 = vtanh.pop %v1678
    %1681 = vrot.lane.b32.xlu0 %v1679, 64
    %v1682 = vpop.permute.xlu0 %1681
    %v1684 = vmul.f32 %v1666, %v1682
    %v1685 = vpack.c.bf16 %v1684, %v1684
    %v1687 = vsel %vm512, %v1685, 0
    %1689 = vmatprep.subr.bf16.mxu0 %v696
    %1690 = vmatpush1.bf16.msra.mxu0 %v695
    %1691 = vmatprep.subr.bf16.mxu0 %v698
    %1692 = vmatpush1.bf16.msra.mxu0 %v697
    %1693 = vmatprep.subr.bf16.mxu0 %v700
    %1694 = vmatpush1.bf16.msra.mxu0 %v699
    %1695 = vmatprep.subr.bf16.mxu0 %v702
    %1696 = vmatpush1.bf16.msra.mxu0 %v701
    %1697 = vmatprep.subr.bf16.mxu0 0
    %1698 = vmatpush1.bf16.msra.mxu0 0
    %1699 = vmatprep.subr.bf16.mxu0 0
    %1700 = vmatpush1.bf16.msra.mxu0 0
    %1701 = vmatprep.subr.bf16.mxu0 0
    %1702 = vmatpush1.bf16.msra.mxu0 0
    %1703 = vmatprep.subr.bf16.mxu0 0
    %1704 = vmatpush1.bf16.msra.mxu0 0
    %1705 = vmatprep.subr.bf16.mxu0 0
    %1706 = vmatpush1.bf16.msra.mxu0 0
    %1707 = vmatprep.subr.bf16.mxu0 0
    %1708 = vmatpush1.bf16.msra.mxu0 0
    %1709 = vmatprep.subr.bf16.mxu0 0
    %1710 = vmatpush1.bf16.msra.mxu0 0
    %1711 = vmatprep.subr.bf16.mxu0 0
    %1712 = vmatpush1.bf16.msra.mxu0 0
    %1713 = vmatprep.subr.bf16.mxu0 0
    %1714 = vmatpush1.bf16.msra.mxu0 0
    %1715 = vmatprep.subr.bf16.mxu0 0
    %1716 = vmatpush1.bf16.msra.mxu0 0
    %1717 = vmatprep.subr.bf16.mxu0 0
    %1718 = vmatpush1.bf16.msra.mxu0 0
    %1719 = vmatprep.subr.bf16.mxu0 0
    %1720 = vmatpush1.bf16.msra.mxu0 0
    %1721 = vmatprep.mubr.bf16.mxu0 0
    %1722 = vmatmul.mubr.bf16.gmra.mrb[0].mxu0 %v1687
    %v1723 = vpop.f32.mrb[0].mxu0
    %v1724 = vadd.f32 %v1606, %v1723
    %v1725 = vpop.f32.mrb[0].mxu0
    %v1726 = vadd.f32 %v1608, %v1725
    %v1727 = vpop.f32.mrb[0].mxu0
    %v1728 = vpop.f32.mrb[0].mxu0
    %1729 = vdwg.mxu0
    %v1730 = vadd.f32 %v1724, %v271
    %v1731 = vadd.f32 %v1726, %v275
    %v1732 = vxor.u32 %v1730, 2147483648
    %v1733 = vxor.u32 %v1731, 2147483648
    %v1734 = vmul.f32 %v1732, 1.442695
    %v1735 = vpow.pop %v1734
    %v1736 = vmul.f32 %v1733, 1.442695
    %v1737 = vpow.pop %v1736
    %v1738 = vadd.f32 %v1735, 1.0
    %v1739 = vadd.f32 %v1737, 1.0
    %v1740 = vrcp.pop %v1738
    %v1741 = vmul.f32 1.0, %v1740
    %v1742 = vrcp.pop %v1739
    %v1743 = vmul.f32 1.0, %v1742
    %v1744 = vtanh.pop %v1731
    %v1745 = vmul.f32 %v1741, %v1560
    %1747 = vrot.lane.b32.xlu0 %v1744, 64
    %v1748 = vpop.permute.xlu0 %1747
    %v1750 = vmul.f32 %v1741, %v1748
    %1752 = vrot.lane.b32.xlu0 %v1750, 64
    %v1753 = vpop.permute.xlu0 %1752
    %v1755 = vadd.f32 %v1745, %v1753
    %v1756 = vtanh.pop %v1755
    %1758 = vrot.lane.b32.xlu0 %v1756, 64
    %v1759 = vpop.permute.xlu0 %1758
    %v1761 = vmul.f32 %v1743, %v1759
    %v1762 = vpack.c.bf16 %v1761, %v1761
    %v1764 = vsel %vm512, %v1762, 0
    %1766 = vmatprep.subr.bf16.mxu0 %v497
    %1767 = vmatpush1.bf16.msra.mxu0 %v496
    %1768 = vmatprep.subr.bf16.mxu0 %v499
    %1769 = vmatpush1.bf16.msra.mxu0 %v498
    %1770 = vmatprep.subr.bf16.mxu0 %v501
    %1771 = vmatpush1.bf16.msra.mxu0 %v500
    %1772 = vmatprep.subr.bf16.mxu0 %v503
    %1773 = vmatpush1.bf16.msra.mxu0 %v502
    %1774 = vmatprep.subr.bf16.mxu0 0
    %1775 = vmatpush1.bf16.msra.mxu0 0
    %1776 = vmatprep.subr.bf16.mxu0 0
    %1777 = vmatpush1.bf16.msra.mxu0 0
    %1778 = vmatprep.subr.bf16.mxu0 0
    %1779 = vmatpush1.bf16.msra.mxu0 0
    %1780 = vmatprep.subr.bf16.mxu0 0
    %1781 = vmatpush1.bf16.msra.mxu0 0
    %1782 = vmatprep.subr.bf16.mxu0 0
    %1783 = vmatpush1.bf16.msra.mxu0 0
    %1784 = vmatprep.subr.bf16.mxu0 0
    %1785 = vmatpush1.bf16.msra.mxu0 0
    %1786 = vmatprep.subr.bf16.mxu0 0
    %1787 = vmatpush1.bf16.msra.mxu0 0
    %1788 = vmatprep.subr.bf16.mxu0 0
    %1789 = vmatpush1.bf16.msra.mxu0 0
    %1790 = vmatprep.subr.bf16.mxu0 0
    %1791 = vmatpush1.bf16.msra.mxu0 0
    %1792 = vmatprep.subr.bf16.mxu0 0
    %1793 = vmatpush1.bf16.msra.mxu0 0
    %1794 = vmatprep.subr.bf16.mxu0 0
    %1795 = vmatpush1.bf16.msra.mxu0 0
    %1796 = vmatprep.subr.bf16.mxu0 0
    %1797 = vmatpush1.bf16.msra.mxu0 0
    %1798 = vmatprep.mubr.bf16.mxu0 0
    %1799 = vmatmul.mubr.bf16.gmra.mrb[0].mxu0 %v1764
    %v1800 = vpop.f32.mrb[0].mxu0
    %v1801 = vadd.f32 0.0, %v1800
    %v1802 = vpop.f32.mrb[0].mxu0
    %v1803 = vadd.f32 0.0, %v1802
    %v1804 = vpop.f32.mrb[0].mxu0
    %v1805 = vpop.f32.mrb[0].mxu0
    %1806 = vdwg.mxu0
    %1807 = vmatprep.subr.bf16.mxu0 %v582
    %1808 = vmatpush1.bf16.msra.mxu0 %v581
    %1809 = vmatprep.subr.bf16.mxu0 %v584
    %1810 = vmatpush1.bf16.msra.mxu0 %v583
    %1811 = vmatprep.subr.bf16.mxu0 %v586
    %1812 = vmatpush1.bf16.msra.mxu0 %v585
    %1813 = vmatprep.subr.bf16.mxu0 %v588
    %1814 = vmatpush1.bf16.msra.mxu0 %v587
    %1815 = vmatprep.subr.bf16.mxu0 0
    %1816 = vmatpush1.bf16.msra.mxu0 0
    %1817 = vmatprep.subr.bf16.mxu0 0
    %1818 = vmatpush1.bf16.msra.mxu0 0
    %1819 = vmatprep.subr.bf16.mxu0 0
    %1820 = vmatpush1.bf16.msra.mxu0 0
    %1821 = vmatprep.subr.bf16.mxu0 0
    %1822 = vmatpush1.bf16.msra.mxu0 0
    %1823 = vmatprep.subr.bf16.mxu0 0
    %1824 = vmatpush1.bf16.msra.mxu0 0
    %1825 = vmatprep.subr.bf16.mxu0 0
    %1826 = vmatpush1.bf16.msra.mxu0 0
    %1827 = vmatprep.subr.bf16.mxu0 0
    %1828 = vmatpush1.bf16.msra.mxu0 0
    %1829 = vmatprep.subr.bf16.mxu0 0
    %1830 = vmatpush1.bf16.msra.mxu0 0
    %1831 = vmatprep.subr.bf16.mxu0 0
    %1832 = vmatpush1.bf16.msra.mxu0 0
    %1833 = vmatprep.subr.bf16.mxu0 0
    %1834 = vmatpush1.bf16.msra.mxu0 0
    %1835 = vmatprep.subr.bf16.mxu0 0
    %1836 = vmatpush1.bf16.msra.mxu0 0
    %1837 = vmatprep.subr.bf16.mxu0 0
    %1838 = vmatpush1.bf16.msra.mxu0 0
    %1839 = vmatprep.mubr.bf16.mxu0 0
    %1840 = vmatmul.mubr.bf16.gmra.mrb[0].mxu0 %v1687
    %v1841 = vpop.f32.mrb[0].mxu0
    %v1842 = vadd.f32 0.0, %v1841
    %v1843 = vpop.f32.mrb[0].mxu0
    %v1844 = vadd.f32 0.0, %v1843
    %v1845 = vpop.f32.mrb[0].mxu0
    %v1846 = vpop.f32.mrb[0].mxu0
    %1847 = vdwg.mxu0
    %v1848 = vadd.f32 %v468, %v1842
    %v1849 = vadd.f32 %v469, %v1844
    %v1850 = vxor.u32 %v1848, 2147483648
    %v1851 = vxor.u32 %v1849, 2147483648
    %v1852 = vmul.f32 %v1850, 1.442695
    %v1853 = vpow.pop %v1852
    %v1854 = vmul.f32 %v1851, 1.442695
    %v1855 = vpow.pop %v1854
    %v1856 = vadd.f32 %v1853, 1.0
    %v1857 = vadd.f32 %v1855, 1.0
    %v1858 = vrcp.pop %v1856
    %v1859 = vmul.f32 1.0, %v1858
    %v1860 = vrcp.pop %v1857
    %v1861 = vmul.f32 1.0, %v1860
    %v1862 = vtanh.pop %v1849
    %v1863 = vmul.f32 %v1859, %v1678
    %1865 = vrot.lane.b32.xlu0 %v1862, 64
    %v1866 = vpop.permute.xlu0 %1865
    %v1868 = vmul.f32 %v1859, %v1866
    %1870 = vrot.lane.b32.xlu0 %v1868, 64
    %v1871 = vpop.permute.xlu0 %1870
    %v1873 = vadd.f32 %v1863, %v1871
    %v1874 = vtanh.pop %v1873
    %1876 = vrot.lane.b32.xlu0 %v1874, 64
    %v1877 = vpop.permute.xlu0 %1876
    %v1879 = vmul.f32 %v1861, %v1877
    %v1880 = vpack.c.bf16 %v1879, %v1879
    %v1882 = vsel %vm512, %v1880, 0
    %1884 = vmatprep.subr.bf16.mxu0 %v696
    %1885 = vmatpush1.bf16.msra.mxu0 %v695
    %1886 = vmatprep.subr.bf16.mxu0 %v698
    %1887 = vmatpush1.bf16.msra.mxu0 %v697
    %1888 = vmatprep.subr.bf16.mxu0 %v700
    %1889 = vmatpush1.bf16.msra.mxu0 %v699
    %1890 = vmatprep.subr.bf16.mxu0 %v702
    %1891 = vmatpush1.bf16.msra.mxu0 %v701
    %1892 = vmatprep.subr.bf16.mxu0 0
    %1893 = vmatpush1.bf16.msra.mxu0 0
    %1894 = vmatprep.subr.bf16.mxu0 0
    %1895 = vmatpush1.bf16.msra.mxu0 0
    %1896 = vmatprep.subr.bf16.mxu0 0
    %1897 = vmatpush1.bf16.msra.mxu0 0
    %1898 = vmatprep.subr.bf16.mxu0 0
    %1899 = vmatpush1.bf16.msra.mxu0 0
    %1900 = vmatprep.subr.bf16.mxu0 0
    %1901 = vmatpush1.bf16.msra.mxu0 0
    %1902 = vmatprep.subr.bf16.mxu0 0
    %1903 = vmatpush1.bf16.msra.mxu0 0
    %1904 = vmatprep.subr.bf16.mxu0 0
    %1905 = vmatpush1.bf16.msra.mxu0 0
    %1906 = vmatprep.subr.bf16.mxu0 0
    %1907 = vmatpush1.bf16.msra.mxu0 0
    %1908 = vmatprep.subr.bf16.mxu0 0
    %1909 = vmatpush1.bf16.msra.mxu0 0
    %1910 = vmatprep.subr.bf16.mxu0 0
    %1911 = vmatpush1.bf16.msra.mxu0 0
    %1912 = vmatprep.subr.bf16.mxu0 0
    %1913 = vmatpush1.bf16.msra.mxu0 0
    %1914 = vmatprep.subr.bf16.mxu0 0
    %1915 = vmatpush1.bf16.msra.mxu0 0
    %1916 = vmatprep.mubr.bf16.mxu0 0
    %1917 = vmatmul.mubr.bf16.gmra.mrb[0].mxu0 %v1882
    %v1918 = vpop.f32.mrb[0].mxu0
    %v1919 = vadd.f32 %v1801, %v1918
    %v1920 = vpop.f32.mrb[0].mxu0
    %v1921 = vadd.f32 %v1803, %v1920
    %v1922 = vpop.f32.mrb[0].mxu0
    %v1923 = vpop.f32.mrb[0].mxu0
    %1924 = vdwg.mxu0
    %v1925 = vadd.f32 %v1919, %v271
    %v1926 = vadd.f32 %v1921, %v275
    %v1927 = vxor.u32 %v1925, 2147483648
    %v1928 = vxor.u32 %v1926, 2147483648
    %v1929 = vmul.f32 %v1927, 1.442695
    %v1930 = vpow.pop %v1929
    %v1931 = vmul.f32 %v1928, 1.442695
    %v1932 = vpow.pop %v1931
    %v1933 = vadd.f32 %v1930, 1.0
    %v1934 = vadd.f32 %v1932, 1.0
    %v1935 = vrcp.pop %v1933
    %v1936 = vmul.f32 1.0, %v1935
    %v1937 = vrcp.pop %v1934
    %v1938 = vmul.f32 1.0, %v1937
    %v1939 = vtanh.pop %v1926
    %v1940 = vmul.f32 %v1936, %v1755
    %1942 = vrot.lane.b32.xlu0 %v1939, 64
    %v1943 = vpop.permute.xlu0 %1942
    %v1945 = vmul.f32 %v1936, %v1943
    %1947 = vrot.lane.b32.xlu0 %v1945, 64
    %v1948 = vpop.permute.xlu0 %1947
    %v1950 = vadd.f32 %v1940, %v1948
    %v1951 = vtanh.pop %v1950
    %1953 = vrot.lane.b32.xlu0 %v1951, 64
    %v1954 = vpop.permute.xlu0 %1953
    %v1956 = vmul.f32 %v1938, %v1954
    %v1957 = vpack.c.bf16 %v1956, %v1956
    %v1959 = vsel %vm512, %v1957, 0
    %1961 = vmatprep.subr.bf16.mxu0 %v497
    %1962 = vmatpush1.bf16.msra.mxu0 %v496
    %1963 = vmatprep.subr.bf16.mxu0 %v499
    %1964 = vmatpush1.bf16.msra.mxu0 %v498
    %1965 = vmatprep.subr.bf16.mxu0 %v501
    %1966 = vmatpush1.bf16.msra.mxu0 %v500
    %1967 = vmatprep.subr.bf16.mxu0 %v503
    %1968 = vmatpush1.bf16.msra.mxu0 %v502
    %1969 = vmatprep.subr.bf16.mxu0 0
    %1970 = vmatpush1.bf16.msra.mxu0 0
    %1971 = vmatprep.subr.bf16.mxu0 0
    %1972 = vmatpush1.bf16.msra.mxu0 0
    %1973 = vmatprep.subr.bf16.mxu0 0
    %1974 = vmatpush1.bf16.msra.mxu0 0
    %1975 = vmatprep.subr.bf16.mxu0 0
    %1976 = vmatpush1.bf16.msra.mxu0 0
    %1977 = vmatprep.subr.bf16.mxu0 0
    %1978 = vmatpush1.bf16.msra.mxu0 0
    %1979 = vmatprep.subr.bf16.mxu0 0
    %1980 = vmatpush1.bf16.msra.mxu0 0
    %1981 = vmatprep.subr.bf16.mxu0 0
    %1982 = vmatpush1.bf16.msra.mxu0 0
    %1983 = vmatprep.subr.bf16.mxu0 0
    %1984 = vmatpush1.bf16.msra.mxu0 0
    %1985 = vmatprep.subr.bf16.mxu0 0
    %1986 = vmatpush1.bf16.msra.mxu0 0
    %1987 = vmatprep.subr.bf16.mxu0 0
    %1988 = vmatpush1.bf16.msra.mxu0 0
    %1989 = vmatprep.subr.bf16.mxu0 0
    %1990 = vmatpush1.bf16.msra.mxu0 0
    %1991 = vmatprep.subr.bf16.mxu0 0
    %1992 = vmatpush1.bf16.msra.mxu0 0
    %1993 = vmatprep.mubr.bf16.mxu0 0
    %1994 = vmatmul.mubr.bf16.gmra.mrb[0].mxu0 %v1959
    %v1995 = vpop.f32.mrb[0].mxu0
    %v1996 = vadd.f32 0.0, %v1995
    %v1997 = vpop.f32.mrb[0].mxu0
    %v1998 = vadd.f32 0.0, %v1997
    %v1999 = vpop.f32.mrb[0].mxu0
    %v2000 = vpop.f32.mrb[0].mxu0
    %2001 = vdwg.mxu0
    %2002 = vmatprep.subr.bf16.mxu0 %v582
    %2003 = vmatpush1.bf16.msra.mxu0 %v581
    %2004 = vmatprep.subr.bf16.mxu0 %v584
    %2005 = vmatpush1.bf16.msra.mxu0 %v583
    %2006 = vmatprep.subr.bf16.mxu0 %v586
    %2007 = vmatpush1.bf16.msra.mxu0 %v585
    %2008 = vmatprep.subr.bf16.mxu0 %v588
    %2009 = vmatpush1.bf16.msra.mxu0 %v587
    %2010 = vmatprep.subr.bf16.mxu0 0
    %2011 = vmatpush1.bf16.msra.mxu0 0
    %2012 = vmatprep.subr.bf16.mxu0 0
    %2013 = vmatpush1.bf16.msra.mxu0 0
    %2014 = vmatprep.subr.bf16.mxu0 0
    %2015 = vmatpush1.bf16.msra.mxu0 0
    %2016 = vmatprep.subr.bf16.mxu0 0
    %2017 = vmatpush1.bf16.msra.mxu0 0
    %2018 = vmatprep.subr.bf16.mxu0 0
    %2019 = vmatpush1.bf16.msra.mxu0 0
    %2020 = vmatprep.subr.bf16.mxu0 0
    %2021 = vmatpush1.bf16.msra.mxu0 0
    %2022 = vmatprep.subr.bf16.mxu0 0
    %2023 = vmatpush1.bf16.msra.mxu0 0
    %2024 = vmatprep.subr.bf16.mxu0 0
    %2025 = vmatpush1.bf16.msra.mxu0 0
    %2026 = vmatprep.subr.bf16.mxu0 0
    %2027 = vmatpush1.bf16.msra.mxu0 0
    %2028 = vmatprep.subr.bf16.mxu0 0
    %2029 = vmatpush1.bf16.msra.mxu0 0
    %2030 = vmatprep.subr.bf16.mxu0 0
    %2031 = vmatpush1.bf16.msra.mxu0 0
    %2032 = vmatprep.subr.bf16.mxu0 0
    %2033 = vmatpush1.bf16.msra.mxu0 0
    %2034 = vmatprep.mubr.bf16.mxu0 0
    %2035 = vmatmul.mubr.bf16.gmra.mrb[0].mxu0 %v1882
    %v2036 = vpop.f32.mrb[0].mxu0
    %v2037 = vadd.f32 0.0, %v2036
    %v2038 = vpop.f32.mrb[0].mxu0
    %v2039 = vadd.f32 0.0, %v2038
    %v2040 = vpop.f32.mrb[0].mxu0
    %v2041 = vpop.f32.mrb[0].mxu0
    %2042 = vdwg.mxu0
    %v2043 = vadd.f32 %v470, %v2037
    %v2044 = vadd.f32 %v471, %v2039
    %v2045 = vxor.u32 %v2043, 2147483648
    %v2046 = vxor.u32 %v2044, 2147483648
    %v2047 = vmul.f32 %v2045, 1.442695
    %v2048 = vpow.pop %v2047
    %v2049 = vmul.f32 %v2046, 1.442695
    %v2050 = vpow.pop %v2049
    %v2051 = vadd.f32 %v2048, 1.0
    %v2052 = vadd.f32 %v2050, 1.0
    %v2053 = vrcp.pop %v2051
    %v2054 = vmul.f32 1.0, %v2053
    %v2055 = vrcp.pop %v2052
    %v2056 = vmul.f32 1.0, %v2055
    %v2057 = vtanh.pop %v2044
    %v2058 = vmul.f32 %v2054, %v1873
    %2060 = vrot.lane.b32.xlu0 %v2057, 64
    %v2061 = vpop.permute.xlu0 %2060
    %v2063 = vmul.f32 %v2054, %v2061
    %2065 = vrot.lane.b32.xlu0 %v2063, 64
    %v2066 = vpop.permute.xlu0 %2065
    %v2068 = vadd.f32 %v2058, %v2066
    %v2069 = vtanh.pop %v2068
    %2071 = vrot.lane.b32.xlu0 %v2069, 64
    %v2072 = vpop.permute.xlu0 %2071
    %v2074 = vmul.f32 %v2056, %v2072
    %v2075 = vpack.c.bf16 %v2074, %v2074
    %v2077 = vsel %vm512, %v2075, 0
    %2079 = vmatprep.subr.bf16.mxu0 %v696
    %2080 = vmatpush1.bf16.msra.mxu0 %v695
    %2081 = vmatprep.subr.bf16.mxu0 %v698
    %2082 = vmatpush1.bf16.msra.mxu0 %v697
    %2083 = vmatprep.subr.bf16.mxu0 %v700
    %2084 = vmatpush1.bf16.msra.mxu0 %v699
    %2085 = vmatprep.subr.bf16.mxu0 %v702
    %2086 = vmatpush1.bf16.msra.mxu0 %v701
    %2087 = vmatprep.subr.bf16.mxu0 0
    %2088 = vmatpush1.bf16.msra.mxu0 0
    %2089 = vmatprep.subr.bf16.mxu0 0
    %2090 = vmatpush1.bf16.msra.mxu0 0
    %2091 = vmatprep.subr.bf16.mxu0 0
    %2092 = vmatpush1.bf16.msra.mxu0 0
    %2093 = vmatprep.subr.bf16.mxu0 0
    %2094 = vmatpush1.bf16.msra.mxu0 0
    %2095 = vmatprep.subr.bf16.mxu0 0
    %2096 = vmatpush1.bf16.msra.mxu0 0
    %2097 = vmatprep.subr.bf16.mxu0 0
    %2098 = vmatpush1.bf16.msra.mxu0 0
    %2099 = vmatprep.subr.bf16.mxu0 0
    %2100 = vmatpush1.bf16.msra.mxu0 0
    %2101 = vmatprep.subr.bf16.mxu0 0
    %2102 = vmatpush1.bf16.msra.mxu0 0
    %2103 = vmatprep.subr.bf16.mxu0 0
    %2104 = vmatpush1.bf16.msra.mxu0 0
    %2105 = vmatprep.subr.bf16.mxu0 0
    %2106 = vmatpush1.bf16.msra.mxu0 0
    %2107 = vmatprep.subr.bf16.mxu0 0
    %2108 = vmatpush1.bf16.msra.mxu0 0
    %2109 = vmatprep.subr.bf16.mxu0 0
    %2110 = vmatpush1.bf16.msra.mxu0 0
    %2111 = vmatprep.mubr.bf16.mxu0 0
    %2112 = vmatmul.mubr.bf16.gmra.mrb[0].mxu0 %v2077
    %v2113 = vpop.f32.mrb[0].mxu0
    %v2114 = vadd.f32 %v1996, %v2113
    %v2115 = vpop.f32.mrb[0].mxu0
    %v2116 = vadd.f32 %v1998, %v2115
    %v2117 = vpop.f32.mrb[0].mxu0
    %v2118 = vpop.f32.mrb[0].mxu0
    %2119 = vdwg.mxu0
    %v2120 = vadd.f32 %v2114, %v271
    %v2121 = vadd.f32 %v2116, %v275
    %v2122 = vxor.u32 %v2120, 2147483648
    %v2123 = vxor.u32 %v2121, 2147483648
    %v2124 = vmul.f32 %v2122, 1.442695
    %v2125 = vpow.pop %v2124
    %v2126 = vmul.f32 %v2123, 1.442695
    %v2127 = vpow.pop %v2126
    %v2128 = vadd.f32 %v2125, 1.0
    %v2129 = vadd.f32 %v2127, 1.0
    %v2130 = vrcp.pop %v2128
    %v2131 = vmul.f32 1.0, %v2130
    %v2132 = vrcp.pop %v2129
    %v2133 = vmul.f32 1.0, %v2132
    %v2134 = vtanh.pop %v2121
    %v2135 = vmul.f32 %v2131, %v1950
    %2137 = vrot.lane.b32.xlu0 %v2134, 64
    %v2138 = vpop.permute.xlu0 %2137
    %v2140 = vmul.f32 %v2131, %v2138
    %2142 = vrot.lane.b32.xlu0 %v2140, 64
    %v2143 = vpop.permute.xlu0 %2142
    %v2145 = vadd.f32 %v2135, %v2143
    %v2146 = vtanh.pop %v2145
    %2148 = vrot.lane.b32.xlu0 %v2146, 64
    %v2149 = vpop.permute.xlu0 %2148
    %v2151 = vmul.f32 %v2133, %v2149
    %v2152 = vld [vmem:[%s1] sm:$0xff]
    %v2153 = vld [vmem:[#allocation10] sm:$0xff]
    %v2154 = vld [vmem:[#allocation10 + $0x8] sm:$0x7]
    %v2155 = vld [vmem:[#allocation12] sm:$0x1]
    %v2157 = vlaneseq
    %v2158 = vshrl.u32 %v2157, 7
    %v2159 = vsub.s32 0, %v2158
    %v2160 = vrot.slane %v2155, %v2159
    %vm2162 = vcmask 89088
    %v2164 = vsel %vm2162, %v2152, 0
    %vm2166 = vcmask 1042432
    %v2168 = vsel %vm2166, %v2154, 0
    %2170 = vmatprep.subr.mxu0 0.0
    %2171 = vmatpush1.msra.mxu0 %v2153
    %2172 = vmatprep.subr.mxu0 0.0
    %2173 = vmatpush1.msra.mxu0 %v2168
    %2174 = vmatprep.subr.mxu0 0.0
    %2175 = vmatpush1.msra.mxu0 0.0
    %2176 = vmatprep.subr.mxu0 0.0
    %2177 = vmatpush1.msra.mxu0 0.0
    %2178 = vmatprep.subr.mxu0 0.0
    %2179 = vmatpush1.msra.mxu0 0.0
    %2180 = vmatprep.subr.mxu0 0.0
    %2181 = vmatpush1.msra.mxu0 0.0
    %2182 = vmatprep.subr.mxu0 0.0
    %2183 = vmatpush1.msra.mxu0 0.0
    %2184 = vmatprep.subr.mxu0 0.0
    %2185 = vmatpush1.msra.mxu0 0.0
    %2186 = vmatprep.subr.mxu0 0.0
    %2187 = vmatpush1.msra.mxu0 0.0
    %2188 = vmatprep.subr.mxu0 0.0
    %2189 = vmatpush1.msra.mxu0 0.0
    %2190 = vmatprep.subr.mxu0 0.0
    %2191 = vmatpush1.msra.mxu0 0.0
    %2192 = vmatprep.subr.mxu0 0.0
    %2193 = vmatpush1.msra.mxu0 0.0
    %2194 = vmatprep.subr.mxu0 0.0
    %2195 = vmatpush1.msra.mxu0 0.0
    %2196 = vmatprep.subr.mxu0 0.0
    %2197 = vmatpush1.msra.mxu0 0.0
    %2198 = vmatprep.subr.mxu0 0.0
    %2199 = vmatpush1.msra.mxu0 0.0
    %2200 = vmatprep.subr.mxu0 0.0
    %2201 = vmatpush1.msra.mxu0 0.0
    %2202 = vmatprep.subr.mxu0 0.0
    %2203 = vmatpush1.msra.mxu0 0.0
    %2204 = vmatprep.subr.mxu0 0.0
    %2205 = vmatpush1.msra.mxu0 0.0
    %2206 = vmatprep.subr.mxu0 0.0
    %2207 = vmatpush1.msra.mxu0 0.0
    %2208 = vmatprep.subr.mxu0 0.0
    %2209 = vmatpush1.msra.mxu0 0.0
    %2210 = vmatprep.subr.mxu0 0.0
    %2211 = vmatpush1.msra.mxu0 0.0
    %2212 = vmatprep.subr.mxu0 0.0
    %2213 = vmatpush1.msra.mxu0 0.0
    %2214 = vmatprep.subr.mxu0 0.0
    %2215 = vmatpush1.msra.mxu0 0.0
    %2216 = vmatprep.subr.mxu0 0.0
    %2217 = vmatpush1.msra.mxu0 0.0
    %2218 = vmatprep.subr.mxu0 0.0
    %2219 = vmatpush1.msra.mxu0 0.0
    %2220 = vmatprep.subr.mxu0 0.0
    %2221 = vmatpush1.msra.mxu0 0.0
    %2222 = vmatprep.subr.mxu0 0.0
    %2223 = vmatpush1.msra.mxu0 0.0
    %2224 = vmatprep.subr.mxu0 0.0
    %2225 = vmatpush1.msra.mxu0 0.0
    %2226 = vmatprep.subr.mxu0 0.0
    %2227 = vmatpush1.msra.mxu0 0.0
    %2228 = vmatprep.subr.mxu0 0.0
    %2229 = vmatpush1.msra.mxu0 0.0
    %2230 = vmatprep.subr.mxu0 0.0
    %2231 = vmatpush1.msra.mxu0 0.0
    %2232 = vmatprep.subr.mxu0 0.0
    %2233 = vmatpush1.msra.mxu0 0.0
    %2234 = vmatprep.mubr.f32.mxu0 0.0
    %2235 = vmatmul.mubr.f32.gmra.mrb[0].mxu0 %v2164
    %v2236 = vpop.f32.mrb[0].mxu0
    %v2237 = vadd.f32 %v2160, %v2236
    %v2238 = vpop.f32.mrb[0].mxu0
    %2239 = vdwg.mxu0
    %v2240 = vmax.f32 %v2237, 0.0
    %v2241 = vld [vmem:[#allocation13] sm:$0xff]
    %v2242 = vld [vmem:[#allocation13 + $0x8] sm:$0xff]
    %v2243 = vld [vmem:[#allocation13 + $0x10] sm:$0xff]
    %v2244 = vld [vmem:[#allocation13 + $0x18] sm:$0xff]
    %v2245 = vld [vmem:[#allocation15] sm:$0x1]
    %v2247 = vlaneseq
    %v2248 = vshrl.u32 %v2247, 7
    %v2249 = vsub.s32 0, %v2248
    %v2250 = vrot.slane %v2245, %v2249
    %vm2252 = vcmask 261120
    %v2254 = vsel %vm2252, %v2240, 0
    %2256 = vmatprep.subr.mxu0 0.0
    %2257 = vmatpush1.msra.mxu0 %v2241
    %2258 = vmatprep.subr.mxu0 0.0
    %2259 = vmatpush1.msra.mxu0 %v2242
    %2260 = vmatprep.subr.mxu0 0.0
    %2261 = vmatpush1.msra.mxu0 %v2243
    %2262 = vmatprep.subr.mxu0 0.0
    %2263 = vmatpush1.msra.mxu0 %v2244
    %2264 = vmatprep.subr.mxu0 0.0
    %2265 = vmatpush1.msra.mxu0 0.0
    %2266 = vmatprep.subr.mxu0 0.0
    %2267 = vmatpush1.msra.mxu0 0.0
    %2268 = vmatprep.subr.mxu0 0.0
    %2269 = vmatpush1.msra.mxu0 0.0
    %2270 = vmatprep.subr.mxu0 0.0
    %2271 = vmatpush1.msra.mxu0 0.0
    %2272 = vmatprep.subr.mxu0 0.0
    %2273 = vmatpush1.msra.mxu0 0.0
    %2274 = vmatprep.subr.mxu0 0.0
    %2275 = vmatpush1.msra.mxu0 0.0
    %2276 = vmatprep.subr.mxu0 0.0
    %2277 = vmatpush1.msra.mxu0 0.0
    %2278 = vmatprep.subr.mxu0 0.0
    %2279 = vmatpush1.msra.mxu0 0.0
    %2280 = vmatprep.subr.mxu0 0.0
    %2281 = vmatpush1.msra.mxu0 0.0
    %2282 = vmatprep.subr.mxu0 0.0
    %2283 = vmatpush1.msra.mxu0 0.0
    %2284 = vmatprep.subr.mxu0 0.0
    %2285 = vmatpush1.msra.mxu0 0.0
    %2286 = vmatprep.subr.mxu0 0.0
    %2287 = vmatpush1.msra.mxu0 0.0
    %2288 = vmatprep.subr.mxu0 0.0
    %2289 = vmatpush1.msra.mxu0 0.0
    %2290 = vmatprep.subr.mxu0 0.0
    %2291 = vmatpush1.msra.mxu0 0.0
    %2292 = vmatprep.subr.mxu0 0.0
    %2293 = vmatpush1.msra.mxu0 0.0
    %2294 = vmatprep.subr.mxu0 0.0
    %2295 = vmatpush1.msra.mxu0 0.0
    %2296 = vmatprep.subr.mxu0 0.0
    %2297 = vmatpush1.msra.mxu0 0.0
    %2298 = vmatprep.subr.mxu0 0.0
    %2299 = vmatpush1.msra.mxu0 0.0
    %2300 = vmatprep.subr.mxu0 0.0
    %2301 = vmatpush1.msra.mxu0 0.0
    %2302 = vmatprep.subr.mxu0 0.0
    %2303 = vmatpush1.msra.mxu0 0.0
    %2304 = vmatprep.subr.mxu0 0.0
    %2305 = vmatpush1.msra.mxu0 0.0
    %2306 = vmatprep.subr.mxu0 0.0
    %2307 = vmatpush1.msra.mxu0 0.0
    %2308 = vmatprep.subr.mxu0 0.0
    %2309 = vmatpush1.msra.mxu0 0.0
    %2310 = vmatprep.subr.mxu0 0.0
    %2311 = vmatpush1.msra.mxu0 0.0
    %2312 = vmatprep.subr.mxu0 0.0
    %2313 = vmatpush1.msra.mxu0 0.0
    %2314 = vmatprep.subr.mxu0 0.0
    %2315 = vmatpush1.msra.mxu0 0.0
    %2316 = vmatprep.subr.mxu0 0.0
    %2317 = vmatpush1.msra.mxu0 0.0
    %2318 = vmatprep.subr.mxu0 0.0
    %2319 = vmatpush1.msra.mxu0 0.0
    %2320 = vmatprep.mubr.f32.mxu0 0.0
    %2321 = vmatmul.mubr.f32.gmra.mrb[0].mxu0 %v2254
    %v2322 = vpop.f32.mrb[0].mxu0
    %v2323 = vadd.f32 %v2250, %v2322
    %v2324 = vpop.f32.mrb[0].mxu0
    %2325 = vdwg.mxu0
    %v2326 = vld [vmem:[%s12] sm:$0xff]
    %v2327 = vld [vmem:[%s12 + $0x8] sm:$0xff]
    %v2328 = vld [vmem:[%s12 + $0x10] sm:$0xff]
    %v2329 = vld [vmem:[%s12 + $0x18] sm:$0xff]
    %v2330 = vld [vmem:[%s12 + $0x20] sm:$0xff]
    %v2331 = vld [vmem:[%s12 + $0x28] sm:$0xff]
    %v2332 = vld [vmem:[%s12 + $0x30] sm:$0xff]
    %v2333 = vld [vmem:[%s12 + $0x38] sm:$0xff]
    %v2334 = vld [vmem:[%s12 + $0x40] sm:$0xff]
    %v2335 = vld [vmem:[%s12 + $0x48] sm:$0xff]
    %v2336 = vld [vmem:[%s12 + $0x50] sm:$0xff]
    %v2337 = vld [vmem:[%s12 + $0x58] sm:$0xff]
    %v2338 = vld [vmem:[%s12 + $0x60] sm:$0xff]
    %v2339 = vld [vmem:[%s12 + $0x68] sm:$0xff]
    %v2340 = vld [vmem:[%s12 + $0x70] sm:$0xff]
    %v2341 = vld [vmem:[%s12 + $0x78] sm:$0xff]
    %v2342 = vld [vmem:[#allocation16] sm:$0xff]
    %v2343 = vld [vmem:[#allocation16 + $0x8] sm:$0xff]
    %v2344 = vld [vmem:[#allocation16 + $0x10] sm:$0xff]
    %v2345 = vld [vmem:[#allocation16 + $0x18] sm:$0xff]
    %v2346 = vld [vmem:[#allocation16 + $0x20] sm:$0xff]
    %v2347 = vld [vmem:[#allocation16 + $0x28] sm:$0xff]
    %v2348 = vld [vmem:[#allocation16 + $0x30] sm:$0xff]
    %v2349 = vld [vmem:[#allocation16 + $0x38] sm:$0xff]
    %v2351 = vsel %vm2252, %v2323, 0
    %2353 = vmatprep.subr.mxu0 %v2343
    %2354 = vmatpush1.msra.mxu0 %v2342
    %2355 = vmatprep.subr.mxu0 %v2345
    %2356 = vmatpush1.msra.mxu0 %v2344
    %2357 = vmatprep.subr.mxu0 %v2347
    %2358 = vmatpush1.msra.mxu0 %v2346
    %2359 = vmatprep.subr.mxu0 %v2349
    %2360 = vmatpush1.msra.mxu0 %v2348
    %2361 = vmatprep.subr.mxu0 0.0
    %2362 = vmatpush1.msra.mxu0 0.0
    %2363 = vmatprep.subr.mxu0 0.0
    %2364 = vmatpush1.msra.mxu0 0.0
    %2365 = vmatprep.subr.mxu0 0.0
    %2366 = vmatpush1.msra.mxu0 0.0
    %2367 = vmatprep.subr.mxu0 0.0
    %2368 = vmatpush1.msra.mxu0 0.0
    %2369 = vmatprep.subr.mxu0 0.0
    %2370 = vmatpush1.msra.mxu0 0.0
    %2371 = vmatprep.subr.mxu0 0.0
    %2372 = vmatpush1.msra.mxu0 0.0
    %2373 = vmatprep.subr.mxu0 0.0
    %2374 = vmatpush1.msra.mxu0 0.0
    %2375 = vmatprep.subr.mxu0 0.0
    %2376 = vmatpush1.msra.mxu0 0.0
    %2377 = vmatprep.subr.mxu0 0.0
    %2378 = vmatpush1.msra.mxu0 0.0
    %2379 = vmatprep.subr.mxu0 0.0
    %2380 = vmatpush1.msra.mxu0 0.0
    %2381 = vmatprep.subr.mxu0 0.0
    %2382 = vmatpush1.msra.mxu0 0.0
    %2383 = vmatprep.subr.mxu0 0.0
    %2384 = vmatpush1.msra.mxu0 0.0
    %2385 = vmatprep.subr.mxu0 0.0
    %2386 = vmatpush1.msra.mxu0 0.0
    %2387 = vmatprep.subr.mxu0 0.0
    %2388 = vmatpush1.msra.mxu0 0.0
    %2389 = vmatprep.subr.mxu0 0.0
    %2390 = vmatpush1.msra.mxu0 0.0
    %2391 = vmatprep.subr.mxu0 0.0
    %2392 = vmatpush1.msra.mxu0 0.0
    %2393 = vmatprep.subr.mxu0 0.0
    %2394 = vmatpush1.msra.mxu0 0.0
    %2395 = vmatprep.subr.mxu0 0.0
    %2396 = vmatpush1.msra.mxu0 0.0
    %2397 = vmatprep.subr.mxu0 0.0
    %2398 = vmatpush1.msra.mxu0 0.0
    %2399 = vmatprep.subr.mxu0 0.0
    %2400 = vmatpush1.msra.mxu0 0.0
    %2401 = vmatprep.subr.mxu0 0.0
    %2402 = vmatpush1.msra.mxu0 0.0
    %2403 = vmatprep.subr.mxu0 0.0
    %2404 = vmatpush1.msra.mxu0 0.0
    %2405 = vmatprep.subr.mxu0 0.0
    %2406 = vmatpush1.msra.mxu0 0.0
    %2407 = vmatprep.subr.mxu0 0.0
    %2408 = vmatpush1.msra.mxu0 0.0
    %2409 = vmatprep.subr.mxu0 0.0
    %2410 = vmatpush1.msra.mxu0 0.0
    %2411 = vmatprep.subr.mxu0 0.0
    %2412 = vmatpush1.msra.mxu0 0.0
    %2413 = vmatprep.subr.mxu0 0.0
    %2414 = vmatpush1.msra.mxu0 0.0
    %2415 = vmatprep.subr.mxu0 0.0
    %2416 = vmatpush1.msra.mxu0 0.0
    %2417 = vmatprep.mubr.f32.mxu0 0.0
    %2418 = vmatmul.mubr.f32.gmra.mrb[0].mxu0 %v2351
    %v2419 = vpop.f32.mrb[0].mxu0
    %v2420 = vadd.f32 0.0, %v2419
    %v2421 = vpop.f32.mrb[0].mxu0
    %v2422 = vadd.f32 0.0, %v2421
    %2423 = vdwg.mxu0
    %v2425 = vsel %vm512, %v2151, 0
    %2427 = vmatprep.subr.mxu0 %v2327
    %2428 = vmatpush1.msra.mxu0 %v2326
    %2429 = vmatprep.subr.mxu0 %v2329
    %2430 = vmatpush1.msra.mxu0 %v2328
    %2431 = vmatprep.subr.mxu0 %v2331
    %2432 = vmatpush1.msra.mxu0 %v2330
    %2433 = vmatprep.subr.mxu0 %v2333
    %2434 = vmatpush1.msra.mxu0 %v2332
    %2435 = vmatprep.subr.mxu0 %v2335
    %2436 = vmatpush1.msra.mxu0 %v2334
    %2437 = vmatprep.subr.mxu0 %v2337
    %2438 = vmatpush1.msra.mxu0 %v2336
    %2439 = vmatprep.subr.mxu0 %v2339
    %2440 = vmatpush1.msra.mxu0 %v2338
    %2441 = vmatprep.subr.mxu0 %v2341
    %2442 = vmatpush1.msra.mxu0 %v2340
    %2443 = vmatprep.subr.mxu0 0.0
    %2444 = vmatpush1.msra.mxu0 0.0
    %2445 = vmatprep.subr.mxu0 0.0
    %2446 = vmatpush1.msra.mxu0 0.0
    %2447 = vmatprep.subr.mxu0 0.0
    %2448 = vmatpush1.msra.mxu0 0.0
    %2449 = vmatprep.subr.mxu0 0.0
    %2450 = vmatpush1.msra.mxu0 0.0
    %2451 = vmatprep.subr.mxu0 0.0
    %2452 = vmatpush1.msra.mxu0 0.0
    %2453 = vmatprep.subr.mxu0 0.0
    %2454 = vmatpush1.msra.mxu0 0.0
    %2455 = vmatprep.subr.mxu0 0.0
    %2456 = vmatpush1.msra.mxu0 0.0
    %2457 = vmatprep.subr.mxu0 0.0
    %2458 = vmatpush1.msra.mxu0 0.0
    %2459 = vmatprep.subr.mxu0 0.0
    %2460 = vmatpush1.msra.mxu0 0.0
    %2461 = vmatprep.subr.mxu0 0.0
    %2462 = vmatpush1.msra.mxu0 0.0
    %2463 = vmatprep.subr.mxu0 0.0
    %2464 = vmatpush1.msra.mxu0 0.0
    %2465 = vmatprep.subr.mxu0 0.0
    %2466 = vmatpush1.msra.mxu0 0.0
    %2467 = vmatprep.subr.mxu0 0.0
    %2468 = vmatpush1.msra.mxu0 0.0
    %2469 = vmatprep.subr.mxu0 0.0
    %2470 = vmatpush1.msra.mxu0 0.0
    %2471 = vmatprep.subr.mxu0 0.0
    %2472 = vmatpush1.msra.mxu0 0.0
    %2473 = vmatprep.subr.mxu0 0.0
    %2474 = vmatpush1.msra.mxu0 0.0
    %2475 = vmatprep.subr.mxu0 0.0
    %2476 = vmatpush1.msra.mxu0 0.0
    %2477 = vmatprep.subr.mxu0 0.0
    %2478 = vmatpush1.msra.mxu0 0.0
    %2479 = vmatprep.subr.mxu0 0.0
    %2480 = vmatpush1.msra.mxu0 0.0
    %2481 = vmatprep.subr.mxu0 0.0
    %2482 = vmatpush1.msra.mxu0 0.0
    %2483 = vmatprep.subr.mxu0 0.0
    %2484 = vmatpush1.msra.mxu0 0.0
    %2485 = vmatprep.subr.mxu0 0.0
    %2486 = vmatpush1.msra.mxu0 0.0
    %2487 = vmatprep.subr.mxu0 0.0
    %2488 = vmatpush1.msra.mxu0 0.0
    %2489 = vmatprep.subr.mxu0 0.0
    %2490 = vmatpush1.msra.mxu0 0.0
    %2491 = vmatprep.mubr.f32.mxu0 0.0
    %2492 = vmatmul.mubr.f32.gmra.mrb[0].mxu0 %v2425
    %v2493 = vpop.f32.mrb[0].mxu0
    %v2494 = vadd.f32 %v2420, %v2493
    %v2495 = vpop.f32.mrb[0].mxu0
    %v2496 = vadd.f32 %v2422, %v2495
    %2497 = vdwg.mxu0
    %v2498 = vld [vmem:[#allocation18] sm:$0x3]
    %v2500 = vlaneseq
    %v2501 = vshrl.u32 %v2500, 7
    %v2502 = vsub.s32 0, %v2501
    %v2503 = vrot.slane %v2498, %v2502
    %v2504 = vlaneseq
    %v2505 = vshrl.u32 %v2504, 7
    %v2506 = vsub.s32 1, %v2505
    %v2507 = vrot.slane %v2498, %v2506
    %v2510 = vadd.f32 %v2494, %v2503
    %v2511 = vadd.f32 %v2496, %v2507
    %v2512 = vmax.f32 %v2510, 0.0
    %v2513 = vmax.f32 %v2511, 0.0
    %v2514 = vld [vmem:[%s15] sm:$0xff]
    %v2515 = vld [vmem:[%s15 + $0x8] sm:$0xff]
    %v2516 = vld [vmem:[%s15 + $0x10] sm:$0xff]
    %v2517 = vld [vmem:[%s15 + $0x18] sm:$0xff]
    %v2518 = vld [vmem:[%s15 + $0x20] sm:$0xff]
    %v2519 = vld [vmem:[%s15 + $0x28] sm:$0xff]
    %v2520 = vld [vmem:[%s15 + $0x30] sm:$0xff]
    %v2521 = vld [vmem:[%s15 + $0x38] sm:$0xff]
    %v2522 = vld [vmem:[#allocation19] sm:$0x1]
    %v2524 = vlaneseq
    %v2525 = vshrl.u32 %v2524, 7
    %v2526 = vsub.s32 0, %v2525
    %v2527 = vrot.slane %v2522, %v2526
    %v2530 = vsel %vm512, %v2513, 0
    %2532 = vmatprep.subr.mxu0 0.0
    %2533 = vmatpush1.msra.mxu0 %v2514
    %2534 = vmatprep.subr.mxu0 0.0
    %2535 = vmatpush1.msra.mxu0 %v2515
    %2536 = vmatprep.subr.mxu0 0.0
    %2537 = vmatpush1.msra.mxu0 %v2516
    %2538 = vmatprep.subr.mxu0 0.0
    %2539 = vmatpush1.msra.mxu0 %v2517
    %2540 = vmatprep.subr.mxu0 0.0
    %2541 = vmatpush1.msra.mxu0 %v2518
    %2542 = vmatprep.subr.mxu0 0.0
    %2543 = vmatpush1.msra.mxu0 %v2519
    %2544 = vmatprep.subr.mxu0 0.0
    %2545 = vmatpush1.msra.mxu0 %v2520
    %2546 = vmatprep.subr.mxu0 0.0
    %2547 = vmatpush1.msra.mxu0 %v2521
    %2548 = vmatprep.subr.mxu0 0.0
    %2549 = vmatpush1.msra.mxu0 0.0
    %2550 = vmatprep.subr.mxu0 0.0
    %2551 = vmatpush1.msra.mxu0 0.0
    %2552 = vmatprep.subr.mxu0 0.0
    %2553 = vmatpush1.msra.mxu0 0.0
    %2554 = vmatprep.subr.mxu0 0.0
    %2555 = vmatpush1.msra.mxu0 0.0
    %2556 = vmatprep.subr.mxu0 0.0
    %2557 = vmatpush1.msra.mxu0 0.0
    %2558 = vmatprep.subr.mxu0 0.0
    %2559 = vmatpush1.msra.mxu0 0.0
    %2560 = vmatprep.subr.mxu0 0.0
    %2561 = vmatpush1.msra.mxu0 0.0
    %2562 = vmatprep.subr.mxu0 0.0
    %2563 = vmatpush1.msra.mxu0 0.0
    %2564 = vmatprep.subr.mxu0 0.0
    %2565 = vmatpush1.msra.mxu0 0.0
    %2566 = vmatprep.subr.mxu0 0.0
    %2567 = vmatpush1.msra.mxu0 0.0
    %2568 = vmatprep.subr.mxu0 0.0
    %2569 = vmatpush1.msra.mxu0 0.0
    %2570 = vmatprep.subr.mxu0 0.0
    %2571 = vmatpush1.msra.mxu0 0.0
    %2572 = vmatprep.subr.mxu0 0.0
    %2573 = vmatpush1.msra.mxu0 0.0
    %2574 = vmatprep.subr.mxu0 0.0
    %2575 = vmatpush1.msra.mxu0 0.0
    %2576 = vmatprep.subr.mxu0 0.0
    %2577 = vmatpush1.msra.mxu0 0.0
    %2578 = vmatprep.subr.mxu0 0.0
    %2579 = vmatpush1.msra.mxu0 0.0
    %2580 = vmatprep.subr.mxu0 0.0
    %2581 = vmatpush1.msra.mxu0 0.0
    %2582 = vmatprep.subr.mxu0 0.0
    %2583 = vmatpush1.msra.mxu0 0.0
    %2584 = vmatprep.subr.mxu0 0.0
    %2585 = vmatpush1.msra.mxu0 0.0
    %2586 = vmatprep.subr.mxu0 0.0
    %2587 = vmatpush1.msra.mxu0 0.0
    %2588 = vmatprep.subr.mxu0 0.0
    %2589 = vmatpush1.msra.mxu0 0.0
    %2590 = vmatprep.subr.mxu0 0.0
    %2591 = vmatpush1.msra.mxu0 0.0
    %2592 = vmatprep.subr.mxu0 0.0
    %2593 = vmatpush1.msra.mxu0 0.0
    %2594 = vmatprep.subr.mxu0 0.0
    %2595 = vmatpush1.msra.mxu0 0.0
    %2596 = vmatprep.mubr.f32.mxu0 0.0
    %2597 = vmatmul.mubr.f32.gmra.mrb[0].mxu0 %v2530
    %v2598 = vpop.f32.mrb[0].mxu0
    %v2599 = vadd.f32 %v2527, %v2598
    %v2600 = vpop.f32.mrb[0].mxu0
    %2601 = vdwg.mxu0
    %v2602 = vmax.f32 %v2599, 0.0
    %v2603 = vld [vmem:[%s17] sm:$0xff]
    %v2604 = vld [vmem:[%s17 + $0x8] sm:$0xff]
    %v2605 = vld [vmem:[%s17 + $0x10] sm:$0xff]
    %v2606 = vld [vmem:[%s17 + $0x18] sm:$0xff]
    %v2607 = vld [vmem:[%s17 + $0x20] sm:$0xff]
    %v2608 = vld [vmem:[%s17 + $0x28] sm:$0xff]
    %v2609 = vld [vmem:[%s17 + $0x30] sm:$0xff]
    %v2610 = vld [vmem:[%s17 + $0x38] sm:$0xff]
    %v2611 = vld [vmem:[%s17 + $0x40] sm:$0xff]
    %v2612 = vld [vmem:[%s17 + $0x48] sm:$0xff]
    %v2613 = vld [vmem:[%s17 + $0x50] sm:$0xff]
    %v2614 = vld [vmem:[%s17 + $0x58] sm:$0xff]
    %v2615 = vld [vmem:[#allocation21] sm:$0xff]
    %v2616 = vld [vmem:[#allocation21 + $0x8] sm:$0xff]
    %v2617 = vld [vmem:[#allocation21 + $0x10] sm:$0xff]
    %v2618 = vld [vmem:[#allocation21 + $0x18] sm:$0xff]
    %v2620 = vsel %vm2252, %v2602, 0
    %2622 = vmatprep.subr.mxu0 0.0
    %2623 = vmatpush1.msra.mxu0 %v2615
    %2624 = vmatprep.subr.mxu0 0.0
    %2625 = vmatpush1.msra.mxu0 %v2616
    %2626 = vmatprep.subr.mxu0 0.0
    %2627 = vmatpush1.msra.mxu0 %v2617
    %2628 = vmatprep.subr.mxu0 0.0
    %2629 = vmatpush1.msra.mxu0 %v2618
    %2630 = vmatprep.subr.mxu0 0.0
    %2631 = vmatpush1.msra.mxu0 0.0
    %2632 = vmatprep.subr.mxu0 0.0
    %2633 = vmatpush1.msra.mxu0 0.0
    %2634 = vmatprep.subr.mxu0 0.0
    %2635 = vmatpush1.msra.mxu0 0.0
    %2636 = vmatprep.subr.mxu0 0.0
    %2637 = vmatpush1.msra.mxu0 0.0
    %2638 = vmatprep.subr.mxu0 0.0
    %2639 = vmatpush1.msra.mxu0 0.0
    %2640 = vmatprep.subr.mxu0 0.0
    %2641 = vmatpush1.msra.mxu0 0.0
    %2642 = vmatprep.subr.mxu0 0.0
    %2643 = vmatpush1.msra.mxu0 0.0
    %2644 = vmatprep.subr.mxu0 0.0
    %2645 = vmatpush1.msra.mxu0 0.0
    %2646 = vmatprep.subr.mxu0 0.0
    %2647 = vmatpush1.msra.mxu0 0.0
    %2648 = vmatprep.subr.mxu0 0.0
    %2649 = vmatpush1.msra.mxu0 0.0
    %2650 = vmatprep.subr.mxu0 0.0
    %2651 = vmatpush1.msra.mxu0 0.0
    %2652 = vmatprep.subr.mxu0 0.0
    %2653 = vmatpush1.msra.mxu0 0.0
    %2654 = vmatprep.subr.mxu0 0.0
    %2655 = vmatpush1.msra.mxu0 0.0
    %2656 = vmatprep.subr.mxu0 0.0
    %2657 = vmatpush1.msra.mxu0 0.0
    %2658 = vmatprep.subr.mxu0 0.0
    %2659 = vmatpush1.msra.mxu0 0.0
    %2660 = vmatprep.subr.mxu0 0.0
    %2661 = vmatpush1.msra.mxu0 0.0
    %2662 = vmatprep.subr.mxu0 0.0
    %2663 = vmatpush1.msra.mxu0 0.0
    %2664 = vmatprep.subr.mxu0 0.0
    %2665 = vmatpush1.msra.mxu0 0.0
    %2666 = vmatprep.subr.mxu0 0.0
    %2667 = vmatpush1.msra.mxu0 0.0
    %2668 = vmatprep.subr.mxu0 0.0
    %2669 = vmatpush1.msra.mxu0 0.0
    %2670 = vmatprep.subr.mxu0 0.0
    %2671 = vmatpush1.msra.mxu0 0.0
    %2672 = vmatprep.subr.mxu0 0.0
    %2673 = vmatpush1.msra.mxu0 0.0
    %2674 = vmatprep.subr.mxu0 0.0
    %2675 = vmatpush1.msra.mxu0 0.0
    %2676 = vmatprep.subr.mxu0 0.0
    %2677 = vmatpush1.msra.mxu0 0.0
    %2678 = vmatprep.subr.mxu0 0.0
    %2679 = vmatpush1.msra.mxu0 0.0
    %2680 = vmatprep.subr.mxu0 0.0
    %2681 = vmatpush1.msra.mxu0 0.0
    %2682 = vmatprep.subr.mxu0 0.0
    %2683 = vmatpush1.msra.mxu0 0.0
    %2684 = vmatprep.subr.mxu0 0.0
    %2685 = vmatpush1.msra.mxu0 0.0
    %2686 = vmatprep.mubr.f32.mxu0 0.0
    %2687 = vmatmul.mubr.f32.gmra.mrb[0].mxu0 %v2620
    %v2688 = vpop.f32.mrb[0].mxu0
    %v2689 = vadd.f32 0.0, %v2688
    %v2690 = vpop.f32.mrb[0].mxu0
    %2691 = vdwg.mxu0
    %vm2692 = vcmask 785408
    %v2694 = vsel %vm2692, %v2512, 0
    %2696 = vmatprep.subr.mxu0 0.0
    %2697 = vmatpush1.msra.mxu0 %v2603
    %2698 = vmatprep.subr.mxu0 0.0
    %2699 = vmatpush1.msra.mxu0 %v2604
    %2700 = vmatprep.subr.mxu0 0.0
    %2701 = vmatpush1.msra.mxu0 %v2605
    %2702 = vmatprep.subr.mxu0 0.0
    %2703 = vmatpush1.msra.mxu0 %v2606
    %2704 = vmatprep.subr.mxu0 0.0
    %2705 = vmatpush1.msra.mxu0 %v2607
    %2706 = vmatprep.subr.mxu0 0.0
    %2707 = vmatpush1.msra.mxu0 %v2608
    %2708 = vmatprep.subr.mxu0 0.0
    %2709 = vmatpush1.msra.mxu0 %v2609
    %2710 = vmatprep.subr.mxu0 0.0
    %2711 = vmatpush1.msra.mxu0 %v2610
    %2712 = vmatprep.subr.mxu0 0.0
    %2713 = vmatpush1.msra.mxu0 %v2611
    %2714 = vmatprep.subr.mxu0 0.0
    %2715 = vmatpush1.msra.mxu0 %v2612
    %2716 = vmatprep.subr.mxu0 0.0
    %2717 = vmatpush1.msra.mxu0 %v2613
    %2718 = vmatprep.subr.mxu0 0.0
    %2719 = vmatpush1.msra.mxu0 %v2614
    %2720 = vmatprep.subr.mxu0 0.0
    %2721 = vmatpush1.msra.mxu0 0.0
    %2722 = vmatprep.subr.mxu0 0.0
    %2723 = vmatpush1.msra.mxu0 0.0
    %2724 = vmatprep.subr.mxu0 0.0
    %2725 = vmatpush1.msra.mxu0 0.0
    %2726 = vmatprep.subr.mxu0 0.0
    %2727 = vmatpush1.msra.mxu0 0.0
    %2728 = vmatprep.subr.mxu0 0.0
    %2729 = vmatpush1.msra.mxu0 0.0
    %2730 = vmatprep.subr.mxu0 0.0
    %2731 = vmatpush1.msra.mxu0 0.0
    %2732 = vmatprep.subr.mxu0 0.0
    %2733 = vmatpush1.msra.mxu0 0.0
    %2734 = vmatprep.subr.mxu0 0.0
    %2735 = vmatpush1.msra.mxu0 0.0
    %2736 = vmatprep.subr.mxu0 0.0
    %2737 = vmatpush1.msra.mxu0 0.0
    %2738 = vmatprep.subr.mxu0 0.0
    %2739 = vmatpush1.msra.mxu0 0.0
    %2740 = vmatprep.subr.mxu0 0.0
    %2741 = vmatpush1.msra.mxu0 0.0
    %2742 = vmatprep.subr.mxu0 0.0
    %2743 = vmatpush1.msra.mxu0 0.0
    %2744 = vmatprep.subr.mxu0 0.0
    %2745 = vmatpush1.msra.mxu0 0.0
    %2746 = vmatprep.subr.mxu0 0.0
    %2747 = vmatpush1.msra.mxu0 0.0
    %2748 = vmatprep.subr.mxu0 0.0
    %2749 = vmatpush1.msra.mxu0 0.0
    %2750 = vmatprep.subr.mxu0 0.0
    %2751 = vmatpush1.msra.mxu0 0.0
    %2752 = vmatprep.subr.mxu0 0.0
    %2753 = vmatpush1.msra.mxu0 0.0
    %2754 = vmatprep.subr.mxu0 0.0
    %2755 = vmatpush1.msra.mxu0 0.0
    %2756 = vmatprep.subr.mxu0 0.0
    %2757 = vmatpush1.msra.mxu0 0.0
    %2758 = vmatprep.subr.mxu0 0.0
    %2759 = vmatpush1.msra.mxu0 0.0
    %2760 = vmatprep.mubr.f32.mxu0 0.0
    %2761 = vmatmul.mubr.f32.gmra.mrb[0].mxu0 %v2694
    %v2762 = vpop.f32.mrb[0].mxu0
    %v2763 = vadd.f32 %v2689, %v2762
    %v2764 = vpop.f32.mrb[0].mxu0
    %2765 = vdwg.mxu0
    %v2766 = vld [vmem:[#allocation22] sm:$0x1]
    %v2768 = vlaneseq
    %v2769 = vshrl.u32 %v2768, 7
    %v2770 = vsub.s32 0, %v2769
    %v2771 = vrot.slane %v2766, %v2770
    %v2773 = vadd.f32 %v2763, %v2771
    %2774 = vst [vmem:[%s20] sm:$0xff] %v2773
    // Predicated region
    $region138: #{business_model_forward.1} parent=1 // pred_check
      _
    $region139: #{business_model_forward.1} parent=1 // pred_check_branch
      %2776 = sbr.rel (0) target = $region141
    $region140: #{business_model_forward.1} parent=1 // pred_region
      _
    $region141: #{business_model_forward.1} parent=1 // pred_fallthru
      _
    // Predicated region
    $region142: #{business_model_forward.1} parent=1 // pred_check
      _
    $region143: #{business_model_forward.1} parent=1 // pred_check_branch
      %2778 = sbr.rel (0) target = $region145
    $region144: #{business_model_forward.1} parent=1 // pred_region
      _
    $region145: #{business_model_forward.1} parent=1 // pred_fallthru
      _
    %2779 = vsyncpa [#allocation3], 1
    %2780 = vsyncpa [#allocation5], 1
    %2781 = vsyncpa [#allocation8], 1
    %2782 = vsyncpa [#allocation11], 1
    %2783 = vsyncpa [#allocation14], 1
    %2784 = vsyncpa [#allocation17], 1
    %2785 = vsyncpa [#allocation20], 1
    %2786 = vsyncpa [#allocation23], 1

</llo_original>
